<compile_context>
chip_gen: v7x
topology: tpu7x:2x2x1
jax: 0.10.0
libtpu: 0.0.40
codegen_flags: <defaults>
</compile_context>

<pallas_src>
import math
import random

import jax
import jax.numpy as jnp
from jax import lax
from jax.experimental import pallas as pl
from jax.experimental.pallas import tpu as pltpu

# ----------------------------- hparams (small) -----------------------------
VOCAB_SIZE = 32
NUM_AUDIO_TOKENS = 24               # eos = 24, bos = 25 (unused by NAR forward)
NUM_CLASSES = NUM_AUDIO_TOKENS + 1  # proj output dim (num_audio_tokens + 1)
C_PAD = 128                         # lane-dense padded class dim
D_MODEL = 128
N_HEAD = 2
HEAD_DIM = D_MODEL // N_HEAD
D_FF = 256
NUM_LAYERS = 2
NUM_QUANTIZERS = 4
QUANT_FACTOR = 2
LN_EPS = 1e-5
NEG_INF = -1e30
SEQ_ALIGN = 16                      # pad S to a multiple of 16 (sublane aligned)


# =============================== Pallas kernel ==============================
def _layer_norm(v, g, b):
    mu = jnp.mean(v, axis=-1, keepdims=True)
    var = jnp.mean((v - mu) ** 2, axis=-1, keepdims=True)
    return (v - mu) * lax.rsqrt(var + LN_EPS) * g + b


def _bf16(a):
    return a.astype(jnp.bfloat16)


def _valle_nar_kernel(x_ref, mask_ref, valid_ref, tgt_ref,
                      wqkv_ref, bqkv_ref, wo_ref, bo_ref, ln_ref,
                      w1_ref, b1_ref, w2_ref, b2_ref,
                      lnf_ref, wp_ref, loss_ref):
    """Fused forward for one batch element: 2 encoder layers + LN + proj + CE."""
    x = x_ref[0].astype(jnp.float32)          # (S, D)
    S = x.shape[0]
    scale = 1.0 / math.sqrt(HEAD_DIM)

    # hoisted broadcasts (traced once; reused by every layer/head below)
    mask_row = mask_ref[0, 0][None, :]        # (1, S) additive key-padding mask
    col = lax.broadcasted_iota(jnp.int32, (S, C_PAD), 1)   # class-id grid

    # ---------------- transformer encoder layers (pre-LN), unrolled ----------
    for l in range(NUM_LAYERS):
        ln_l = ln_ref[l]                      # (4, D): ln1_g, ln1_b, ln2_g, ln2_b

        # ---- multi-head self attention ----
        xn = _layer_norm(x, ln_l[0], ln_l[1])
        qkv = jnp.dot(_bf16(xn), wqkv_ref[l],
                      preferred_element_type=jnp.float32) + bqkv_ref[l]   # (S, 3D) f32
        wo_l = wo_ref[l]                      # (D, D) bf16

        attn = jnp.zeros((S, D_MODEL), jnp.float32)
        for h in range(N_HEAD):
            lo, hi = h * HEAD_DIM, (h + 1) * HEAD_DIM
            qh = qkv[:, 0 * D_MODEL + lo: 0 * D_MODEL + hi]
            kh = qkv[:, 1 * D_MODEL + lo: 1 * D_MODEL + hi]
            vh = qkv[:, 2 * D_MODEL + lo: 2 * D_MODEL + hi]
            # scores = qh @ kh^T (contract head_dim), bf16 in / f32 accumulate
            s = lax.dot_general(_bf16(qh), _bf16(kh), (((1,), (1,)), ((), ())),
                                preferred_element_type=jnp.float32) * scale
            s = s + mask_row                  # mask padded keys
            m = jnp.max(s, axis=-1, keepdims=True)
            e = jnp.exp(s - m)
            p = e * pl.reciprocal(jnp.sum(e, axis=-1, keepdims=True), approx=True)
            pv = jnp.dot(_bf16(p), _bf16(vh), preferred_element_type=jnp.float32)  # (S, Hd)
            # fold Wo per head: avoids the lane-dim concat of per-head outputs.
            attn = attn + jnp.dot(_bf16(pv), wo_l[lo:hi, :],
                                  preferred_element_type=jnp.float32)
        x = x + attn + bo_ref[l]

        # ---- feed forward ----
        xn2 = _layer_norm(x, ln_l[2], ln_l[3])
        h1 = jnp.dot(_bf16(xn2), w1_ref[l], preferred_element_type=jnp.float32) + b1_ref[l]
        h1 = jnp.maximum(h1, 0.0)
        ff = jnp.dot(_bf16(h1), w2_ref[l], preferred_element_type=jnp.float32) + b2_ref[l]
        x = x + ff

    # ------------- final LN + projection (lane-dense C=128) + masked CE ------
    zn = _layer_norm(x, lnf_ref[0], lnf_ref[1])
    logits = jnp.dot(_bf16(zn), wp_ref[...], preferred_element_type=jnp.float32)  # (S, 128)
    logits = jnp.where(col < NUM_CLASSES, logits, NEG_INF)   # mask padded classes

    m = jnp.max(logits, axis=-1, keepdims=True)
    lse = m + jnp.log(jnp.sum(jnp.exp(logits - m), axis=-1, keepdims=True))  # (S, 1)
    tgt = tgt_ref[0, 0]                                      # (S,) int32
    onehot = col == tgt[:, None]
    picked = jnp.sum(jnp.where(onehot, logits, 0.0), axis=-1, keepdims=True)  # (S, 1)
    valid = valid_ref[0, 0][:, None]                         # (S, 1) 1.0 at real targets

    loss_sum = jnp.sum((lse - picked) * valid)               # scalar partial sum
    loss_ref[...] = loss_sum * jnp.ones((1, 1, C_PAD), jnp.float32)  # lane-dense write


def _full_spec(a):
    return pl.BlockSpec(a.shape, lambda b: (0,) * a.ndim)


def valle_nar_pallas(x, mask_add, valid, tgt, weights):
    """x: (B, S, D) f32; mask/valid/tgt: (B, 1, S); returns (B, 1, C_PAD) loss sums."""
    B, S, D = x.shape
    (wqkv, bqkv, wo, bo, ln, w1, b1, w2, b2, lnf, wp) = weights
    return pl.pallas_call(
        _valle_nar_kernel,
        out_shape=jax.ShapeDtypeStruct((B, 1, C_PAD), jnp.float32),
        grid=(B,),
        in_specs=[
            pl.BlockSpec((1, S, D), lambda b: (b, 0, 0)),    # x
            pl.BlockSpec((1, 1, S), lambda b: (b, 0, 0)),    # additive key mask
            pl.BlockSpec((1, 1, S), lambda b: (b, 0, 0)),    # target-valid mask
            pl.BlockSpec((1, 1, S), lambda b: (b, 0, 0)),    # per-position targets
            _full_spec(wqkv), _full_spec(bqkv), _full_spec(wo), _full_spec(bo),
            _full_spec(ln), _full_spec(w1), _full_spec(b1), _full_spec(w2),
            _full_spec(b2), _full_spec(lnf), _full_spec(wp),
        ],
        out_specs=pl.BlockSpec((1, 1, C_PAD), lambda b: (b, 0, 0)),
        compiler_params=pltpu.CompilerParams(dimension_semantics=("parallel",)),
    )(x, mask_add, valid, tgt, wqkv, bqkv, wo, bo, ln, w1, b1, w2, b2, lnf, wp)


# ============================= plain-JAX glue ===============================
def sinusoidal_pe(max_len, d):
    pos = jnp.arange(max_len, dtype=jnp.float32)[:, None]
    i = jnp.arange(0, d, 2, dtype=jnp.float32)
    div = jnp.exp(-i / d * math.log(10000.0))
    ang = pos * div[None, :]
    pe = jnp.zeros((max_len, d), jnp.float32)
    pe = pe.at[:, 0::2].set(jnp.sin(ang))
    pe = pe.at[:, 1::2].set(jnp.cos(ang))
    return pe


def init_params(key):
    ks = iter(jax.random.split(key, 64))
    nrm = lambda shape: jax.random.normal(next(ks), shape, jnp.float32) * 0.02
    ln_stack = jnp.stack([jnp.stack([jnp.ones((D_MODEL,)), jnp.zeros((D_MODEL,)),
                                     jnp.ones((D_MODEL,)), jnp.zeros((D_MODEL,))])
                          for _ in range(NUM_LAYERS)])          # (L, 4, D)
    params = {
        "tokens_emb": nrm((VOCAB_SIZE, D_MODEL)),
        "audio_embs": [nrm((NUM_AUDIO_TOKENS, D_MODEL)) for _ in range(NUM_QUANTIZERS)],
        "stage_embs": [nrm((NUM_AUDIO_TOKENS, D_MODEL)) for _ in range(NUM_QUANTIZERS - 1)],
        "proj_w_t": nrm((D_MODEL, NUM_CLASSES)),                # Linear(d_model, C, bias=False)^T
        "ln_f": jnp.stack([jnp.ones((D_MODEL,)), jnp.zeros((D_MODEL,))]),
        # stacked per-layer encoder weights
        "wqkv": nrm((NUM_LAYERS, D_MODEL, 3 * D_MODEL)),
        "bqkv": jnp.zeros((NUM_LAYERS, 1, 3 * D_MODEL), jnp.float32),
        "wo": nrm((NUM_LAYERS, D_MODEL, D_MODEL)),
        "bo": jnp.zeros((NUM_LAYERS, 1, D_MODEL), jnp.float32),
        "ln": ln_stack,
        "w1": nrm((NUM_LAYERS, D_MODEL, D_FF)),
        "b1": jnp.zeros((NUM_LAYERS, 1, D_FF), jnp.float32),
        "w2": nrm((NUM_LAYERS, D_FF, D_MODEL)),
        "b2": jnp.zeros((NUM_LAYERS, 1, D_MODEL), jnp.float32),
    }
    return params


def prepare_audio_codes(params, codes, nar_stage):
    """codes: (B, Tc, Q) int32 -> (y_emb (B, Tc, D), prefix_len)."""
    # NOTE: reproduces the reference exactly: `codes_len = codes.shape[-1]` is the
    # quantizer axis in the padded tensor, as written in the PyTorch module.
    codes_len = codes.shape[-1]
    prefix_len = min(codes_len // 3, 3 * QUANT_FACTOR)
    emb = params["audio_embs"]
    prompts = jnp.take(emb[0], codes[:, :prefix_len, 0], axis=0)
    rest = jnp.take(emb[0], codes[:, prefix_len:, 0], axis=0)
    for j in range(1, NUM_QUANTIZERS):
        prompts = prompts + jnp.take(emb[j], codes[:, :prefix_len, j], axis=0)
        if j < nar_stage:
            rest = rest + jnp.take(emb[j], codes[:, prefix_len:, j], axis=0)
    return jnp.concatenate([prompts, rest], axis=1), prefix_len


def valle_nar_forward(params, tokens_list, codes_list, layer):
    assert len(tokens_list) == len(codes_list), "Batch size mismatch."
    B = len(tokens_list)
    pe = sinusoidal_pe(1024, D_MODEL)

    # ---- text tokens: pad, embed, positional-encode ----
    tokens_lens = [len(t) for t in tokens_list]
    tokens_len = max(tokens_lens)
    tokens = jnp.stack([jnp.pad(t, (0, tokens_len - len(t))) for t in tokens_list])
    tok_emb = jnp.take(params["tokens_emb"], tokens, axis=0) + pe[None, :tokens_len, :]

    # ---- audio codes: pad, embed (sum of quantizer embeddings), PE ----
    codes_lens = [c.shape[0] for c in codes_list]
    codes_len_max = max(codes_lens)
    codes = jnp.stack([jnp.pad(c, ((0, codes_len_max - c.shape[0]), (0, 0)))
                       for c in codes_list])                       # (B, Tc, Q) int32
    codes_emb, prefix_len = prepare_audio_codes(params, codes, layer)
    codes_emb = codes_emb + pe[None, :codes_len_max, :]

    # TODO(synk): reference indexes the *embedded* codes for the target and a single
    # transformer position for z (shape-inconsistent as written); implemented here as
    # integer targets over all post-prefix code positions with a masked-mean CE.
    target = codes[:, prefix_len:, layer].astype(jnp.int32)        # (B, Tc - prefix)

    # ---- sequence padding to an aligned length ----
    S_raw = tokens_len + codes_len_max
    S_pad = ((S_raw + SEQ_ALIGN - 1) // SEQ_ALIGN) * SEQ_ALIGN

    codes_lens_arr = jnp.asarray(codes_lens)
    pos = jnp.arange(S_pad)
    code_pos = pos - tokens_len                                    # <0 for token positions

    # key-padding additive mask: padded code positions + seq padding masked; tokens never.
    pad_mask = (code_pos[None, :] >= codes_lens_arr[:, None]) | (pos[None, :] >= S_raw)
    mask_add = jnp.where(pad_mask, NEG_INF, 0.0).astype(jnp.float32)[:, None, :]  # (B,1,S)

    # positions contributing to the CE loss: real code positions after the prompt prefix.
    valid = ((code_pos[None, :] >= prefix_len)
             & (code_pos[None, :] < codes_lens_arr[:, None])).astype(jnp.float32)
    valid = valid[:, None, :]                                      # (B,1,S)

    # per-position integer targets aligned to the full padded sequence.
    tgt_full = jnp.zeros((B, S_pad), jnp.int32)
    tgt_full = tgt_full.at[:, tokens_len + prefix_len: tokens_len + codes_len_max].set(target)
    tgt_full = tgt_full[:, None, :]                                # (B,1,S)

    # ---- transformer input with stage conditioning ----
    xy = jnp.concatenate([tok_emb, codes_emb], axis=1)             # (B, S_raw, D)
    # TODO(synk): the Transformer class is not given; the stage embedding weight is folded
    # in as a mean-pooled conditioning vector added to the input (AdaLN-style approx).
    cond = jnp.mean(params["stage_embs"][layer - 1], axis=0)
    x = xy + cond[None, None, :]
    x = jnp.pad(x, ((0, 0), (0, S_pad - S_raw), (0, 0)))           # (B, S_pad, D)

    # lane-dense padded projection weight (extra classes masked in-kernel).
    wp_pad = jnp.zeros((D_MODEL, C_PAD), jnp.float32).at[:, :NUM_CLASSES].set(params["proj_w_t"])

    bf16 = lambda a: a.astype(jnp.bfloat16)
    weights = (bf16(params["wqkv"]), params["bqkv"], bf16(params["wo"]), params["bo"],
               params["ln"], bf16(params["w1"]), params["b1"], bf16(params["w2"]),
               params["b2"], params["ln_f"], bf16(wp_pad))

    loss_sums = valle_nar_pallas(x, mask_add, valid, tgt_full, weights)  # (B, 1, C_PAD)
    n_valid = float(sum(max(l - prefix_len, 0) for l in codes_lens))
    loss = jnp.sum(loss_sums[:, 0, 0]) / n_valid
    return loss


# ================================== main ====================================
if __name__ == "__main__":
    key = jax.random.PRNGKey(0)
    pkey, tkey, ckey = jax.random.split(key, 3)
    params = init_params(pkey)

    # batch of 2: token lens [6, 8], code lens [10, 12], NUM_QUANTIZERS layers each
    tokens_list = [
        jax.random.randint(jax.random.fold_in(tkey, 0), (6,), 0, VOCAB_SIZE, jnp.int32),
        jax.random.randint(jax.random.fold_in(tkey, 1), (8,), 0, VOCAB_SIZE, jnp.int32),
    ]
    codes_list = [
        jax.random.randint(jax.random.fold_in(ckey, 0), (10, NUM_QUANTIZERS),
                           0, NUM_AUDIO_TOKENS, jnp.int32),
        jax.random.randint(jax.random.fold_in(ckey, 1), (12, NUM_QUANTIZERS),
                           0, NUM_AUDIO_TOKENS, jnp.int32),
    ]

    # deterministic stand-in for `random.randint(1, num_quantizers - 1)`
    layer = random.Random(0).randint(1, NUM_QUANTIZERS - 1)

    loss = valle_nar_forward(params, tokens_list, codes_list, layer)
    loss = jax.block_until_ready(loss)
    assert loss.shape == () and jnp.isfinite(loss)
    print("KERNEL_OK")
</pallas_src>

<mosaic_0001>
module attributes {stable_mosaic.version = 11 : i64} {
  func.func @_valle_nar_kernel(%arg0: i32, %arg1: memref<1x32x128xf32, #tpu.memory_space<vmem>>, %arg2: memref<1x1x32xf32, #tpu.memory_space<vmem>>, %arg3: memref<1x1x32xf32, #tpu.memory_space<vmem>>, %arg4: memref<1x1x32xi32, #tpu.memory_space<vmem>>, %arg5: memref<2x128x384xbf16, #tpu.memory_space<vmem>>, %arg6: memref<2x1x384xf32, #tpu.memory_space<vmem>>, %arg7: memref<2x128x128xbf16, #tpu.memory_space<vmem>>, %arg8: memref<2x1x128xf32, #tpu.memory_space<vmem>>, %arg9: memref<2x4x128xf32, #tpu.memory_space<vmem>>, %arg10: memref<2x128x256xbf16, #tpu.memory_space<vmem>>, %arg11: memref<2x1x256xf32, #tpu.memory_space<vmem>>, %arg12: memref<2x256x128xbf16, #tpu.memory_space<vmem>>, %arg13: memref<2x1x128xf32, #tpu.memory_space<vmem>>, %arg14: memref<2x128xf32, #tpu.memory_space<vmem>>, %arg15: memref<128x128xbf16, #tpu.memory_space<vmem>>, %arg16: memref<1x1x128xf32, #tpu.memory_space<vmem>>) attributes {dimension_semantics = [#tpu.dimension_semantics<parallel>], iteration_bounds = array<i64: 2>, scalar_prefetch = 0 : i64, scratch_operands = 0 : i64, tpu.core_type = #tpu.core_type<tc>, window_params = [{transform_indices = @transform_0, window_bounds = array<i64: 1, 32, 128>}, {transform_indices = @transform_1, window_bounds = array<i64: 1, 1, 32>}, {transform_indices = @transform_2, window_bounds = array<i64: 1, 1, 32>}, {transform_indices = @transform_3, window_bounds = array<i64: 1, 1, 32>}, {pipeline_mode = #tpu.pipeline_mode<synchronous>, transform_indices = @transform_4, window_bounds = array<i64: 2, 128, 384>}, {pipeline_mode = #tpu.pipeline_mode<synchronous>, transform_indices = @transform_5, window_bounds = array<i64: 2, 1, 384>}, {pipeline_mode = #tpu.pipeline_mode<synchronous>, transform_indices = @transform_6, window_bounds = array<i64: 2, 128, 128>}, {pipeline_mode = #tpu.pipeline_mode<synchronous>, transform_indices = @transform_7, window_bounds = array<i64: 2, 1, 128>}, {pipeline_mode = #tpu.pipeline_mode<synchronous>, transform_indices = @transform_8, window_bounds = array<i64: 2, 4, 128>}, {pipeline_mode = #tpu.pipeline_mode<synchronous>, transform_indices = @transform_9, window_bounds = array<i64: 2, 128, 256>}, {pipeline_mode = #tpu.pipeline_mode<synchronous>, transform_indices = @transform_10, window_bounds = array<i64: 2, 1, 256>}, {pipeline_mode = #tpu.pipeline_mode<synchronous>, transform_indices = @transform_11, window_bounds = array<i64: 2, 256, 128>}, {pipeline_mode = #tpu.pipeline_mode<synchronous>, transform_indices = @transform_12, window_bounds = array<i64: 2, 1, 128>}, {pipeline_mode = #tpu.pipeline_mode<synchronous>, transform_indices = @transform_13, window_bounds = array<i64: 2, 128>}, {pipeline_mode = #tpu.pipeline_mode<synchronous>, transform_indices = @transform_14, window_bounds = array<i64: 128, 128>}, {transform_indices = @transform_15, window_bounds = array<i64: 1, 1, 128>}]} {
    %c0 = arith.constant 0 : index
    %c0_0 = arith.constant 0 : index
    %c0_1 = arith.constant 0 : index
    %0 = vector.load %arg1[%c0, %c0_0, %c0_1] : memref<1x32x128xf32, #tpu.memory_space<vmem>>, vector<1x32x128xf32>
    %1 = vector.shape_cast %0 : vector<1x32x128xf32> to vector<32x128xf32>
    %c0_2 = arith.constant 0 : index
    %c0_3 = arith.constant 0 : index
    %c0_4 = arith.constant 0 : index
    %2 = vector.load %arg2[%c0_2, %c0_3, %c0_4] : memref<1x1x32xf32, #tpu.memory_space<vmem>>, vector<1x1x32xf32>
    %3 = vector.shape_cast %2 : vector<1x1x32xf32> to vector<32xf32>
    %4 = vector.shape_cast %3 : vector<32xf32> to vector<1x32xf32>
    %5 = tpu.iota {dimensions = array<i32: 1>} : vector<32x128xi32>
    %c0_5 = arith.constant 0 : index
    %c0_6 = arith.constant 0 : index
    %c0_7 = arith.constant 0 : index
    %6 = vector.load %arg9[%c0_5, %c0_6, %c0_7] : memref<2x4x128xf32, #tpu.memory_space<vmem>>, vector<1x4x128xf32>
    %7 = vector.shape_cast %6 : vector<1x4x128xf32> to vector<4x128xf32>
    %8 = vector.extract_strided_slice %7 {offsets = [0, 0], sizes = [1, 128], strides = [1, 1]} : vector<4x128xf32> to vector<1x128xf32>
    %9 = vector.shape_cast %8 : vector<1x128xf32> to vector<128xf32>
    %10 = vector.extract_strided_slice %7 {offsets = [1, 0], sizes = [1, 128], strides = [1, 1]} : vector<4x128xf32> to vector<1x128xf32>
    %11 = vector.shape_cast %10 : vector<1x128xf32> to vector<128xf32>
    %cst = arith.constant dense<0.000000e+00> : vector<32xf32>
    %12 = vector.multi_reduction <add>, %1, %cst [1] : vector<32x128xf32> to vector<32xf32>
    %13 = vector.shape_cast %12 : vector<32xf32> to vector<32x1xf32>
    %cst_8 = arith.constant 1.280000e+02 : f32
    %14 = vector.broadcast %cst_8 : f32 to vector<32x1xf32>
    %15 = arith.divf %13, %14 : vector<32x1xf32>
    %16 = vector.broadcast %15 : vector<32x1xf32> to vector<32x128xf32>
    %17 = arith.subf %1, %16 : vector<32x128xf32>
    %18 = arith.mulf %17, %17 : vector<32x128xf32>
    %cst_9 = arith.constant dense<0.000000e+00> : vector<32xf32>
    %19 = vector.multi_reduction <add>, %18, %cst_9 [1] : vector<32x128xf32> to vector<32xf32>
    %20 = vector.shape_cast %19 : vector<32xf32> to vector<32x1xf32>
    %cst_10 = arith.constant 1.280000e+02 : f32
    %21 = vector.broadcast %cst_10 : f32 to vector<32x1xf32>
    %22 = arith.divf %20, %21 : vector<32x1xf32>
    %23 = vector.broadcast %15 : vector<32x1xf32> to vector<32x128xf32>
    %24 = arith.subf %1, %23 : vector<32x128xf32>
    %cst_11 = arith.constant 9.99999974E-6 : f32
    %25 = vector.broadcast %cst_11 : f32 to vector<32x1xf32>
    %26 = arith.addf %22, %25 : vector<32x1xf32>
    %27 = math.rsqrt %26 : vector<32x1xf32>
    %28 = vector.broadcast %27 : vector<32x1xf32> to vector<32x128xf32>
    %29 = arith.mulf %24, %28 : vector<32x128xf32>
    %30 = vector.shape_cast %9 : vector<128xf32> to vector<1x128xf32>
    %31 = vector.broadcast %30 : vector<1x128xf32> to vector<32x128xf32>
    %32 = arith.mulf %29, %31 : vector<32x128xf32>
    %33 = vector.shape_cast %11 : vector<128xf32> to vector<1x128xf32>
    %34 = vector.broadcast %33 : vector<1x128xf32> to vector<32x128xf32>
    %35 = arith.addf %32, %34 : vector<32x128xf32>
    %36 = arith.truncf %35 : vector<32x128xf32> to vector<32x128xbf16>
    %c0_12 = arith.constant 0 : index
    %c0_13 = arith.constant 0 : index
    %c0_14 = arith.constant 0 : index
    %37 = vector.load %arg5[%c0_12, %c0_13, %c0_14] : memref<2x128x384xbf16, #tpu.memory_space<vmem>>, vector<1x128x384xbf16>
    %38 = vector.shape_cast %37 : vector<1x128x384xbf16> to vector<128x384xbf16>
    %cst_15 = arith.constant dense<0.000000e+00> : vector<32x384xf32>
    %39 = tpu.matmul %36, %38, %cst_15 {dimension_numbers = #tpu.dot_dimension_numbers<[1], [0], [0], [1], [0, 0, 1, 1], [], []>} : vector<32x128xbf16>, vector<128x384xbf16>, vector<32x384xf32> -> vector<32x384xf32>
    %c0_16 = arith.constant 0 : index
    %c0_17 = arith.constant 0 : index
    %c0_18 = arith.constant 0 : index
    %40 = vector.load %arg6[%c0_16, %c0_17, %c0_18] : memref<2x1x384xf32, #tpu.memory_space<vmem>>, vector<1x1x384xf32>
    %41 = vector.shape_cast %40 : vector<1x1x384xf32> to vector<1x384xf32>
    %42 = vector.broadcast %41 : vector<1x384xf32> to vector<32x384xf32>
    %43 = arith.addf %39, %42 : vector<32x384xf32>
    %c0_19 = arith.constant 0 : index
    %c0_20 = arith.constant 0 : index
    %c0_21 = arith.constant 0 : index
    %44 = vector.load %arg7[%c0_19, %c0_20, %c0_21] : memref<2x128x128xbf16, #tpu.memory_space<vmem>>, vector<1x128x128xbf16>
    %45 = vector.shape_cast %44 : vector<1x128x128xbf16> to vector<128x128xbf16>
    %cst_22 = arith.constant 0.000000e+00 : f32
    %46 = vector.broadcast %cst_22 : f32 to vector<32x128xf32>
    %47 = vector.extract_strided_slice %43 {offsets = [0, 0], sizes = [32, 64], strides = [1, 1]} : vector<32x384xf32> to vector<32x64xf32>
    %48 = vector.extract_strided_slice %43 {offsets = [0, 128], sizes = [32, 64], strides = [1, 1]} : vector<32x384xf32> to vector<32x64xf32>
    %49 = vector.extract_strided_slice %43 {offsets = [0, 256], sizes = [32, 64], strides = [1, 1]} : vector<32x384xf32> to vector<32x64xf32>
    %50 = arith.truncf %47 : vector<32x64xf32> to vector<32x64xbf16>
    %51 = arith.truncf %48 : vector<32x64xf32> to vector<32x64xbf16>
    %cst_23 = arith.constant dense<0.000000e+00> : vector<32x32xf32>
    %52 = tpu.matmul %50, %51, %cst_23 {dimension_numbers = #tpu.dot_dimension_numbers<[1], [1], [0], [0], [0, 0, 1, 0], [], []>} : vector<32x64xbf16>, vector<32x64xbf16>, vector<32x32xf32> -> vector<32x32xf32>
    %cst_24 = arith.constant 1.250000e-01 : f32
    %53 = vector.broadcast %cst_24 : f32 to vector<32x32xf32>
    %54 = arith.mulf %52, %53 : vector<32x32xf32>
    %55 = vector.broadcast %4 : vector<1x32xf32> to vector<32x32xf32>
    %56 = arith.addf %54, %55 : vector<32x32xf32>
    %cst_25 = arith.constant dense<0xFF800000> : vector<32xf32>
    %57 = vector.multi_reduction <maximumf>, %56, %cst_25 [1] : vector<32x32xf32> to vector<32xf32>
    %58 = vector.shape_cast %57 : vector<32xf32> to vector<32x1xf32>
    %59 = vector.broadcast %58 : vector<32x1xf32> to vector<32x32xf32>
    %60 = arith.subf %56, %59 : vector<32x32xf32>
    %61 = math.exp %60 : vector<32x32xf32>
    %cst_26 = arith.constant dense<0.000000e+00> : vector<32xf32>
    %62 = vector.multi_reduction <add>, %61, %cst_26 [1] : vector<32x32xf32> to vector<32xf32>
    %63 = vector.shape_cast %62 : vector<32xf32> to vector<32x1xf32>
    %64 = tpu.reciprocal %63 {approx = true} : vector<32x1xf32> -> vector<32x1xf32>
    %65 = vector.broadcast %64 : vector<32x1xf32> to vector<32x32xf32>
    %66 = arith.mulf %61, %65 : vector<32x32xf32>
    %67 = arith.truncf %66 : vector<32x32xf32> to vector<32x32xbf16>
    %68 = arith.truncf %49 : vector<32x64xf32> to vector<32x64xbf16>
    %cst_27 = arith.constant dense<0.000000e+00> : vector<32x64xf32>
    %69 = tpu.matmul %67, %68, %cst_27 {dimension_numbers = #tpu.dot_dimension_numbers<[1], [0], [0], [1], [0, 0, 1, 1], [], []>} : vector<32x32xbf16>, vector<32x64xbf16>, vector<32x64xf32> -> vector<32x64xf32>
    %70 = arith.truncf %69 : vector<32x64xf32> to vector<32x64xbf16>
    %71 = vector.extract_strided_slice %45 {offsets = [0, 0], sizes = [64, 128], strides = [1, 1]} : vector<128x128xbf16> to vector<64x128xbf16>
    %cst_28 = arith.constant dense<0.000000e+00> : vector<32x128xf32>
    %72 = tpu.matmul %70, %71, %cst_28 {dimension_numbers = #tpu.dot_dimension_numbers<[1], [0], [0], [1], [0, 0, 1, 1], [], []>} : vector<32x64xbf16>, vector<64x128xbf16>, vector<32x128xf32> -> vector<32x128xf32>
    %73 = arith.addf %46, %72 : vector<32x128xf32>
    %74 = vector.extract_strided_slice %43 {offsets = [0, 64], sizes = [32, 64], strides = [1, 1]} : vector<32x384xf32> to vector<32x64xf32>
    %75 = vector.extract_strided_slice %43 {offsets = [0, 192], sizes = [32, 64], strides = [1, 1]} : vector<32x384xf32> to vector<32x64xf32>
    %76 = vector.extract_strided_slice %43 {offsets = [0, 320], sizes = [32, 64], strides = [1, 1]} : vector<32x384xf32> to vector<32x64xf32>
    %77 = arith.truncf %74 : vector<32x64xf32> to vector<32x64xbf16>
    %78 = arith.truncf %75 : vector<32x64xf32> to vector<32x64xbf16>
    %cst_29 = arith.constant dense<0.000000e+00> : vector<32x32xf32>
    %79 = tpu.matmul %77, %78, %cst_29 {dimension_numbers = #tpu.dot_dimension_numbers<[1], [1], [0], [0], [0, 0, 1, 0], [], []>} : vector<32x64xbf16>, vector<32x64xbf16>, vector<32x32xf32> -> vector<32x32xf32>
    %cst_30 = arith.constant 1.250000e-01 : f32
    %80 = vector.broadcast %cst_30 : f32 to vector<32x32xf32>
    %81 = arith.mulf %79, %80 : vector<32x32xf32>
    %82 = vector.broadcast %4 : vector<1x32xf32> to vector<32x32xf32>
    %83 = arith.addf %81, %82 : vector<32x32xf32>
    %cst_31 = arith.constant dense<0xFF800000> : vector<32xf32>
    %84 = vector.multi_reduction <maximumf>, %83, %cst_31 [1] : vector<32x32xf32> to vector<32xf32>
    %85 = vector.shape_cast %84 : vector<32xf32> to vector<32x1xf32>
    %86 = vector.broadcast %85 : vector<32x1xf32> to vector<32x32xf32>
    %87 = arith.subf %83, %86 : vector<32x32xf32>
    %88 = math.exp %87 : vector<32x32xf32>
    %cst_32 = arith.constant dense<0.000000e+00> : vector<32xf32>
    %89 = vector.multi_reduction <add>, %88, %cst_32 [1] : vector<32x32xf32> to vector<32xf32>
    %90 = vector.shape_cast %89 : vector<32xf32> to vector<32x1xf32>
    %91 = tpu.reciprocal %90 {approx = true} : vector<32x1xf32> -> vector<32x1xf32>
    %92 = vector.broadcast %91 : vector<32x1xf32> to vector<32x32xf32>
    %93 = arith.mulf %88, %92 : vector<32x32xf32>
    %94 = arith.truncf %93 : vector<32x32xf32> to vector<32x32xbf16>
    %95 = arith.truncf %76 : vector<32x64xf32> to vector<32x64xbf16>
    %cst_33 = arith.constant dense<0.000000e+00> : vector<32x64xf32>
    %96 = tpu.matmul %94, %95, %cst_33 {dimension_numbers = #tpu.dot_dimension_numbers<[1], [0], [0], [1], [0, 0, 1, 1], [], []>} : vector<32x32xbf16>, vector<32x64xbf16>, vector<32x64xf32> -> vector<32x64xf32>
    %97 = arith.truncf %96 : vector<32x64xf32> to vector<32x64xbf16>
    %98 = vector.extract_strided_slice %45 {offsets = [64, 0], sizes = [64, 128], strides = [1, 1]} : vector<128x128xbf16> to vector<64x128xbf16>
    %cst_34 = arith.constant dense<0.000000e+00> : vector<32x128xf32>
    %99 = tpu.matmul %97, %98, %cst_34 {dimension_numbers = #tpu.dot_dimension_numbers<[1], [0], [0], [1], [0, 0, 1, 1], [], []>} : vector<32x64xbf16>, vector<64x128xbf16>, vector<32x128xf32> -> vector<32x128xf32>
    %100 = arith.addf %73, %99 : vector<32x128xf32>
    %101 = arith.addf %1, %100 : vector<32x128xf32>
    %c0_35 = arith.constant 0 : index
    %c0_36 = arith.constant 0 : index
    %c0_37 = arith.constant 0 : index
    %102 = vector.load %arg8[%c0_35, %c0_36, %c0_37] : memref<2x1x128xf32, #tpu.memory_space<vmem>>, vector<1x1x128xf32>
    %103 = vector.shape_cast %102 : vector<1x1x128xf32> to vector<1x128xf32>
    %104 = vector.broadcast %103 : vector<1x128xf32> to vector<32x128xf32>
    %105 = arith.addf %101, %104 : vector<32x128xf32>
    %106 = vector.extract_strided_slice %7 {offsets = [2, 0], sizes = [1, 128], strides = [1, 1]} : vector<4x128xf32> to vector<1x128xf32>
    %107 = vector.shape_cast %106 : vector<1x128xf32> to vector<128xf32>
    %108 = vector.extract_strided_slice %7 {offsets = [3, 0], sizes = [1, 128], strides = [1, 1]} : vector<4x128xf32> to vector<1x128xf32>
    %109 = vector.shape_cast %108 : vector<1x128xf32> to vector<128xf32>
    %cst_38 = arith.constant dense<0.000000e+00> : vector<32xf32>
    %110 = vector.multi_reduction <add>, %105, %cst_38 [1] : vector<32x128xf32> to vector<32xf32>
    %111 = vector.shape_cast %110 : vector<32xf32> to vector<32x1xf32>
    %cst_39 = arith.constant 1.280000e+02 : f32
    %112 = vector.broadcast %cst_39 : f32 to vector<32x1xf32>
    %113 = arith.divf %111, %112 : vector<32x1xf32>
    %114 = vector.broadcast %113 : vector<32x1xf32> to vector<32x128xf32>
    %115 = arith.subf %105, %114 : vector<32x128xf32>
    %116 = arith.mulf %115, %115 : vector<32x128xf32>
    %cst_40 = arith.constant dense<0.000000e+00> : vector<32xf32>
    %117 = vector.multi_reduction <add>, %116, %cst_40 [1] : vector<32x128xf32> to vector<32xf32>
    %118 = vector.shape_cast %117 : vector<32xf32> to vector<32x1xf32>
    %cst_41 = arith.constant 1.280000e+02 : f32
    %119 = vector.broadcast %cst_41 : f32 to vector<32x1xf32>
    %120 = arith.divf %118, %119 : vector<32x1xf32>
    %121 = vector.broadcast %113 : vector<32x1xf32> to vector<32x128xf32>
    %122 = arith.subf %105, %121 : vector<32x128xf32>
    %cst_42 = arith.constant 9.99999974E-6 : f32
    %123 = vector.broadcast %cst_42 : f32 to vector<32x1xf32>
    %124 = arith.addf %120, %123 : vector<32x1xf32>
    %125 = math.rsqrt %124 : vector<32x1xf32>
    %126 = vector.broadcast %125 : vector<32x1xf32> to vector<32x128xf32>
    %127 = arith.mulf %122, %126 : vector<32x128xf32>
    %128 = vector.shape_cast %107 : vector<128xf32> to vector<1x128xf32>
    %129 = vector.broadcast %128 : vector<1x128xf32> to vector<32x128xf32>
    %130 = arith.mulf %127, %129 : vector<32x128xf32>
    %131 = vector.shape_cast %109 : vector<128xf32> to vector<1x128xf32>
    %132 = vector.broadcast %131 : vector<1x128xf32> to vector<32x128xf32>
    %133 = arith.addf %130, %132 : vector<32x128xf32>
    %134 = arith.truncf %133 : vector<32x128xf32> to vector<32x128xbf16>
    %c0_43 = arith.constant 0 : index
    %c0_44 = arith.constant 0 : index
    %c0_45 = arith.constant 0 : index
    %135 = vector.load %arg10[%c0_43, %c0_44, %c0_45] : memref<2x128x256xbf16, #tpu.memory_space<vmem>>, vector<1x128x256xbf16>
    %136 = vector.shape_cast %135 : vector<1x128x256xbf16> to vector<128x256xbf16>
    %cst_46 = arith.constant dense<0.000000e+00> : vector<32x256xf32>
    %137 = tpu.matmul %134, %136, %cst_46 {dimension_numbers = #tpu.dot_dimension_numbers<[1], [0], [0], [1], [0, 0, 1, 1], [], []>} : vector<32x128xbf16>, vector<128x256xbf16>, vector<32x256xf32> -> vector<32x256xf32>
    %c0_47 = arith.constant 0 : index
    %c0_48 = arith.constant 0 : index
    %c0_49 = arith.constant 0 : index
    %138 = vector.load %arg11[%c0_47, %c0_48, %c0_49] : memref<2x1x256xf32, #tpu.memory_space<vmem>>, vector<1x1x256xf32>
    %139 = vector.shape_cast %138 : vector<1x1x256xf32> to vector<1x256xf32>
    %140 = vector.broadcast %139 : vector<1x256xf32> to vector<32x256xf32>
    %141 = arith.addf %137, %140 : vector<32x256xf32>
    %cst_50 = arith.constant 0.000000e+00 : f32
    %142 = vector.broadcast %cst_50 : f32 to vector<32x256xf32>
    %143 = arith.maximumf %141, %142 : vector<32x256xf32>
    %144 = arith.truncf %143 : vector<32x256xf32> to vector<32x256xbf16>
    %c0_51 = arith.constant 0 : index
    %c0_52 = arith.constant 0 : index
    %c0_53 = arith.constant 0 : index
    %145 = vector.load %arg12[%c0_51, %c0_52, %c0_53] : memref<2x256x128xbf16, #tpu.memory_space<vmem>>, vector<1x256x128xbf16>
    %146 = vector.shape_cast %145 : vector<1x256x128xbf16> to vector<256x128xbf16>
    %cst_54 = arith.constant dense<0.000000e+00> : vector<32x128xf32>
    %147 = tpu.matmul %144, %146, %cst_54 {dimension_numbers = #tpu.dot_dimension_numbers<[1], [0], [0], [1], [0, 0, 1, 1], [], []>} : vector<32x256xbf16>, vector<256x128xbf16>, vector<32x128xf32> -> vector<32x128xf32>
    %c0_55 = arith.constant 0 : index
    %c0_56 = arith.constant 0 : index
    %c0_57 = arith.constant 0 : index
    %148 = vector.load %arg13[%c0_55, %c0_56, %c0_57] : memref<2x1x128xf32, #tpu.memory_space<vmem>>, vector<1x1x128xf32>
    %149 = vector.shape_cast %148 : vector<1x1x128xf32> to vector<1x128xf32>
    %150 = vector.broadcast %149 : vector<1x128xf32> to vector<32x128xf32>
    %151 = arith.addf %147, %150 : vector<32x128xf32>
    %152 = arith.addf %105, %151 : vector<32x128xf32>
    %c1 = arith.constant 1 : index
    %c0_58 = arith.constant 0 : index
    %c0_59 = arith.constant 0 : index
    %153 = vector.load %arg9[%c1, %c0_58, %c0_59] : memref<2x4x128xf32, #tpu.memory_space<vmem>>, vector<1x4x128xf32>
    %154 = vector.shape_cast %153 : vector<1x4x128xf32> to vector<4x128xf32>
    %155 = vector.extract_strided_slice %154 {offsets = [0, 0], sizes = [1, 128], strides = [1, 1]} : vector<4x128xf32> to vector<1x128xf32>
    %156 = vector.shape_cast %155 : vector<1x128xf32> to vector<128xf32>
    %157 = vector.extract_strided_slice %154 {offsets = [1, 0], sizes = [1, 128], strides = [1, 1]} : vector<4x128xf32> to vector<1x128xf32>
    %158 = vector.shape_cast %157 : vector<1x128xf32> to vector<128xf32>
    %cst_60 = arith.constant dense<0.000000e+00> : vector<32xf32>
    %159 = vector.multi_reduction <add>, %152, %cst_60 [1] : vector<32x128xf32> to vector<32xf32>
    %160 = vector.shape_cast %159 : vector<32xf32> to vector<32x1xf32>
    %cst_61 = arith.constant 1.280000e+02 : f32
    %161 = vector.broadcast %cst_61 : f32 to vector<32x1xf32>
    %162 = arith.divf %160, %161 : vector<32x1xf32>
    %163 = vector.broadcast %162 : vector<32x1xf32> to vector<32x128xf32>
    %164 = arith.subf %152, %163 : vector<32x128xf32>
    %165 = arith.mulf %164, %164 : vector<32x128xf32>
    %cst_62 = arith.constant dense<0.000000e+00> : vector<32xf32>
    %166 = vector.multi_reduction <add>, %165, %cst_62 [1] : vector<32x128xf32> to vector<32xf32>
    %167 = vector.shape_cast %166 : vector<32xf32> to vector<32x1xf32>
    %cst_63 = arith.constant 1.280000e+02 : f32
    %168 = vector.broadcast %cst_63 : f32 to vector<32x1xf32>
    %169 = arith.divf %167, %168 : vector<32x1xf32>
    %170 = vector.broadcast %162 : vector<32x1xf32> to vector<32x128xf32>
    %171 = arith.subf %152, %170 : vector<32x128xf32>
    %cst_64 = arith.constant 9.99999974E-6 : f32
    %172 = vector.broadcast %cst_64 : f32 to vector<32x1xf32>
    %173 = arith.addf %169, %172 : vector<32x1xf32>
    %174 = math.rsqrt %173 : vector<32x1xf32>
    %175 = vector.broadcast %174 : vector<32x1xf32> to vector<32x128xf32>
    %176 = arith.mulf %171, %175 : vector<32x128xf32>
    %177 = vector.shape_cast %156 : vector<128xf32> to vector<1x128xf32>
    %178 = vector.broadcast %177 : vector<1x128xf32> to vector<32x128xf32>
    %179 = arith.mulf %176, %178 : vector<32x128xf32>
    %180 = vector.shape_cast %158 : vector<128xf32> to vector<1x128xf32>
    %181 = vector.broadcast %180 : vector<1x128xf32> to vector<32x128xf32>
    %182 = arith.addf %179, %181 : vector<32x128xf32>
    %183 = arith.truncf %182 : vector<32x128xf32> to vector<32x128xbf16>
    %c1_65 = arith.constant 1 : index
    %c0_66 = arith.constant 0 : index
    %c0_67 = arith.constant 0 : index
    %184 = vector.load %arg5[%c1_65, %c0_66, %c0_67] : memref<2x128x384xbf16, #tpu.memory_space<vmem>>, vector<1x128x384xbf16>
    %185 = vector.shape_cast %184 : vector<1x128x384xbf16> to vector<128x384xbf16>
    %cst_68 = arith.constant dense<0.000000e+00> : vector<32x384xf32>
    %186 = tpu.matmul %183, %185, %cst_68 {dimension_numbers = #tpu.dot_dimension_numbers<[1], [0], [0], [1], [0, 0, 1, 1], [], []>} : vector<32x128xbf16>, vector<128x384xbf16>, vector<32x384xf32> -> vector<32x384xf32>
    %c1_69 = arith.constant 1 : index
    %c0_70 = arith.constant 0 : index
    %c0_71 = arith.constant 0 : index
    %187 = vector.load %arg6[%c1_69, %c0_70, %c0_71] : memref<2x1x384xf32, #tpu.memory_space<vmem>>, vector<1x1x384xf32>
    %188 = vector.shape_cast %187 : vector<1x1x384xf32> to vector<1x384xf32>
    %189 = vector.broadcast %188 : vector<1x384xf32> to vector<32x384xf32>
    %190 = arith.addf %186, %189 : vector<32x384xf32>
    %c1_72 = arith.constant 1 : index
    %c0_73 = arith.constant 0 : index
    %c0_74 = arith.constant 0 : index
    %191 = vector.load %arg7[%c1_72, %c0_73, %c0_74] : memref<2x128x128xbf16, #tpu.memory_space<vmem>>, vector<1x128x128xbf16>
    %192 = vector.shape_cast %191 : vector<1x128x128xbf16> to vector<128x128xbf16>
    %cst_75 = arith.constant 0.000000e+00 : f32
    %193 = vector.broadcast %cst_75 : f32 to vector<32x128xf32>
    %194 = vector.extract_strided_slice %190 {offsets = [0, 0], sizes = [32, 64], strides = [1, 1]} : vector<32x384xf32> to vector<32x64xf32>
    %195 = vector.extract_strided_slice %190 {offsets = [0, 128], sizes = [32, 64], strides = [1, 1]} : vector<32x384xf32> to vector<32x64xf32>
    %196 = vector.extract_strided_slice %190 {offsets = [0, 256], sizes = [32, 64], strides = [1, 1]} : vector<32x384xf32> to vector<32x64xf32>
    %197 = arith.truncf %194 : vector<32x64xf32> to vector<32x64xbf16>
    %198 = arith.truncf %195 : vector<32x64xf32> to vector<32x64xbf16>
    %cst_76 = arith.constant dense<0.000000e+00> : vector<32x32xf32>
    %199 = tpu.matmul %197, %198, %cst_76 {dimension_numbers = #tpu.dot_dimension_numbers<[1], [1], [0], [0], [0, 0, 1, 0], [], []>} : vector<32x64xbf16>, vector<32x64xbf16>, vector<32x32xf32> -> vector<32x32xf32>
    %cst_77 = arith.constant 1.250000e-01 : f32
    %200 = vector.broadcast %cst_77 : f32 to vector<32x32xf32>
    %201 = arith.mulf %199, %200 : vector<32x32xf32>
    %202 = vector.broadcast %4 : vector<1x32xf32> to vector<32x32xf32>
    %203 = arith.addf %201, %202 : vector<32x32xf32>
    %cst_78 = arith.constant dense<0xFF800000> : vector<32xf32>
    %204 = vector.multi_reduction <maximumf>, %203, %cst_78 [1] : vector<32x32xf32> to vector<32xf32>
    %205 = vector.shape_cast %204 : vector<32xf32> to vector<32x1xf32>
    %206 = vector.broadcast %205 : vector<32x1xf32> to vector<32x32xf32>
    %207 = arith.subf %203, %206 : vector<32x32xf32>
    %208 = math.exp %207 : vector<32x32xf32>
    %cst_79 = arith.constant dense<0.000000e+00> : vector<32xf32>
    %209 = vector.multi_reduction <add>, %208, %cst_79 [1] : vector<32x32xf32> to vector<32xf32>
    %210 = vector.shape_cast %209 : vector<32xf32> to vector<32x1xf32>
    %211 = tpu.reciprocal %210 {approx = true} : vector<32x1xf32> -> vector<32x1xf32>
    %212 = vector.broadcast %211 : vector<32x1xf32> to vector<32x32xf32>
    %213 = arith.mulf %208, %212 : vector<32x32xf32>
    %214 = arith.truncf %213 : vector<32x32xf32> to vector<32x32xbf16>
    %215 = arith.truncf %196 : vector<32x64xf32> to vector<32x64xbf16>
    %cst_80 = arith.constant dense<0.000000e+00> : vector<32x64xf32>
    %216 = tpu.matmul %214, %215, %cst_80 {dimension_numbers = #tpu.dot_dimension_numbers<[1], [0], [0], [1], [0, 0, 1, 1], [], []>} : vector<32x32xbf16>, vector<32x64xbf16>, vector<32x64xf32> -> vector<32x64xf32>
    %217 = arith.truncf %216 : vector<32x64xf32> to vector<32x64xbf16>
    %218 = vector.extract_strided_slice %192 {offsets = [0, 0], sizes = [64, 128], strides = [1, 1]} : vector<128x128xbf16> to vector<64x128xbf16>
    %cst_81 = arith.constant dense<0.000000e+00> : vector<32x128xf32>
    %219 = tpu.matmul %217, %218, %cst_81 {dimension_numbers = #tpu.dot_dimension_numbers<[1], [0], [0], [1], [0, 0, 1, 1], [], []>} : vector<32x64xbf16>, vector<64x128xbf16>, vector<32x128xf32> -> vector<32x128xf32>
    %220 = arith.addf %193, %219 : vector<32x128xf32>
    %221 = vector.extract_strided_slice %190 {offsets = [0, 64], sizes = [32, 64], strides = [1, 1]} : vector<32x384xf32> to vector<32x64xf32>
    %222 = vector.extract_strided_slice %190 {offsets = [0, 192], sizes = [32, 64], strides = [1, 1]} : vector<32x384xf32> to vector<32x64xf32>
    %223 = vector.extract_strided_slice %190 {offsets = [0, 320], sizes = [32, 64], strides = [1, 1]} : vector<32x384xf32> to vector<32x64xf32>
    %224 = arith.truncf %221 : vector<32x64xf32> to vector<32x64xbf16>
    %225 = arith.truncf %222 : vector<32x64xf32> to vector<32x64xbf16>
    %cst_82 = arith.constant dense<0.000000e+00> : vector<32x32xf32>
    %226 = tpu.matmul %224, %225, %cst_82 {dimension_numbers = #tpu.dot_dimension_numbers<[1], [1], [0], [0], [0, 0, 1, 0], [], []>} : vector<32x64xbf16>, vector<32x64xbf16>, vector<32x32xf32> -> vector<32x32xf32>
    %cst_83 = arith.constant 1.250000e-01 : f32
    %227 = vector.broadcast %cst_83 : f32 to vector<32x32xf32>
    %228 = arith.mulf %226, %227 : vector<32x32xf32>
    %229 = vector.broadcast %4 : vector<1x32xf32> to vector<32x32xf32>
    %230 = arith.addf %228, %229 : vector<32x32xf32>
    %cst_84 = arith.constant dense<0xFF800000> : vector<32xf32>
    %231 = vector.multi_reduction <maximumf>, %230, %cst_84 [1] : vector<32x32xf32> to vector<32xf32>
    %232 = vector.shape_cast %231 : vector<32xf32> to vector<32x1xf32>
    %233 = vector.broadcast %232 : vector<32x1xf32> to vector<32x32xf32>
    %234 = arith.subf %230, %233 : vector<32x32xf32>
    %235 = math.exp %234 : vector<32x32xf32>
    %cst_85 = arith.constant dense<0.000000e+00> : vector<32xf32>
    %236 = vector.multi_reduction <add>, %235, %cst_85 [1] : vector<32x32xf32> to vector<32xf32>
    %237 = vector.shape_cast %236 : vector<32xf32> to vector<32x1xf32>
    %238 = tpu.reciprocal %237 {approx = true} : vector<32x1xf32> -> vector<32x1xf32>
    %239 = vector.broadcast %238 : vector<32x1xf32> to vector<32x32xf32>
    %240 = arith.mulf %235, %239 : vector<32x32xf32>
    %241 = arith.truncf %240 : vector<32x32xf32> to vector<32x32xbf16>
    %242 = arith.truncf %223 : vector<32x64xf32> to vector<32x64xbf16>
    %cst_86 = arith.constant dense<0.000000e+00> : vector<32x64xf32>
    %243 = tpu.matmul %241, %242, %cst_86 {dimension_numbers = #tpu.dot_dimension_numbers<[1], [0], [0], [1], [0, 0, 1, 1], [], []>} : vector<32x32xbf16>, vector<32x64xbf16>, vector<32x64xf32> -> vector<32x64xf32>
    %244 = arith.truncf %243 : vector<32x64xf32> to vector<32x64xbf16>
    %245 = vector.extract_strided_slice %192 {offsets = [64, 0], sizes = [64, 128], strides = [1, 1]} : vector<128x128xbf16> to vector<64x128xbf16>
    %cst_87 = arith.constant dense<0.000000e+00> : vector<32x128xf32>
    %246 = tpu.matmul %244, %245, %cst_87 {dimension_numbers = #tpu.dot_dimension_numbers<[1], [0], [0], [1], [0, 0, 1, 1], [], []>} : vector<32x64xbf16>, vector<64x128xbf16>, vector<32x128xf32> -> vector<32x128xf32>
    %247 = arith.addf %220, %246 : vector<32x128xf32>
    %248 = arith.addf %152, %247 : vector<32x128xf32>
    %c1_88 = arith.constant 1 : index
    %c0_89 = arith.constant 0 : index
    %c0_90 = arith.constant 0 : index
    %249 = vector.load %arg8[%c1_88, %c0_89, %c0_90] : memref<2x1x128xf32, #tpu.memory_space<vmem>>, vector<1x1x128xf32>
    %250 = vector.shape_cast %249 : vector<1x1x128xf32> to vector<1x128xf32>
    %251 = vector.broadcast %250 : vector<1x128xf32> to vector<32x128xf32>
    %252 = arith.addf %248, %251 : vector<32x128xf32>
    %253 = vector.extract_strided_slice %154 {offsets = [2, 0], sizes = [1, 128], strides = [1, 1]} : vector<4x128xf32> to vector<1x128xf32>
    %254 = vector.shape_cast %253 : vector<1x128xf32> to vector<128xf32>
    %255 = vector.extract_strided_slice %154 {offsets = [3, 0], sizes = [1, 128], strides = [1, 1]} : vector<4x128xf32> to vector<1x128xf32>
    %256 = vector.shape_cast %255 : vector<1x128xf32> to vector<128xf32>
    %cst_91 = arith.constant dense<0.000000e+00> : vector<32xf32>
    %257 = vector.multi_reduction <add>, %252, %cst_91 [1] : vector<32x128xf32> to vector<32xf32>
    %258 = vector.shape_cast %257 : vector<32xf32> to vector<32x1xf32>
    %cst_92 = arith.constant 1.280000e+02 : f32
    %259 = vector.broadcast %cst_92 : f32 to vector<32x1xf32>
    %260 = arith.divf %258, %259 : vector<32x1xf32>
    %261 = vector.broadcast %260 : vector<32x1xf32> to vector<32x128xf32>
    %262 = arith.subf %252, %261 : vector<32x128xf32>
    %263 = arith.mulf %262, %262 : vector<32x128xf32>
    %cst_93 = arith.constant dense<0.000000e+00> : vector<32xf32>
    %264 = vector.multi_reduction <add>, %263, %cst_93 [1] : vector<32x128xf32> to vector<32xf32>
    %265 = vector.shape_cast %264 : vector<32xf32> to vector<32x1xf32>
    %cst_94 = arith.constant 1.280000e+02 : f32
    %266 = vector.broadcast %cst_94 : f32 to vector<32x1xf32>
    %267 = arith.divf %265, %266 : vector<32x1xf32>
    %268 = vector.broadcast %260 : vector<32x1xf32> to vector<32x128xf32>
    %269 = arith.subf %252, %268 : vector<32x128xf32>
    %cst_95 = arith.constant 9.99999974E-6 : f32
    %270 = vector.broadcast %cst_95 : f32 to vector<32x1xf32>
    %271 = arith.addf %267, %270 : vector<32x1xf32>
    %272 = math.rsqrt %271 : vector<32x1xf32>
    %273 = vector.broadcast %272 : vector<32x1xf32> to vector<32x128xf32>
    %274 = arith.mulf %269, %273 : vector<32x128xf32>
    %275 = vector.shape_cast %254 : vector<128xf32> to vector<1x128xf32>
    %276 = vector.broadcast %275 : vector<1x128xf32> to vector<32x128xf32>
    %277 = arith.mulf %274, %276 : vector<32x128xf32>
    %278 = vector.shape_cast %256 : vector<128xf32> to vector<1x128xf32>
    %279 = vector.broadcast %278 : vector<1x128xf32> to vector<32x128xf32>
    %280 = arith.addf %277, %279 : vector<32x128xf32>
    %281 = arith.truncf %280 : vector<32x128xf32> to vector<32x128xbf16>
    %c1_96 = arith.constant 1 : index
    %c0_97 = arith.constant 0 : index
    %c0_98 = arith.constant 0 : index
    %282 = vector.load %arg10[%c1_96, %c0_97, %c0_98] : memref<2x128x256xbf16, #tpu.memory_space<vmem>>, vector<1x128x256xbf16>
    %283 = vector.shape_cast %282 : vector<1x128x256xbf16> to vector<128x256xbf16>
    %cst_99 = arith.constant dense<0.000000e+00> : vector<32x256xf32>
    %284 = tpu.matmul %281, %283, %cst_99 {dimension_numbers = #tpu.dot_dimension_numbers<[1], [0], [0], [1], [0, 0, 1, 1], [], []>} : vector<32x128xbf16>, vector<128x256xbf16>, vector<32x256xf32> -> vector<32x256xf32>
    %c1_100 = arith.constant 1 : index
    %c0_101 = arith.constant 0 : index
    %c0_102 = arith.constant 0 : index
    %285 = vector.load %arg11[%c1_100, %c0_101, %c0_102] : memref<2x1x256xf32, #tpu.memory_space<vmem>>, vector<1x1x256xf32>
    %286 = vector.shape_cast %285 : vector<1x1x256xf32> to vector<1x256xf32>
    %287 = vector.broadcast %286 : vector<1x256xf32> to vector<32x256xf32>
    %288 = arith.addf %284, %287 : vector<32x256xf32>
    %cst_103 = arith.constant 0.000000e+00 : f32
    %289 = vector.broadcast %cst_103 : f32 to vector<32x256xf32>
    %290 = arith.maximumf %288, %289 : vector<32x256xf32>
    %291 = arith.truncf %290 : vector<32x256xf32> to vector<32x256xbf16>
    %c1_104 = arith.constant 1 : index
    %c0_105 = arith.constant 0 : index
    %c0_106 = arith.constant 0 : index
    %292 = vector.load %arg12[%c1_104, %c0_105, %c0_106] : memref<2x256x128xbf16, #tpu.memory_space<vmem>>, vector<1x256x128xbf16>
    %293 = vector.shape_cast %292 : vector<1x256x128xbf16> to vector<256x128xbf16>
    %cst_107 = arith.constant dense<0.000000e+00> : vector<32x128xf32>
    %294 = tpu.matmul %291, %293, %cst_107 {dimension_numbers = #tpu.dot_dimension_numbers<[1], [0], [0], [1], [0, 0, 1, 1], [], []>} : vector<32x256xbf16>, vector<256x128xbf16>, vector<32x128xf32> -> vector<32x128xf32>
    %c1_108 = arith.constant 1 : index
    %c0_109 = arith.constant 0 : index
    %c0_110 = arith.constant 0 : index
    %295 = vector.load %arg13[%c1_108, %c0_109, %c0_110] : memref<2x1x128xf32, #tpu.memory_space<vmem>>, vector<1x1x128xf32>
    %296 = vector.shape_cast %295 : vector<1x1x128xf32> to vector<1x128xf32>
    %297 = vector.broadcast %296 : vector<1x128xf32> to vector<32x128xf32>
    %298 = arith.addf %294, %297 : vector<32x128xf32>
    %299 = arith.addf %252, %298 : vector<32x128xf32>
    %c0_111 = arith.constant 0 : index
    %c0_112 = arith.constant 0 : index
    %300 = vector.load %arg14[%c0_111, %c0_112] : memref<2x128xf32, #tpu.memory_space<vmem>>, vector<1x128xf32>
    %301 = vector.shape_cast %300 : vector<1x128xf32> to vector<128xf32>
    %c1_113 = arith.constant 1 : index
    %c0_114 = arith.constant 0 : index
    %302 = vector.load %arg14[%c1_113, %c0_114] : memref<2x128xf32, #tpu.memory_space<vmem>>, vector<1x128xf32>
    %303 = vector.shape_cast %302 : vector<1x128xf32> to vector<128xf32>
    %cst_115 = arith.constant dense<0.000000e+00> : vector<32xf32>
    %304 = vector.multi_reduction <add>, %299, %cst_115 [1] : vector<32x128xf32> to vector<32xf32>
    %305 = vector.shape_cast %304 : vector<32xf32> to vector<32x1xf32>
    %cst_116 = arith.constant 1.280000e+02 : f32
    %306 = vector.broadcast %cst_116 : f32 to vector<32x1xf32>
    %307 = arith.divf %305, %306 : vector<32x1xf32>
    %308 = vector.broadcast %307 : vector<32x1xf32> to vector<32x128xf32>
    %309 = arith.subf %299, %308 : vector<32x128xf32>
    %310 = arith.mulf %309, %309 : vector<32x128xf32>
    %cst_117 = arith.constant dense<0.000000e+00> : vector<32xf32>
    %311 = vector.multi_reduction <add>, %310, %cst_117 [1] : vector<32x128xf32> to vector<32xf32>
    %312 = vector.shape_cast %311 : vector<32xf32> to vector<32x1xf32>
    %cst_118 = arith.constant 1.280000e+02 : f32
    %313 = vector.broadcast %cst_118 : f32 to vector<32x1xf32>
    %314 = arith.divf %312, %313 : vector<32x1xf32>
    %315 = vector.broadcast %307 : vector<32x1xf32> to vector<32x128xf32>
    %316 = arith.subf %299, %315 : vector<32x128xf32>
    %cst_119 = arith.constant 9.99999974E-6 : f32
    %317 = vector.broadcast %cst_119 : f32 to vector<32x1xf32>
    %318 = arith.addf %314, %317 : vector<32x1xf32>
    %319 = math.rsqrt %318 : vector<32x1xf32>
    %320 = vector.broadcast %319 : vector<32x1xf32> to vector<32x128xf32>
    %321 = arith.mulf %316, %320 : vector<32x128xf32>
    %322 = vector.shape_cast %301 : vector<128xf32> to vector<1x128xf32>
    %323 = vector.broadcast %322 : vector<1x128xf32> to vector<32x128xf32>
    %324 = arith.mulf %321, %323 : vector<32x128xf32>
    %325 = vector.shape_cast %303 : vector<128xf32> to vector<1x128xf32>
    %326 = vector.broadcast %325 : vector<1x128xf32> to vector<32x128xf32>
    %327 = arith.addf %324, %326 : vector<32x128xf32>
    %328 = arith.truncf %327 : vector<32x128xf32> to vector<32x128xbf16>
    %c0_120 = arith.constant 0 : index
    %c0_121 = arith.constant 0 : index
    %329 = vector.load %arg15[%c0_120, %c0_121] : memref<128x128xbf16, #tpu.memory_space<vmem>>, vector<128x128xbf16>
    %cst_122 = arith.constant dense<0.000000e+00> : vector<32x128xf32>
    %330 = tpu.matmul %328, %329, %cst_122 {dimension_numbers = #tpu.dot_dimension_numbers<[1], [0], [0], [1], [0, 0, 1, 1], [], []>} : vector<32x128xbf16>, vector<128x128xbf16>, vector<32x128xf32> -> vector<32x128xf32>
    %c25_i32 = arith.constant 25 : i32
    %331 = vector.broadcast %c25_i32 : i32 to vector<32x128xi32>
    %332 = arith.cmpi slt, %5, %331 : vector<32x128xi32>
    %cst_123 = arith.constant -1.000000e+30 : f32
    %333 = vector.broadcast %cst_123 : f32 to vector<32x128xf32>
    %334 = arith.select %332, %330, %333 : vector<32x128xi1>, vector<32x128xf32>
    %cst_124 = arith.constant dense<0xFF800000> : vector<32xf32>
    %335 = vector.multi_reduction <maximumf>, %334, %cst_124 [1] : vector<32x128xf32> to vector<32xf32>
    %336 = vector.shape_cast %335 : vector<32xf32> to vector<32x1xf32>
    %337 = vector.broadcast %336 : vector<32x1xf32> to vector<32x128xf32>
    %338 = arith.subf %334, %337 : vector<32x128xf32>
    %339 = math.exp %338 : vector<32x128xf32>
    %cst_125 = arith.constant dense<0.000000e+00> : vector<32xf32>
    %340 = vector.multi_reduction <add>, %339, %cst_125 [1] : vector<32x128xf32> to vector<32xf32>
    %341 = vector.shape_cast %340 : vector<32xf32> to vector<32x1xf32>
    %342 = math.log %341 : vector<32x1xf32>
    %343 = arith.addf %336, %342 : vector<32x1xf32>
    %c0_126 = arith.constant 0 : index
    %c0_127 = arith.constant 0 : index
    %c0_128 = arith.constant 0 : index
    %344 = vector.load %arg4[%c0_126, %c0_127, %c0_128] : memref<1x1x32xi32, #tpu.memory_space<vmem>>, vector<1x1x32xi32>
    %345 = vector.shape_cast %344 : vector<1x1x32xi32> to vector<32xi32>
    %346 = vector.shape_cast %345 : vector<32xi32> to vector<32x1xi32>
    %347 = vector.broadcast %346 : vector<32x1xi32> to vector<32x128xi32>
    %348 = arith.cmpi eq, %5, %347 : vector<32x128xi32>
    %cst_129 = arith.constant 0.000000e+00 : f32
    %349 = vector.broadcast %cst_129 : f32 to vector<32x128xf32>
    %350 = arith.select %348, %334, %349 : vector<32x128xi1>, vector<32x128xf32>
    %cst_130 = arith.constant dense<0.000000e+00> : vector<32xf32>
    %351 = vector.multi_reduction <add>, %350, %cst_130 [1] : vector<32x128xf32> to vector<32xf32>
    %352 = vector.shape_cast %351 : vector<32xf32> to vector<32x1xf32>
    %c0_131 = arith.constant 0 : index
    %c0_132 = arith.constant 0 : index
    %c0_133 = arith.constant 0 : index
    %353 = vector.load %arg3[%c0_131, %c0_132, %c0_133] : memref<1x1x32xf32, #tpu.memory_space<vmem>>, vector<1x1x32xf32>
    %354 = vector.shape_cast %353 : vector<1x1x32xf32> to vector<32xf32>
    %355 = vector.shape_cast %354 : vector<32xf32> to vector<32x1xf32>
    %356 = arith.subf %343, %352 : vector<32x1xf32>
    %357 = arith.mulf %356, %355 : vector<32x1xf32>
    %358 = vector.shape_cast %357 : vector<32x1xf32> to vector<1x32x1xf32>
    %cst_134 = arith.constant dense<0.000000e+00> : vector<1xf32>
    %359 = vector.multi_reduction <add>, %358, %cst_134 [1, 2] : vector<1x32x1xf32> to vector<1xf32>
    %360 = vector.shape_cast %359 : vector<1xf32> to vector<1x1x1xf32>
    %361 = vector.extract %360[0, 0, 0] : f32 from vector<1x1x1xf32>
    %cst_135 = arith.constant 1.000000e+00 : f32
    %362 = vector.broadcast %cst_135 : f32 to vector<1x1x128xf32>
    %363 = vector.broadcast %361 : f32 to vector<1x1x128xf32>
    %364 = arith.mulf %363, %362 : vector<1x1x128xf32>
    %c0_136 = arith.constant 0 : index
    %c0_137 = arith.constant 0 : index
    %c0_138 = arith.constant 0 : index
    %365 = vector.load %arg16[%c0_136, %c0_137, %c0_138] : memref<1x1x128xf32, #tpu.memory_space<vmem>>, vector<1x1x128xf32>
    tpu.vector_store %arg16[%c0_136, %c0_137, %c0_138], %364 {strides = array<i32>} : memref<1x1x128xf32, #tpu.memory_space<vmem>>, vector<1x1x128xf32>,
    return
  }
  func.func @transform_0(%arg0: i32) -> (i32, i32, i32) {
    %c0_i32 = arith.constant 0 : i32
    %c0_i32_0 = arith.constant 0 : i32
    %c0_i32_1 = arith.constant 0 : i32
    return %arg0, %c0_i32, %c0_i32_0 : i32, i32, i32
  }
  func.func @transform_1(%arg0: i32) -> (i32, i32, i32) {
    %c0_i32 = arith.constant 0 : i32
    %c0_i32_0 = arith.constant 0 : i32
    %c0_i32_1 = arith.constant 0 : i32
    return %arg0, %c0_i32, %c0_i32_0 : i32, i32, i32
  }
  func.func @transform_2(%arg0: i32) -> (i32, i32, i32) {
    %c0_i32 = arith.constant 0 : i32
    %c0_i32_0 = arith.constant 0 : i32
    %c0_i32_1 = arith.constant 0 : i32
    return %arg0, %c0_i32, %c0_i32_0 : i32, i32, i32
  }
  func.func @transform_3(%arg0: i32) -> (i32, i32, i32) {
    %c0_i32 = arith.constant 0 : i32
    %c0_i32_0 = arith.constant 0 : i32
    %c0_i32_1 = arith.constant 0 : i32
    return %arg0, %c0_i32, %c0_i32_0 : i32, i32, i32
  }
  func.func @transform_4(%arg0: i32) -> (i32, i32, i32) {
    %c0_i32 = arith.constant 0 : i32
    %c0_i32_0 = arith.constant 0 : i32
    %c0_i32_1 = arith.constant 0 : i32
    %c0_i32_2 = arith.constant 0 : i32
    return %c0_i32, %c0_i32_0, %c0_i32_1 : i32, i32, i32
  }
  func.func @transform_5(%arg0: i32) -> (i32, i32, i32) {
    %c0_i32 = arith.constant 0 : i32
    %c0_i32_0 = arith.constant 0 : i32
    %c0_i32_1 = arith.constant 0 : i32
    %c0_i32_2 = arith.constant 0 : i32
    return %c0_i32, %c0_i32_0, %c0_i32_1 : i32, i32, i32
  }
  func.func @transform_6(%arg0: i32) -> (i32, i32, i32) {
    %c0_i32 = arith.constant 0 : i32
    %c0_i32_0 = arith.constant 0 : i32
    %c0_i32_1 = arith.constant 0 : i32
    %c0_i32_2 = arith.constant 0 : i32
    return %c0_i32, %c0_i32_0, %c0_i32_1 : i32, i32, i32
  }
  func.func @transform_7(%arg0: i32) -> (i32, i32, i32) {
    %c0_i32 = arith.constant 0 : i32
    %c0_i32_0 = arith.constant 0 : i32
    %c0_i32_1 = arith.constant 0 : i32
    %c0_i32_2 = arith.constant 0 : i32
    return %c0_i32, %c0_i32_0, %c0_i32_1 : i32, i32, i32
  }
  func.func @transform_8(%arg0: i32) -> (i32, i32, i32) {
    %c0_i32 = arith.constant 0 : i32
    %c0_i32_0 = arith.constant 0 : i32
    %c0_i32_1 = arith.constant 0 : i32
    %c0_i32_2 = arith.constant 0 : i32
    return %c0_i32, %c0_i32_0, %c0_i32_1 : i32, i32, i32
  }
  func.func @transform_9(%arg0: i32) -> (i32, i32, i32) {
    %c0_i32 = arith.constant 0 : i32
    %c0_i32_0 = arith.constant 0 : i32
    %c0_i32_1 = arith.constant 0 : i32
    %c0_i32_2 = arith.constant 0 : i32
    return %c0_i32, %c0_i32_0, %c0_i32_1 : i32, i32, i32
  }
  func.func @transform_10(%arg0: i32) -> (i32, i32, i32) {
    %c0_i32 = arith.constant 0 : i32
    %c0_i32_0 = arith.constant 0 : i32
    %c0_i32_1 = arith.constant 0 : i32
    %c0_i32_2 = arith.constant 0 : i32
    return %c0_i32, %c0_i32_0, %c0_i32_1 : i32, i32, i32
  }
  func.func @transform_11(%arg0: i32) -> (i32, i32, i32) {
    %c0_i32 = arith.constant 0 : i32
    %c0_i32_0 = arith.constant 0 : i32
    %c0_i32_1 = arith.constant 0 : i32
    %c0_i32_2 = arith.constant 0 : i32
    return %c0_i32, %c0_i32_0, %c0_i32_1 : i32, i32, i32
  }
  func.func @transform_12(%arg0: i32) -> (i32, i32, i32) {
    %c0_i32 = arith.constant 0 : i32
    %c0_i32_0 = arith.constant 0 : i32
    %c0_i32_1 = arith.constant 0 : i32
    %c0_i32_2 = arith.constant 0 : i32
    return %c0_i32, %c0_i32_0, %c0_i32_1 : i32, i32, i32
  }
  func.func @transform_13(%arg0: i32) -> (i32, i32) {
    %c0_i32 = arith.constant 0 : i32
    %c0_i32_0 = arith.constant 0 : i32
    %c0_i32_1 = arith.constant 0 : i32
    return %c0_i32, %c0_i32_0 : i32, i32
  }
  func.func @transform_14(%arg0: i32) -> (i32, i32) {
    %c0_i32 = arith.constant 0 : i32
    %c0_i32_0 = arith.constant 0 : i32
    %c0_i32_1 = arith.constant 0 : i32
    return %c0_i32, %c0_i32_0 : i32, i32
  }
  func.func @transform_15(%arg0: i32) -> (i32, i32, i32) {
    %c0_i32 = arith.constant 0 : i32
    %c0_i32_0 = arith.constant 0 : i32
    %c0_i32_1 = arith.constant 0 : i32
    return %arg0, %c0_i32, %c0_i32_0 : i32, i32, i32
  }
}

</mosaic_0001>

<llo_original>
// kernel: tpu_custom_call.1
$region0: #{tpu_custom_call.1}
  #allocation0 [shape = 'u32[]', space=smem, size = 0x4, offset = 0x4, fixed_abs, tag = 'smem constant byte address 0x4 - core index']
  #allocation1 [shape = 'u32[144,128]{1,0:T(1,128)}', space=vmem, size = 0x12000, scoped, tag = 'internal scratch']
  %s0 = inlined_call_operand.hbm [shape: f32[2,32,128], index: 0, kind: input, shape index: {}]
  %s1 = inlined_call_operand.hbm [shape: f32[2,1,32], index: 1, kind: input, shape index: {}]
  %s2 = inlined_call_operand.hbm [shape: f32[2,1,32], index: 2, kind: input, shape index: {}]
  %s3 = inlined_call_operand.hbm [shape: s32[2,1,32], index: 3, kind: input, shape index: {}]
  %s4 = inlined_call_operand.hbm [shape: bf16[2,128,384], index: 4, kind: input, shape index: {}]
  %s5 = inlined_call_operand.vmem [shape: f32[2,1,384], index: 5, kind: input, shape index: {}]
  %s6 = inlined_call_operand.hbm [shape: bf16[2,128,128], index: 6, kind: input, shape index: {}]
  %s7 = inlined_call_operand.vmem [shape: f32[2,1,128], index: 7, kind: input, shape index: {}]
  %s8 = inlined_call_operand.vmem [shape: f32[2,4,128], index: 8, kind: input, shape index: {}]
  %s9 = inlined_call_operand.hbm [shape: bf16[2,128,256], index: 9, kind: input, shape index: {}]
  %s10 = inlined_call_operand.vmem [shape: f32[2,1,256], index: 10, kind: input, shape index: {}]
  %s11 = inlined_call_operand.hbm [shape: bf16[2,256,128], index: 11, kind: input, shape index: {}]
  %s12 = inlined_call_operand.vmem [shape: f32[2,1,128], index: 12, kind: input, shape index: {}]
  %s13 = inlined_call_operand.vmem [shape: f32[2,128], index: 13, kind: input, shape index: {}]
  %s14 = inlined_call_operand.hbm [shape: bf16[128,128], index: 14, kind: input, shape index: {}]
  %s15 = inlined_call_operand.hbm [shape: f32[2,1,128], index: 15, kind: output, shape index: {}]
  %s16 = sld [smem:[#allocation0]]
  $region129: #{tpu_custom_call.1} parent=0
    _
  %s18 = ssub.s32 1, %s16
  %s19 = scalar_select 0, %s18, %s16
  $region1: #{tpu_custom_call.1} parent=0
    #allocation2 [shape = 'u8[32768]{0}', space=vmem, size = 0x8000, scoped, tag = 'input window, operand 0']
    #allocation3 [shape = 's32[2]{0}', space=sflag, size = 0x8, scoped, tag = 'scoped memory for tpu_custom_call.1']
    #allocation4 [shape = 's32[2]{0}', space=sflag, size = 0x8, scoped, tag = 'scoped memory for tpu_custom_call.1']
    #allocation5 [shape = 'u8[1024]{0}', space=vmem, size = 0x400, scoped, tag = 'input window, operand 1']
    #allocation6 [shape = 's32[2]{0}', space=sflag, size = 0x8, scoped, tag = 'scoped memory for tpu_custom_call.1']
    #allocation7 [shape = 'u8[1024]{0}', space=vmem, size = 0x400, scoped, tag = 'input window, operand 2']
    #allocation8 [shape = 'u8[1024]{0}', space=vmem, size = 0x400, scoped, tag = 'input window, operand 3']
    #allocation9 [shape = 's32[2]{0}', space=sflag, size = 0x8, scoped, tag = 'scoped memory for tpu_custom_call.1']
    #allocation10 [shape = 'u8[196608]{0}', space=vmem, size = 0x30000, scoped, tag = 'input window, operand 4, single buffered']
    #allocation11 [shape = 'u8[65536]{0}', space=vmem, size = 0x10000, scoped, tag = 'input window, operand 6, single buffered']
    #allocation12 [shape = 's32[1]{0}', space=sflag, size = 0x4, scoped, tag = 'scoped memory for tpu_custom_call.1']
    #allocation13 [shape = 'u8[131072]{0}', space=vmem, size = 0x20000, scoped, tag = 'input window, operand 9, single buffered']
    #allocation14 [shape = 'u8[131072]{0}', space=vmem, size = 0x20000, scoped, tag = 'input window, operand 11, single buffered']
    #allocation15 [shape = 's32[1]{0}', space=sflag, size = 0x4, scoped, tag = 'scoped memory for tpu_custom_call.1']
    #allocation16 [shape = 'u8[32768]{0}', space=vmem, size = 0x8000, scoped, tag = 'input window, operand 14, single buffered']
    #allocation17 [shape = 'u8[1024]{0}', space=vmem, size = 0x400, scoped, tag = 'output window, operand 0']
    %20 = vsyncpa [#allocation3], 0
    %s21 = scalar_lea.sflag [#allocation3], 1
    %22 = vsyncpa %s21, 0
    %23 = vsyncpa [#allocation6], 0
    %s24 = scalar_lea.sflag [#allocation6], 1
    %25 = vsyncpa %s24, 0
    %26 = vsyncpa [#allocation9], 0
    %s27 = scalar_lea.sflag [#allocation9], 1
    %28 = vsyncpa %s27, 0
    %29 = vsyncpa [#allocation12], 0
    %30 = vsyncpa [#allocation15], 0
    %31 = vsyncpa [#allocation4], 0
    %s32 = scalar_lea.sflag [#allocation4], 1
    %33 = vsyncpa %s32, 0
    loop: start=0, step=1, limit=4
    $region2: #{tpu_custom_call.1} parent=1 // loop_pre_header
      _
    $region3: #{tpu_custom_call.1} parent=1 // loop_header
      %s35 = sphi 0, %s39
      %p36 = scmp.ge.s32.totalorder %s35, 4
      %s45 = sphi 0, %s47
      %s48 = sphi 0, %s45
      %s49 = sphi 0, %s48
      %s65 = sphi 0, %s49
      %s71 = sphi 0, %s73
      %s74 = sphi 0, %s71
      %s75 = sphi 0, %s74
      %s91 = sphi 0, %s75
      %s97 = sphi 0, %s99
      %s100 = sphi 0, %s97
      %s101 = sphi 0, %s100
      %s117 = sphi 0, %s101
      %s123 = sphi 0, %s125
      %s126 = sphi 0, %s123
      %s127 = sphi 0, %s126
      %s143 = sphi 0, %s127
      %s147 = sphi 0, %s147
      %s149 = sphi 0, %s147
      %s150 = sphi 0, %s149
      %s164 = sphi 0, %s150
      %s168 = sphi 0, %s168
      %s170 = sphi 0, %s168
      %s171 = sphi 0, %s170
      %s185 = sphi 0, %s171
      %s189 = sphi 0, %s189
      %s191 = sphi 0, %s189
      %s192 = sphi 0, %s191
      %s206 = sphi 0, %s192
      %s210 = sphi 0, %s210
      %s212 = sphi 0, %s210
      %s213 = sphi 0, %s212
      %s227 = sphi 0, %s213
      %s231 = sphi 0, %s231
      %s233 = sphi 0, %s231
      %s234 = sphi 0, %s233
      %s248 = sphi 0, %s234
      %s252 = sphi 0, %s252
      %s254 = sphi 0, %s252
      %s255 = sphi 0, %s254
      %s269 = sphi 0, %s255
      %s273 = sphi 0, %s273
      %s275 = sphi 0, %s273
      %s276 = sphi 0, %s275
      %s290 = sphi 0, %s276
      %s294 = sphi 0, %s294
      %s296 = sphi 0, %s294
      %s297 = sphi 0, %s296
      %s311 = sphi 0, %s297
      %s315 = sphi 0, %s315
      %s317 = sphi 0, %s315
      %s318 = sphi 0, %s317
      %s332 = sphi 0, %s318
      %s336 = sphi 0, %s336
      %s338 = sphi 0, %s336
      %s339 = sphi 0, %s338
      %s353 = sphi 0, %s339
      %s357 = sphi 0, %s357
      %s359 = sphi 0, %s357
      %s360 = sphi 0, %s359
      %s374 = sphi 0, %s360
      %s380 = sphi 0, %s382
      %s383 = sphi 0, %s380
      %s384 = sphi 0, %s383
      %s400 = sphi 0, %s384
    $region4: #{tpu_custom_call.1} parent=1 // loop_header_branch
      %38 = sbr.rel (%p36) target = $region8
    $region5: #{tpu_custom_call.1} parent=1 // loop_body
      %s40 = ssub.s32 %s35, 1
      %s41 = ssub.s32 %s35, 2
      %s42 = sadd.s32 %s35, 1
      %s43 = ssub.s32 %s35, %s42
      %p44 = scmp.eq.s32.totalorder %s43, 0
      %s46 = sadd.s32 %s45, 1
      %s47 = scalar_select %p44, %s45, %s46
      %p50 = pneg %p44
      %p51 = scmp.eq.s32.totalorder %s35, 1
      %p52 = por %p50, %p51
      %p53 = scmp.ne.s32.totalorder %s45, %s48
      %p54 = scmp.eq.s32.totalorder %s35, 0
      %p55 = por %p53, %p54
      %p56 = scmp.ne.s32.totalorder %s45, %s48
      %p57 = scmp.eq.s32.totalorder %s40, 1
      %p58 = por %p56, %p57
      %p59 = scmp.ne.s32.totalorder %s48, %s49
      %p60 = scmp.eq.s32.totalorder %s40, 0
      %p61 = por %p59, %p60
      %p62 = scmp.ne.s32.totalorder %s48, %s49
      %p63 = scmp.eq.s32.totalorder %s41, 1
      %p64 = por %p62, %p63
      %p66 = scmp.ne.s32.totalorder %s49, %s65
      %p67 = scmp.eq.s32.totalorder %s41, 0
      %p68 = por %p66, %p67
      %s69 = ssub.s32 %s35, %s42
      %p70 = scmp.eq.s32.totalorder %s69, 0
      %s72 = sadd.s32 %s71, 1
      %s73 = scalar_select %p70, %s71, %s72
      %p76 = pneg %p70
      %p77 = scmp.eq.s32.totalorder %s35, 1
      %p78 = por %p76, %p77
      %p79 = scmp.ne.s32.totalorder %s71, %s74
      %p80 = scmp.eq.s32.totalorder %s35, 0
      %p81 = por %p79, %p80
      %p82 = scmp.ne.s32.totalorder %s71, %s74
      %p83 = scmp.eq.s32.totalorder %s40, 1
      %p84 = por %p82, %p83
      %p85 = scmp.ne.s32.totalorder %s74, %s75
      %p86 = scmp.eq.s32.totalorder %s40, 0
      %p87 = por %p85, %p86
      %p88 = scmp.ne.s32.totalorder %s74, %s75
      %p89 = scmp.eq.s32.totalorder %s41, 1
      %p90 = por %p88, %p89
      %p92 = scmp.ne.s32.totalorder %s75, %s91
      %p93 = scmp.eq.s32.totalorder %s41, 0
      %p94 = por %p92, %p93
      %s95 = ssub.s32 %s35, %s42
      %p96 = scmp.eq.s32.totalorder %s95, 0
      %s98 = sadd.s32 %s97, 1
      %s99 = scalar_select %p96, %s97, %s98
      %p102 = pneg %p96
      %p103 = scmp.eq.s32.totalorder %s35, 1
      %p104 = por %p102, %p103
      %p105 = scmp.ne.s32.totalorder %s97, %s100
      %p106 = scmp.eq.s32.totalorder %s35, 0
      %p107 = por %p105, %p106
      %p108 = scmp.ne.s32.totalorder %s97, %s100
      %p109 = scmp.eq.s32.totalorder %s40, 1
      %p110 = por %p108, %p109
      %p111 = scmp.ne.s32.totalorder %s100, %s101
      %p112 = scmp.eq.s32.totalorder %s40, 0
      %p113 = por %p111, %p112
      %p114 = scmp.ne.s32.totalorder %s100, %s101
      %p115 = scmp.eq.s32.totalorder %s41, 1
      %p116 = por %p114, %p115
      %p118 = scmp.ne.s32.totalorder %s101, %s117
      %p119 = scmp.eq.s32.totalorder %s41, 0
      %p120 = por %p118, %p119
      %s121 = ssub.s32 %s35, %s42
      %p122 = scmp.eq.s32.totalorder %s121, 0
      %s124 = sadd.s32 %s123, 1
      %s125 = scalar_select %p122, %s123, %s124
      %p128 = pneg %p122
      %p129 = scmp.eq.s32.totalorder %s35, 1
      %p130 = por %p128, %p129
      %p131 = scmp.ne.s32.totalorder %s123, %s126
      %p132 = scmp.eq.s32.totalorder %s35, 0
      %p133 = por %p131, %p132
      %p134 = scmp.ne.s32.totalorder %s123, %s126
      %p135 = scmp.eq.s32.totalorder %s40, 1
      %p136 = por %p134, %p135
      %p137 = scmp.ne.s32.totalorder %s126, %s127
      %p138 = scmp.eq.s32.totalorder %s40, 0
      %p139 = por %p137, %p138
      %p140 = scmp.ne.s32.totalorder %s126, %s127
      %p141 = scmp.eq.s32.totalorder %s41, 1
      %p142 = por %p140, %p141
      %p144 = scmp.ne.s32.totalorder %s127, %s143
      %p145 = scmp.eq.s32.totalorder %s41, 0
      %p146 = por %p144, %p145
      %s148 = sadd.s32 %s147, 1
      %p151 = scmp.eq.s32.totalorder %s35, 1
      %p152 = scmp.ne.s32.totalorder %s147, %s149
      %p153 = scmp.eq.s32.totalorder %s35, 0
      %p154 = por %p152, %p153
      %p155 = scmp.ne.s32.totalorder %s147, %s149
      %p156 = scmp.eq.s32.totalorder %s40, 1
      %p157 = por %p155, %p156
      %p158 = scmp.ne.s32.totalorder %s149, %s150
      %p159 = scmp.eq.s32.totalorder %s40, 0
      %p160 = por %p158, %p159
      %p161 = scmp.ne.s32.totalorder %s149, %s150
      %p162 = scmp.eq.s32.totalorder %s41, 1
      %p163 = por %p161, %p162
      %p165 = scmp.ne.s32.totalorder %s150, %s164
      %p166 = scmp.eq.s32.totalorder %s41, 0
      %p167 = por %p165, %p166
      %s169 = sadd.s32 %s168, 1
      %p172 = scmp.eq.s32.totalorder %s35, 1
      %p173 = scmp.ne.s32.totalorder %s168, %s170
      %p174 = scmp.eq.s32.totalorder %s35, 0
      %p175 = por %p173, %p174
      %p176 = scmp.ne.s32.totalorder %s168, %s170
      %p177 = scmp.eq.s32.totalorder %s40, 1
      %p178 = por %p176, %p177
      %p179 = scmp.ne.s32.totalorder %s170, %s171
      %p180 = scmp.eq.s32.totalorder %s40, 0
      %p181 = por %p179, %p180
      %p182 = scmp.ne.s32.totalorder %s170, %s171
      %p183 = scmp.eq.s32.totalorder %s41, 1
      %p184 = por %p182, %p183
      %p186 = scmp.ne.s32.totalorder %s171, %s185
      %p187 = scmp.eq.s32.totalorder %s41, 0
      %p188 = por %p186, %p187
      %s190 = sadd.s32 %s189, 1
      %p193 = scmp.eq.s32.totalorder %s35, 1
      %p194 = scmp.ne.s32.totalorder %s189, %s191
      %p195 = scmp.eq.s32.totalorder %s35, 0
      %p196 = por %p194, %p195
      %p197 = scmp.ne.s32.totalorder %s189, %s191
      %p198 = scmp.eq.s32.totalorder %s40, 1
      %p199 = por %p197, %p198
      %p200 = scmp.ne.s32.totalorder %s191, %s192
      %p201 = scmp.eq.s32.totalorder %s40, 0
      %p202 = por %p200, %p201
      %p203 = scmp.ne.s32.totalorder %s191, %s192
      %p204 = scmp.eq.s32.totalorder %s41, 1
      %p205 = por %p203, %p204
      %p207 = scmp.ne.s32.totalorder %s192, %s206
      %p208 = scmp.eq.s32.totalorder %s41, 0
      %p209 = por %p207, %p208
      %s211 = sadd.s32 %s210, 1
      %p214 = scmp.eq.s32.totalorder %s35, 1
      %p215 = scmp.ne.s32.totalorder %s210, %s212
      %p216 = scmp.eq.s32.totalorder %s35, 0
      %p217 = por %p215, %p216
      %p218 = scmp.ne.s32.totalorder %s210, %s212
      %p219 = scmp.eq.s32.totalorder %s40, 1
      %p220 = por %p218, %p219
      %p221 = scmp.ne.s32.totalorder %s212, %s213
      %p222 = scmp.eq.s32.totalorder %s40, 0
      %p223 = por %p221, %p222
      %p224 = scmp.ne.s32.totalorder %s212, %s213
      %p225 = scmp.eq.s32.totalorder %s41, 1
      %p226 = por %p224, %p225
      %p228 = scmp.ne.s32.totalorder %s213, %s227
      %p229 = scmp.eq.s32.totalorder %s41, 0
      %p230 = por %p228, %p229
      %s232 = sadd.s32 %s231, 1
      %p235 = scmp.eq.s32.totalorder %s35, 1
      %p236 = scmp.ne.s32.totalorder %s231, %s233
      %p237 = scmp.eq.s32.totalorder %s35, 0
      %p238 = por %p236, %p237
      %p239 = scmp.ne.s32.totalorder %s231, %s233
      %p240 = scmp.eq.s32.totalorder %s40, 1
      %p241 = por %p239, %p240
      %p242 = scmp.ne.s32.totalorder %s233, %s234
      %p243 = scmp.eq.s32.totalorder %s40, 0
      %p244 = por %p242, %p243
      %p245 = scmp.ne.s32.totalorder %s233, %s234
      %p246 = scmp.eq.s32.totalorder %s41, 1
      %p247 = por %p245, %p246
      %p249 = scmp.ne.s32.totalorder %s234, %s248
      %p250 = scmp.eq.s32.totalorder %s41, 0
      %p251 = por %p249, %p250
      %s253 = sadd.s32 %s252, 1
      %p256 = scmp.eq.s32.totalorder %s35, 1
      %p257 = scmp.ne.s32.totalorder %s252, %s254
      %p258 = scmp.eq.s32.totalorder %s35, 0
      %p259 = por %p257, %p258
      %p260 = scmp.ne.s32.totalorder %s252, %s254
      %p261 = scmp.eq.s32.totalorder %s40, 1
      %p262 = por %p260, %p261
      %p263 = scmp.ne.s32.totalorder %s254, %s255
      %p264 = scmp.eq.s32.totalorder %s40, 0
      %p265 = por %p263, %p264
      %p266 = scmp.ne.s32.totalorder %s254, %s255
      %p267 = scmp.eq.s32.totalorder %s41, 1
      %p268 = por %p266, %p267
      %p270 = scmp.ne.s32.totalorder %s255, %s269
      %p271 = scmp.eq.s32.totalorder %s41, 0
      %p272 = por %p270, %p271
      %s274 = sadd.s32 %s273, 1
      %p277 = scmp.eq.s32.totalorder %s35, 1
      %p278 = scmp.ne.s32.totalorder %s273, %s275
      %p279 = scmp.eq.s32.totalorder %s35, 0
      %p280 = por %p278, %p279
      %p281 = scmp.ne.s32.totalorder %s273, %s275
      %p282 = scmp.eq.s32.totalorder %s40, 1
      %p283 = por %p281, %p282
      %p284 = scmp.ne.s32.totalorder %s275, %s276
      %p285 = scmp.eq.s32.totalorder %s40, 0
      %p286 = por %p284, %p285
      %p287 = scmp.ne.s32.totalorder %s275, %s276
      %p288 = scmp.eq.s32.totalorder %s41, 1
      %p289 = por %p287, %p288
      %p291 = scmp.ne.s32.totalorder %s276, %s290
      %p292 = scmp.eq.s32.totalorder %s41, 0
      %p293 = por %p291, %p292
      %s295 = sadd.s32 %s294, 1
      %p298 = scmp.eq.s32.totalorder %s35, 1
      %p299 = scmp.ne.s32.totalorder %s294, %s296
      %p300 = scmp.eq.s32.totalorder %s35, 0
      %p301 = por %p299, %p300
      %p302 = scmp.ne.s32.totalorder %s294, %s296
      %p303 = scmp.eq.s32.totalorder %s40, 1
      %p304 = por %p302, %p303
      %p305 = scmp.ne.s32.totalorder %s296, %s297
      %p306 = scmp.eq.s32.totalorder %s40, 0
      %p307 = por %p305, %p306
      %p308 = scmp.ne.s32.totalorder %s296, %s297
      %p309 = scmp.eq.s32.totalorder %s41, 1
      %p310 = por %p308, %p309
      %p312 = scmp.ne.s32.totalorder %s297, %s311
      %p313 = scmp.eq.s32.totalorder %s41, 0
      %p314 = por %p312, %p313
      %s316 = sadd.s32 %s315, 1
      %p319 = scmp.eq.s32.totalorder %s35, 1
      %p320 = scmp.ne.s32.totalorder %s315, %s317
      %p321 = scmp.eq.s32.totalorder %s35, 0
      %p322 = por %p320, %p321
      %p323 = scmp.ne.s32.totalorder %s315, %s317
      %p324 = scmp.eq.s32.totalorder %s40, 1
      %p325 = por %p323, %p324
      %p326 = scmp.ne.s32.totalorder %s317, %s318
      %p327 = scmp.eq.s32.totalorder %s40, 0
      %p328 = por %p326, %p327
      %p329 = scmp.ne.s32.totalorder %s317, %s318
      %p330 = scmp.eq.s32.totalorder %s41, 1
      %p331 = por %p329, %p330
      %p333 = scmp.ne.s32.totalorder %s318, %s332
      %p334 = scmp.eq.s32.totalorder %s41, 0
      %p335 = por %p333, %p334
      %s337 = sadd.s32 %s336, 1
      %p340 = scmp.eq.s32.totalorder %s35, 1
      %p341 = scmp.ne.s32.totalorder %s336, %s338
      %p342 = scmp.eq.s32.totalorder %s35, 0
      %p343 = por %p341, %p342
      %p344 = scmp.ne.s32.totalorder %s336, %s338
      %p345 = scmp.eq.s32.totalorder %s40, 1
      %p346 = por %p344, %p345
      %p347 = scmp.ne.s32.totalorder %s338, %s339
      %p348 = scmp.eq.s32.totalorder %s40, 0
      %p349 = por %p347, %p348
      %p350 = scmp.ne.s32.totalorder %s338, %s339
      %p351 = scmp.eq.s32.totalorder %s41, 1
      %p352 = por %p350, %p351
      %p354 = scmp.ne.s32.totalorder %s339, %s353
      %p355 = scmp.eq.s32.totalorder %s41, 0
      %p356 = por %p354, %p355
      %s358 = sadd.s32 %s357, 1
      %p361 = scmp.eq.s32.totalorder %s35, 1
      %p362 = scmp.ne.s32.totalorder %s357, %s359
      %p363 = scmp.eq.s32.totalorder %s35, 0
      %p364 = por %p362, %p363
      %p365 = scmp.ne.s32.totalorder %s357, %s359
      %p366 = scmp.eq.s32.totalorder %s40, 1
      %p367 = por %p365, %p366
      %p368 = scmp.ne.s32.totalorder %s359, %s360
      %p369 = scmp.eq.s32.totalorder %s40, 0
      %p370 = por %p368, %p369
      %p371 = scmp.ne.s32.totalorder %s359, %s360
      %p372 = scmp.eq.s32.totalorder %s41, 1
      %p373 = por %p371, %p372
      %p375 = scmp.ne.s32.totalorder %s360, %s374
      %p376 = scmp.eq.s32.totalorder %s41, 0
      %p377 = por %p375, %p376
      %s378 = ssub.s32 %s35, %s42
      %p379 = scmp.eq.s32.totalorder %s378, 0
      %s381 = sadd.s32 %s380, 1
      %s382 = scalar_select %p379, %s380, %s381
      %p385 = pneg %p379
      %p386 = scmp.eq.s32.totalorder %s35, 1
      %p387 = por %p385, %p386
      %p388 = scmp.ne.s32.totalorder %s380, %s383
      %p389 = scmp.eq.s32.totalorder %s35, 0
      %p390 = por %p388, %p389
      %p391 = scmp.ne.s32.totalorder %s380, %s383
      %p392 = scmp.eq.s32.totalorder %s40, 1
      %p393 = por %p391, %p392
      %p394 = scmp.ne.s32.totalorder %s383, %s384
      %p395 = scmp.eq.s32.totalorder %s40, 0
      %p396 = por %p394, %p395
      %p397 = scmp.ne.s32.totalorder %s383, %s384
      %p398 = scmp.eq.s32.totalorder %s41, 1
      %p399 = por %p397, %p398
      %p401 = scmp.ne.s32.totalorder %s384, %s400
      %p402 = scmp.eq.s32.totalorder %s41, 0
      %p403 = por %p401, %p402
      %p404 = scmp.le.s32.totalorder 1, %s35
      %p405 = scmp.lt.s32.totalorder %s35, 3
      %p406 = pnand %p404, %p405
      %p407 = pneg %p406
      // Predicated region
      $region9: #{tpu_custom_call.1} parent=5 // pred_check
        _
      $region10: #{tpu_custom_call.1} parent=5 // pred_check_branch
        %409 = sbr.rel (%p406) target = $region12
      $region11: #{tpu_custom_call.1} parent=5 // pred_region
        %s410 = ssub.s32 %s35, 1
        // Predicated region
        $region13: #{tpu_custom_call.1} parent=11 // pred_check
          %p411 = pneg %p160
        $region14: #{tpu_custom_call.1} parent=11 // pred_check_branch
          %413 = sbr.rel (%p411) target = $region16
        $region15: #{tpu_custom_call.1} parent=11 // pred_region
          %s415 = ssub.s32 6144, 6144
          %416 = vsyncadd [#allocation9], %s415
          %s417 = sshll.u32 [#allocation10], 4
          %s418 = int_to_ptr.vmem [resolvable:$true] %s417
          %423 = dma.hbm_to_vmem [thread:$0]  %s4, 6144, %s418, [#allocation9], 192, 192, 12
        $region16: #{tpu_custom_call.1} parent=11 // pred_fallthru
          _
        // Predicated region
        $region17: #{tpu_custom_call.1} parent=11 // pred_check
          %p424 = pneg %p181
        $region18: #{tpu_custom_call.1} parent=11 // pred_check_branch
          %426 = sbr.rel (%p424) target = $region20
        $region19: #{tpu_custom_call.1} parent=11 // pred_region
          _
        $region20: #{tpu_custom_call.1} parent=11 // pred_fallthru
          _
        // Predicated region
        $region21: #{tpu_custom_call.1} parent=11 // pred_check
          %p427 = pneg %p202
        $region22: #{tpu_custom_call.1} parent=11 // pred_check_branch
          %429 = sbr.rel (%p427) target = $region24
        $region23: #{tpu_custom_call.1} parent=11 // pred_region
          %s431 = ssub.s32 2048, 2048
          %432 = vsyncadd [#allocation12], %s431
          %s433 = sshll.u32 [#allocation11], 4
          %s434 = int_to_ptr.vmem [resolvable:$true] %s433
          %439 = dma.hbm_to_vmem [thread:$0]  %s6, 2048, %s434, [#allocation12], 64, 64, 4
        $region24: #{tpu_custom_call.1} parent=11 // pred_fallthru
          _
        // Predicated region
        $region25: #{tpu_custom_call.1} parent=11 // pred_check
          %p440 = pneg %p223
        $region26: #{tpu_custom_call.1} parent=11 // pred_check_branch
          %442 = sbr.rel (%p440) target = $region28
        $region27: #{tpu_custom_call.1} parent=11 // pred_region
          _
        $region28: #{tpu_custom_call.1} parent=11 // pred_fallthru
          _
        // Predicated region
        $region29: #{tpu_custom_call.1} parent=11 // pred_check
          %p443 = pneg %p244
        $region30: #{tpu_custom_call.1} parent=11 // pred_check_branch
          %445 = sbr.rel (%p443) target = $region32
        $region31: #{tpu_custom_call.1} parent=11 // pred_region
          _
        $region32: #{tpu_custom_call.1} parent=11 // pred_fallthru
          _
        // Predicated region
        $region33: #{tpu_custom_call.1} parent=11 // pred_check
          %p446 = pneg %p265
        $region34: #{tpu_custom_call.1} parent=11 // pred_check_branch
          %448 = sbr.rel (%p446) target = $region36
        $region35: #{tpu_custom_call.1} parent=11 // pred_region
          %s450 = ssub.s32 4096, 4096
          %451 = vsyncadd [#allocation12], %s450
          %s452 = sshll.u32 [#allocation13], 4
          %s453 = int_to_ptr.vmem [resolvable:$true] %s452
          %458 = dma.hbm_to_vmem [thread:$0]  %s9, 4096, %s453, [#allocation12], 128, 128, 8
        $region36: #{tpu_custom_call.1} parent=11 // pred_fallthru
          _
        // Predicated region
        $region37: #{tpu_custom_call.1} parent=11 // pred_check
          %p459 = pneg %p286
        $region38: #{tpu_custom_call.1} parent=11 // pred_check_branch
          %461 = sbr.rel (%p459) target = $region40
        $region39: #{tpu_custom_call.1} parent=11 // pred_region
          _
        $region40: #{tpu_custom_call.1} parent=11 // pred_fallthru
          _
        // Predicated region
        $region41: #{tpu_custom_call.1} parent=11 // pred_check
          %p462 = pneg %p307
        $region42: #{tpu_custom_call.1} parent=11 // pred_check_branch
          %464 = sbr.rel (%p462) target = $region44
        $region43: #{tpu_custom_call.1} parent=11 // pred_region
          %s466 = ssub.s32 4096, 4096
          %467 = vsyncadd [#allocation15], %s466
          %s468 = sshll.u32 [#allocation14], 4
          %s469 = int_to_ptr.vmem [resolvable:$true] %s468
          %474 = dma.hbm_to_vmem [thread:$0]  %s11, 4096, %s469, [#allocation15], 64, 64, 4
        $region44: #{tpu_custom_call.1} parent=11 // pred_fallthru
          _
        // Predicated region
        $region45: #{tpu_custom_call.1} parent=11 // pred_check
          %p475 = pneg %p328
        $region46: #{tpu_custom_call.1} parent=11 // pred_check_branch
          %477 = sbr.rel (%p475) target = $region48
        $region47: #{tpu_custom_call.1} parent=11 // pred_region
          _
        $region48: #{tpu_custom_call.1} parent=11 // pred_fallthru
          _
        // Predicated region
        $region49: #{tpu_custom_call.1} parent=11 // pred_check
          %p478 = pneg %p349
        $region50: #{tpu_custom_call.1} parent=11 // pred_check_branch
          %480 = sbr.rel (%p478) target = $region52
        $region51: #{tpu_custom_call.1} parent=11 // pred_region
          _
        $region52: #{tpu_custom_call.1} parent=11 // pred_fallthru
          _
        // Predicated region
        $region53: #{tpu_custom_call.1} parent=11 // pred_check
          %p481 = pneg %p370
        $region54: #{tpu_custom_call.1} parent=11 // pred_check_branch
          %483 = sbr.rel (%p481) target = $region56
        $region55: #{tpu_custom_call.1} parent=11 // pred_region
          %s485 = ssub.s32 1024, 1024
          %486 = vsyncadd [#allocation15], %s485
          %s487 = sshll.u32 [#allocation16], 4
          %s488 = int_to_ptr.vmem [resolvable:$true] %s487
          %493 = dma.hbm_to_vmem [thread:$0]  %s14, 1024, %s488, [#allocation15], 64, 64, 4
        $region56: #{tpu_custom_call.1} parent=11 // pred_fallthru
          _
      $region12: #{tpu_custom_call.1} parent=5 // pred_fallthru
        _
      %p494 = scmp.lt.s32.totalorder %s35, 2
      // Predicated region
      $region57: #{tpu_custom_call.1} parent=5 // pred_check
        %p495 = pneg %p494
      $region58: #{tpu_custom_call.1} parent=5 // pred_check_branch
        %497 = sbr.rel (%p495) target = $region60
      $region59: #{tpu_custom_call.1} parent=5 // pred_region
        // Predicated region
        $region61: #{tpu_custom_call.1} parent=59 // pred_check
          %p498 = pneg %p55
        $region62: #{tpu_custom_call.1} parent=59 // pred_check_branch
          %500 = sbr.rel (%p498) target = $region64
        $region63: #{tpu_custom_call.1} parent=59 // pred_region
          %s501 = sand.u32 %s45, 1
          %s502 = scalar_lea.sflag [#allocation3], %s501
          %s503 = sand.u32 %s45, 1
          %s504 = smul.addr %s503, 32
          %s505 = scalar_lea.vmem [#allocation2], %s504
          %s507 = ssub.s32 512, 512
          %508 = vsyncadd %s502, %s507
          %s509 = smul.addr %s35, 4
          %s510 = smul.addr %s509, 128
          %s511 = scalar_lea.hbm %s0, %s510
          %s512 = sshll.u32 %s505, 4
          %s513 = int_to_ptr.vmem [resolvable:$true] %s512
          %518 = dma.hbm_to_vmem [thread:$0]  %s511, 512, %s513, %s502, 128, 128, 8
        $region64: #{tpu_custom_call.1} parent=59 // pred_fallthru
          _
        // Predicated region
        $region65: #{tpu_custom_call.1} parent=59 // pred_check
          %p519 = pneg %p81
        $region66: #{tpu_custom_call.1} parent=59 // pred_check_branch
          %521 = sbr.rel (%p519) target = $region68
        $region67: #{tpu_custom_call.1} parent=59 // pred_region
          %s522 = sand.u32 %s35, 1
          %s523 = scalar_lea.sflag [#allocation6], %s522
          %s524 = sand.u32 %s71, 1
          %s525 = scalar_lea.vmem [#allocation5], %s524
          %s527 = ssub.s32 16, 16
          %528 = vsyncadd %s523, %s527
          %s529 = smul.addr %s35, 16
          %s530 = scalar_lea.hbm %s1, %s529
          %s532 = sshll.u32 %s525, 4
          %s533 = int_to_ptr.vmem [resolvable:$true] %s532
          %535 = dma.hbm_to_vmem [thread:$0]  %s530, 16, %s533, %s523
        $region68: #{tpu_custom_call.1} parent=59 // pred_fallthru
          _
        // Predicated region
        $region69: #{tpu_custom_call.1} parent=59 // pred_check
          %p536 = pneg %p107
        $region70: #{tpu_custom_call.1} parent=59 // pred_check_branch
          %538 = sbr.rel (%p536) target = $region72
        $region71: #{tpu_custom_call.1} parent=59 // pred_region
          %s539 = sand.u32 %s35, 1
          %s540 = scalar_lea.sflag [#allocation6], %s539
          %s541 = sand.u32 %s97, 1
          %s542 = scalar_lea.vmem [#allocation7], %s541
          %s544 = ssub.s32 16, 16
          %545 = vsyncadd %s540, %s544
          %s546 = smul.addr %s35, 16
          %s547 = scalar_lea.hbm %s2, %s546
          %s549 = sshll.u32 %s542, 4
          %s550 = int_to_ptr.vmem [resolvable:$true] %s549
          %552 = dma.hbm_to_vmem [thread:$0]  %s547, 16, %s550, %s540
        $region72: #{tpu_custom_call.1} parent=59 // pred_fallthru
          _
        // Predicated region
        $region73: #{tpu_custom_call.1} parent=59 // pred_check
          %p553 = pneg %p133
        $region74: #{tpu_custom_call.1} parent=59 // pred_check_branch
          %555 = sbr.rel (%p553) target = $region76
        $region75: #{tpu_custom_call.1} parent=59 // pred_region
          %s556 = sand.u32 %s35, 1
          %s557 = scalar_lea.sflag [#allocation9], %s556
          %s558 = sand.u32 %s123, 1
          %s559 = scalar_lea.vmem [#allocation8], %s558
          %s561 = ssub.s32 16, 16
          %562 = vsyncadd %s557, %s561
          %s563 = smul.addr %s35, 16
          %s564 = scalar_lea.hbm %s3, %s563
          %s566 = sshll.u32 %s559, 4
          %s567 = int_to_ptr.vmem [resolvable:$true] %s566
          %569 = dma.hbm_to_vmem [thread:$0]  %s564, 16, %s567, %s557
        $region76: #{tpu_custom_call.1} parent=59 // pred_fallthru
          _
      $region60: #{tpu_custom_call.1} parent=5 // pred_fallthru
        _
      %p570 = scmp.le.s32.totalorder 1, %s35
      %p571 = scmp.lt.s32.totalorder %s35, 3
      %p572 = pnand %p570, %p571
      %p573 = pneg %p572
      // Predicated region
      $region77: #{tpu_custom_call.1} parent=5 // pred_check
        _
      $region78: #{tpu_custom_call.1} parent=5 // pred_check_branch
        %575 = sbr.rel (%p572) target = $region80
      $region79: #{tpu_custom_call.1} parent=5 // pred_region
        %s576 = ssub.s32 %s35, 1
        %s577 = sand.u32 %s48, 1
        %s578 = scalar_lea.sflag [#allocation3], %s577
        %s579 = sand.u32 %s48, 1
        %s580 = smul.addr %s579, 32
        %s581 = scalar_lea.vmem [#allocation2], %s580
        // Predicated region
        $region81: #{tpu_custom_call.1} parent=79 // pred_check
          %p582 = pneg %p61
        $region82: #{tpu_custom_call.1} parent=79 // pred_check_branch
          %584 = sbr.rel (%p582) target = $region84
        $region83: #{tpu_custom_call.1} parent=79 // pred_region
          %585 = dma.done %s578, 512
        $region84: #{tpu_custom_call.1} parent=79 // pred_fallthru
          _
        %s586 = sand.u32 %s40, 1
        %s587 = scalar_lea.sflag [#allocation6], %s586
        %s588 = sand.u32 %s74, 1
        %s589 = scalar_lea.vmem [#allocation5], %s588
        // Predicated region
        $region85: #{tpu_custom_call.1} parent=79 // pred_check
          %p590 = pneg %p87
        $region86: #{tpu_custom_call.1} parent=79 // pred_check_branch
          %592 = sbr.rel (%p590) target = $region88
        $region87: #{tpu_custom_call.1} parent=79 // pred_region
          %593 = dma.done %s587, 16
        $region88: #{tpu_custom_call.1} parent=79 // pred_fallthru
          _
        %s594 = sand.u32 %s40, 1
        %s595 = scalar_lea.sflag [#allocation6], %s594
        %s596 = sand.u32 %s100, 1
        %s597 = scalar_lea.vmem [#allocation7], %s596
        // Predicated region
        $region89: #{tpu_custom_call.1} parent=79 // pred_check
          %p598 = pneg %p113
        $region90: #{tpu_custom_call.1} parent=79 // pred_check_branch
          %600 = sbr.rel (%p598) target = $region92
        $region91: #{tpu_custom_call.1} parent=79 // pred_region
          %601 = dma.done %s595, 16
        $region92: #{tpu_custom_call.1} parent=79 // pred_fallthru
          _
        %s602 = sand.u32 %s40, 1
        %s603 = scalar_lea.sflag [#allocation9], %s602
        %s604 = sand.u32 %s126, 1
        %s605 = scalar_lea.vmem [#allocation8], %s604
        // Predicated region
        $region93: #{tpu_custom_call.1} parent=79 // pred_check
          %p606 = pneg %p139
        $region94: #{tpu_custom_call.1} parent=79 // pred_check_branch
          %608 = sbr.rel (%p606) target = $region96
        $region95: #{tpu_custom_call.1} parent=79 // pred_region
          %609 = dma.done %s603, 16
        $region96: #{tpu_custom_call.1} parent=79 // pred_fallthru
          _
        // Predicated region
        $region97: #{tpu_custom_call.1} parent=79 // pred_check
          %p610 = pneg %p160
        $region98: #{tpu_custom_call.1} parent=79 // pred_check_branch
          %612 = sbr.rel (%p610) target = $region100
        $region99: #{tpu_custom_call.1} parent=79 // pred_region
          %613 = dma.done [#allocation9], 6144
        $region100: #{tpu_custom_call.1} parent=79 // pred_fallthru
          _
        // Predicated region
        $region101: #{tpu_custom_call.1} parent=79 // pred_check
          %p614 = pneg %p202
        $region102: #{tpu_custom_call.1} parent=79 // pred_check_branch
          %616 = sbr.rel (%p614) target = $region104
        $region103: #{tpu_custom_call.1} parent=79 // pred_region
          %617 = dma.done [#allocation12], 2048
        $region104: #{tpu_custom_call.1} parent=79 // pred_fallthru
          _
        // Predicated region
        $region105: #{tpu_custom_call.1} parent=79 // pred_check
          %p618 = pneg %p265
        $region106: #{tpu_custom_call.1} parent=79 // pred_check_branch
          %620 = sbr.rel (%p618) target = $region108
        $region107: #{tpu_custom_call.1} parent=79 // pred_region
          %621 = dma.done [#allocation12], 4096
        $region108: #{tpu_custom_call.1} parent=79 // pred_fallthru
          _
        // Predicated region
        $region109: #{tpu_custom_call.1} parent=79 // pred_check
          %p622 = pneg %p307
        $region110: #{tpu_custom_call.1} parent=79 // pred_check_branch
          %624 = sbr.rel (%p622) target = $region112
        $region111: #{tpu_custom_call.1} parent=79 // pred_region
          %625 = dma.done [#allocation15], 4096
        $region112: #{tpu_custom_call.1} parent=79 // pred_fallthru
          _
        // Predicated region
        $region113: #{tpu_custom_call.1} parent=79 // pred_check
          %p626 = pneg %p370
        $region114: #{tpu_custom_call.1} parent=79 // pred_check_branch
          %628 = sbr.rel (%p626) target = $region116
        $region115: #{tpu_custom_call.1} parent=79 // pred_region
          %629 = dma.done [#allocation15], 1024
        $region116: #{tpu_custom_call.1} parent=79 // pred_fallthru
          _
        %s630 = sand.u32 %s48, 1
        %s631 = scalar_lea.sflag [#allocation3], %s630
        %s632 = sand.u32 %s48, 1
        %s633 = smul.addr %s632, 32
        %s634 = scalar_lea.vmem [#allocation2], %s633
        %p635 = pneg %p61
        %p636 = pneg %p58
        %s637 = sand.u32 %s40, 1
        %s638 = scalar_lea.sflag [#allocation6], %s637
        %s639 = sand.u32 %s74, 1
        %s640 = scalar_lea.vmem [#allocation5], %s639
        %p641 = pneg %p87
        %p642 = pneg %p84
        %s643 = sand.u32 %s40, 1
        %s644 = scalar_lea.sflag [#allocation6], %s643
        %s645 = sand.u32 %s100, 1
        %s646 = scalar_lea.vmem [#allocation7], %s645
        %p647 = pneg %p113
        %p648 = pneg %p110
        %s649 = sand.u32 %s40, 1
        %s650 = scalar_lea.sflag [#allocation9], %s649
        %s651 = sand.u32 %s126, 1
        %s652 = scalar_lea.vmem [#allocation8], %s651
        %p653 = pneg %p139
        %p654 = pneg %p136
        %p655 = pneg %p160
        %p656 = pneg %p157
        %p657 = pneg %p181
        %p658 = pneg %p178
        %p659 = pneg %p202
        %p660 = pneg %p199
        %p661 = pneg %p223
        %p662 = pneg %p220
        %p663 = pneg %p244
        %p664 = pneg %p241
        %p665 = pneg %p265
        %p666 = pneg %p262
        %p667 = pneg %p286
        %p668 = pneg %p283
        %p669 = pneg %p307
        %p670 = pneg %p304
        %p671 = pneg %p328
        %p672 = pneg %p325
        %p673 = pneg %p349
        %p674 = pneg %p346
        %p675 = pneg %p370
        %p676 = pneg %p367
        %p677 = pneg %p396
        %p678 = pneg %p393
        %s679 = sand.u32 %s383, 1
        %s680 = scalar_lea.sflag [#allocation4], %s679
        %s681 = sand.u32 %s383, 1
        %s682 = scalar_lea.vmem [#allocation17], %s681
        %v684 = vld [vmem:[%s581] sm:$0xff]
        %v685 = vld [vmem:[%s581 + $0x8] sm:$0xff]
        %v686 = vld [vmem:[%s581 + $0x10] sm:$0xff]
        %v687 = vld [vmem:[%s581 + $0x18] sm:$0xff]
        %v688 = vld [vmem:[%s589] sm:$0x1]
        %v689 = vlaneseq
        %v690 = vand.u32 %v689, 127
        %v691 = vld [vmem:[%s8] sm:$0xf]
        %692 = vadd.xlane.f32.xlu0 %v684
        %v693 = vpop.xlane.xlu0 %692
        %694 = vadd.xlane.f32.xlu0 %v685
        %v695 = vpop.xlane.xlu0 %694
        %696 = vadd.xlane.f32.xlu0 %v686
        %v697 = vpop.xlane.xlu0 %696
        %698 = vadd.xlane.f32.xlu0 %v687
        %v699 = vpop.xlane.xlu0 %698
        %v700 = vrcp.pop 128.0
        %v701 = vmul.f32 %v693, %v700
        %v702 = vmul.f32 %v695, %v700
        %v703 = vmul.f32 %v697, %v700
        %v704 = vmul.f32 %v699, %v700
        %v705 = vsub.f32 %v684, %v701
        %v706 = vsub.f32 %v685, %v702
        %v707 = vsub.f32 %v686, %v703
        %v708 = vsub.f32 %v687, %v704
        %v709 = vmul.f32 %v705, %v705
        %v710 = vmul.f32 %v706, %v706
        %v711 = vmul.f32 %v707, %v707
        %v712 = vmul.f32 %v708, %v708
        %713 = vadd.xlane.f32.xlu0 %v709
        %v714 = vpop.xlane.xlu0 %713
        %715 = vadd.xlane.f32.xlu0 %v710
        %v716 = vpop.xlane.xlu0 %715
        %717 = vadd.xlane.f32.xlu0 %v711
        %v718 = vpop.xlane.xlu0 %717
        %719 = vadd.xlane.f32.xlu0 %v712
        %v720 = vpop.xlane.xlu0 %719
        %v721 = vmul.f32 %v714, %v700
        %v722 = vmul.f32 %v716, %v700
        %v723 = vmul.f32 %v718, %v700
        %v724 = vmul.f32 %v720, %v700
        %v725 = vadd.f32 %v721, 1e-05
        %v726 = vadd.f32 %v722, 1e-05
        %v727 = vadd.f32 %v723, 1e-05
        %v728 = vadd.f32 %v724, 1e-05
        %v729 = vrsqrt.pop %v725
        %v730 = vrsqrt.pop %v726
        %v731 = vrsqrt.pop %v727
        %v732 = vrsqrt.pop %v728
        %v733 = vmul.f32 %v705, %v729
        %v734 = vmul.f32 %v706, %v730
        %v735 = vmul.f32 %v707, %v731
        %v736 = vmul.f32 %v708, %v732
        %v737 = vlaneseq
        %v738 = vshrl.u32 %v737, 7
        %v739 = vsub.s32 0, %v738
        %v740 = vrot.slane %v691, %v739
        %v741 = vmul.f32 %v733, %v740
        %v742 = vmul.f32 %v734, %v740
        %v743 = vmul.f32 %v735, %v740
        %v744 = vmul.f32 %v736, %v740
        %v745 = vlaneseq
        %v746 = vshrl.u32 %v745, 7
        %v747 = vsub.s32 1, %v746
        %v748 = vrot.slane %v691, %v747
        %v749 = vadd.f32 %v741, %v748
        %v750 = vadd.f32 %v742, %v748
        %v751 = vadd.f32 %v743, %v748
        %v752 = vadd.f32 %v744, %v748
        %v753 = vpack.c.bf16 %v750, %v749
        %v754 = vpack.c.bf16 %v752, %v751
        %v755 = vld [vmem:[#allocation10] sm:$0xff]
        %v756 = vld [vmem:[#allocation10 + $0x8] sm:$0xf]
        %v757 = vld [vmem:[#allocation10 + $0xc] sm:$0xff]
        %v758 = vld [vmem:[#allocation10 + $0x14] sm:$0xf]
        %v759 = vld [vmem:[#allocation10 + $0x18] sm:$0xff]
        %v760 = vld [vmem:[#allocation10 + $0x20] sm:$0xf]
        %v761 = vld [vmem:[#allocation10 + $0x24] sm:$0xff]
        %v762 = vld [vmem:[#allocation10 + $0x2c] sm:$0xf]
        %v763 = vld [vmem:[#allocation10 + $0x30] sm:$0xff]
        %v764 = vld [vmem:[#allocation10 + $0x38] sm:$0xf]
        %v765 = vld [vmem:[#allocation10 + $0x3c] sm:$0xff]
        %v766 = vld [vmem:[#allocation10 + $0x44] sm:$0xf]
        %v767 = vld [vmem:[#allocation10 + $0x48] sm:$0xff]
        %v768 = vld [vmem:[#allocation10 + $0x50] sm:$0xf]
        %v769 = vld [vmem:[#allocation10 + $0x54] sm:$0xff]
        %v770 = vld [vmem:[#allocation10 + $0x5c] sm:$0xf]
        %v771 = vld [vmem:[#allocation10 + $0x60] sm:$0xff]
        %v772 = vld [vmem:[#allocation10 + $0x68] sm:$0xf]
        %v773 = vld [vmem:[#allocation10 + $0x6c] sm:$0xff]
        %v774 = vld [vmem:[#allocation10 + $0x74] sm:$0xf]
        %v775 = vld [vmem:[#allocation10 + $0x78] sm:$0xff]
        %v776 = vld [vmem:[#allocation10 + $0x80] sm:$0xf]
        %v777 = vld [vmem:[#allocation10 + $0x84] sm:$0xff]
        %v778 = vld [vmem:[#allocation10 + $0x8c] sm:$0xf]
        %v779 = vld [vmem:[#allocation10 + $0x90] sm:$0xff]
        %v780 = vld [vmem:[#allocation10 + $0x98] sm:$0xf]
        %v781 = vld [vmem:[#allocation10 + $0x9c] sm:$0xff]
        %v782 = vld [vmem:[#allocation10 + $0xa4] sm:$0xf]
        %v783 = vld [vmem:[#allocation10 + $0xa8] sm:$0xff]
        %v784 = vld [vmem:[#allocation10 + $0xb0] sm:$0xf]
        %v785 = vld [vmem:[#allocation10 + $0xb4] sm:$0xff]
        %v786 = vld [vmem:[#allocation10 + $0xbc] sm:$0xf]
        %v787 = vld [vmem:[%s5] sm:$0x7]
        %v789 = vlaneseq
        %v790 = vshrl.u32 %v789, 7
        %v791 = vsub.s32 0, %v790
        %v792 = vrot.slane %v787, %v791
        %v793 = vlaneseq
        %v794 = vshrl.u32 %v793, 7
        %v795 = vsub.s32 1, %v794
        %v796 = vrot.slane %v787, %v795
        %v797 = vlaneseq
        %v798 = vshrl.u32 %v797, 7
        %v799 = vsub.s32 2, %v798
        %v800 = vrot.slane %v787, %v799
        %v836 = vunpack.c.l.b16 %v755
        %v837 = vunpack.c.h.b16 %v755
        %v838 = vunpack.c.l.b16 %v756
        %v839 = vunpack.c.l.b16 %v757
        %v840 = vunpack.c.h.b16 %v757
        %v841 = vunpack.c.l.b16 %v758
        %v842 = vunpack.c.l.b16 %v759
        %v843 = vunpack.c.h.b16 %v759
        %v844 = vunpack.c.l.b16 %v760
        %v845 = vunpack.c.l.b16 %v761
        %v846 = vunpack.c.h.b16 %v761
        %v847 = vunpack.c.l.b16 %v762
        %v848 = vunpack.c.l.b16 %v763
        %v849 = vunpack.c.h.b16 %v763
        %v850 = vunpack.c.l.b16 %v764
        %v851 = vunpack.c.l.b16 %v765
        %v852 = vunpack.c.h.b16 %v765
        %v853 = vunpack.c.l.b16 %v766
        %v854 = vunpack.c.l.b16 %v767
        %v855 = vunpack.c.h.b16 %v767
        %v856 = vunpack.c.l.b16 %v768
        %v857 = vunpack.c.l.b16 %v769
        %v858 = vunpack.c.h.b16 %v769
        %v859 = vunpack.c.l.b16 %v770
        %v860 = vunpack.c.l.b16 %v771
        %v861 = vunpack.c.h.b16 %v771
        %v862 = vunpack.c.l.b16 %v772
        %v863 = vunpack.c.l.b16 %v773
        %v864 = vunpack.c.h.b16 %v773
        %v865 = vunpack.c.l.b16 %v774
        %v866 = vunpack.c.l.b16 %v775
        %v867 = vunpack.c.h.b16 %v775
        %v868 = vunpack.c.l.b16 %v776
        %v869 = vunpack.c.l.b16 %v777
        %v870 = vunpack.c.h.b16 %v777
        %v871 = vunpack.c.l.b16 %v778
        %v872 = vunpack.c.l.b16 %v779
        %v873 = vunpack.c.h.b16 %v779
        %v874 = vunpack.c.l.b16 %v780
        %v875 = vunpack.c.l.b16 %v781
        %v876 = vunpack.c.h.b16 %v781
        %v877 = vunpack.c.l.b16 %v782
        %v878 = vunpack.c.l.b16 %v783
        %v879 = vunpack.c.h.b16 %v783
        %v880 = vunpack.c.l.b16 %v784
        %v881 = vunpack.c.l.b16 %v785
        %v882 = vunpack.c.h.b16 %v785
        %v883 = vunpack.c.l.b16 %v786
        %v884 = vpack.c.b16 %v839, %v836
        %v885 = vpack.c.b16 %v840, %v837
        %v886 = vpack.c.b16 %v841, %v838
        %v887 = vpack.c.b16 %v845, %v842
        %v888 = vpack.c.b16 %v846, %v843
        %v889 = vpack.c.b16 %v847, %v844
        %v890 = vpack.c.b16 %v851, %v848
        %v891 = vpack.c.b16 %v852, %v849
        %v892 = vpack.c.b16 %v853, %v850
        %v893 = vpack.c.b16 %v857, %v854
        %v894 = vpack.c.b16 %v858, %v855
        %v895 = vpack.c.b16 %v859, %v856
        %v896 = vpack.c.b16 %v863, %v860
        %v897 = vpack.c.b16 %v864, %v861
        %v898 = vpack.c.b16 %v865, %v862
        %v899 = vpack.c.b16 %v869, %v866
        %v900 = vpack.c.b16 %v870, %v867
        %v901 = vpack.c.b16 %v871, %v868
        %v902 = vpack.c.b16 %v875, %v872
        %v903 = vpack.c.b16 %v876, %v873
        %v904 = vpack.c.b16 %v877, %v874
        %v905 = vpack.c.b16 %v881, %v878
        %v906 = vpack.c.b16 %v882, %v879
        %v907 = vpack.c.b16 %v883, %v880
        %932 = vmatprep.subr.bf16.mxu0 %v885
        %933 = vmatpush1.bf16.msra.mxu0 %v884
        %934 = vmatprep.subr.bf16.mxu0 %v888
        %935 = vmatpush1.bf16.msra.mxu0 %v887
        %936 = vmatprep.subr.bf16.mxu0 %v891
        %937 = vmatpush1.bf16.msra.mxu0 %v890
        %938 = vmatprep.subr.bf16.mxu0 %v894
        %939 = vmatpush1.bf16.msra.mxu0 %v893
        %940 = vmatprep.subr.bf16.mxu0 %v897
        %941 = vmatpush1.bf16.msra.mxu0 %v896
        %942 = vmatprep.subr.bf16.mxu0 %v900
        %943 = vmatpush1.bf16.msra.mxu0 %v899
        %944 = vmatprep.subr.bf16.mxu0 %v903
        %945 = vmatpush1.bf16.msra.mxu0 %v902
        %946 = vmatprep.subr.bf16.mxu0 %v906
        %947 = vmatpush1.bf16.msra.mxu0 %v905
        %948 = vmatprep.subr.bf16.mxu0 0
        %949 = vmatpush1.bf16.msra.mxu0 0
        %950 = vmatprep.subr.bf16.mxu0 0
        %951 = vmatpush1.bf16.msra.mxu0 0
        %952 = vmatprep.subr.bf16.mxu0 0
        %953 = vmatpush1.bf16.msra.mxu0 0
        %954 = vmatprep.subr.bf16.mxu0 0
        %955 = vmatpush1.bf16.msra.mxu0 0
        %956 = vmatprep.subr.bf16.mxu0 0
        %957 = vmatpush1.bf16.msra.mxu0 0
        %958 = vmatprep.subr.bf16.mxu0 0
        %959 = vmatpush1.bf16.msra.mxu0 0
        %960 = vmatprep.subr.bf16.mxu0 0
        %961 = vmatpush1.bf16.msra.mxu0 0
        %962 = vmatprep.subr.bf16.mxu0 0
        %963 = vmatpush1.bf16.msra.mxu0 0
        %964 = vmatprep.mubr.bf16.mxu0 0
        %965 = vmatmul.mubr.bf16.gmra.mrb[0].mxu0 %v753
        %v966 = vpop.f32.mrb[0].mxu0
        %v967 = vadd.f32 %v792, %v966
        %v968 = vpop.f32.mrb[0].mxu0
        %v969 = vadd.f32 %v796, %v968
        %v970 = vpop.f32.mrb[0].mxu0
        %v971 = vadd.f32 %v792, %v970
        %v972 = vpop.f32.mrb[0].mxu0
        %v973 = vadd.f32 %v796, %v972
        %974 = vmatprep.mubr.bf16.mxu0 0
        %975 = vmatmul.mubr.bf16.gmra.mrb[0].mxu0 %v754
        %v976 = vpop.f32.mrb[0].mxu0
        %v977 = vadd.f32 %v792, %v976
        %v978 = vpop.f32.mrb[0].mxu0
        %v979 = vadd.f32 %v796, %v978
        %v980 = vpop.f32.mrb[0].mxu0
        %v981 = vadd.f32 %v792, %v980
        %v982 = vpop.f32.mrb[0].mxu0
        %v983 = vadd.f32 %v796, %v982
        %984 = vdwg.mxu0
        %985 = vmatprep.subr.bf16.mxu0 0
        %986 = vmatpush1.bf16.msra.mxu0 %v886
        %987 = vmatprep.subr.bf16.mxu0 0
        %988 = vmatpush1.bf16.msra.mxu0 %v889
        %989 = vmatprep.subr.bf16.mxu0 0
        %990 = vmatpush1.bf16.msra.mxu0 %v892
        %991 = vmatprep.subr.bf16.mxu0 0
        %992 = vmatpush1.bf16.msra.mxu0 %v895
        %993 = vmatprep.subr.bf16.mxu0 0
        %994 = vmatpush1.bf16.msra.mxu0 %v898
        %995 = vmatprep.subr.bf16.mxu0 0
        %996 = vmatpush1.bf16.msra.mxu0 %v901
        %997 = vmatprep.subr.bf16.mxu0 0
        %998 = vmatpush1.bf16.msra.mxu0 %v904
        %999 = vmatprep.subr.bf16.mxu0 0
        %1000 = vmatpush1.bf16.msra.mxu0 %v907
        %1001 = vmatprep.subr.bf16.mxu0 0
        %1002 = vmatpush1.bf16.msra.mxu0 0
        %1003 = vmatprep.subr.bf16.mxu0 0
        %1004 = vmatpush1.bf16.msra.mxu0 0
        %1005 = vmatprep.subr.bf16.mxu0 0
        %1006 = vmatpush1.bf16.msra.mxu0 0
        %1007 = vmatprep.subr.bf16.mxu0 0
        %1008 = vmatpush1.bf16.msra.mxu0 0
        %1009 = vmatprep.subr.bf16.mxu0 0
        %1010 = vmatpush1.bf16.msra.mxu0 0
        %1011 = vmatprep.subr.bf16.mxu0 0
        %1012 = vmatpush1.bf16.msra.mxu0 0
        %1013 = vmatprep.subr.bf16.mxu0 0
        %1014 = vmatpush1.bf16.msra.mxu0 0
        %1015 = vmatprep.subr.bf16.mxu0 0
        %1016 = vmatpush1.bf16.msra.mxu0 0
        %1017 = vmatprep.mubr.bf16.mxu0 0
        %1018 = vmatmul.mubr.bf16.gmra.mrb[0].mxu0 %v753
        %v1019 = vpop.f32.mrb[0].mxu0
        %v1020 = vadd.f32 %v800, %v1019
        %v1021 = vpop.f32.mrb[0].mxu0
        %v1022 = vpop.f32.mrb[0].mxu0
        %v1023 = vadd.f32 %v800, %v1022
        %v1024 = vpop.f32.mrb[0].mxu0
        %1025 = vmatprep.mubr.bf16.mxu0 0
        %1026 = vmatmul.mubr.bf16.gmra.mrb[0].mxu0 %v754
        %v1027 = vpop.f32.mrb[0].mxu0
        %v1028 = vadd.f32 %v800, %v1027
        %v1029 = vpop.f32.mrb[0].mxu0
        %v1030 = vpop.f32.mrb[0].mxu0
        %v1031 = vadd.f32 %v800, %v1030
        %v1032 = vpop.f32.mrb[0].mxu0
        %1033 = vdwg.mxu0
        %v1034 = vld [vmem:[#allocation11] sm:$0xf]
        %v1035 = vld [vmem:[#allocation11 + $0x4] sm:$0xf]
        %v1036 = vld [vmem:[#allocation11 + $0x8] sm:$0xf]
        %v1037 = vld [vmem:[#allocation11 + $0xc] sm:$0xf]
        %v1038 = vld [vmem:[#allocation11 + $0x10] sm:$0xf]
        %v1039 = vld [vmem:[#allocation11 + $0x14] sm:$0xf]
        %v1040 = vld [vmem:[#allocation11 + $0x18] sm:$0xf]
        %v1041 = vld [vmem:[#allocation11 + $0x1c] sm:$0xf]
        %v1042 = vld [vmem:[#allocation11 + $0x20] sm:$0xf]
        %v1043 = vld [vmem:[#allocation11 + $0x24] sm:$0xf]
        %v1044 = vld [vmem:[#allocation11 + $0x28] sm:$0xf]
        %v1045 = vld [vmem:[#allocation11 + $0x2c] sm:$0xf]
        %v1046 = vld [vmem:[#allocation11 + $0x30] sm:$0xf]
        %v1047 = vld [vmem:[#allocation11 + $0x34] sm:$0xf]
        %v1048 = vld [vmem:[#allocation11 + $0x38] sm:$0xf]
        %v1049 = vld [vmem:[#allocation11 + $0x3c] sm:$0xf]
        %v1050 = vpack.c.bf16 %v971, %v967
        %v1051 = vpack.c.bf16 %v981, %v977
        %v1052 = vpack.c.bf16 %v973, %v969
        %v1053 = vpack.c.bf16 %v983, %v979
        %vm1054 = vcmask 523264
        %v1056 = vsel %vm1054, %v1050, 0
        %v1059 = vsel %vm1054, %v1051, 0
        %v1062 = vsel %vm1054, %v1052, 0
        %v1065 = vsel %vm1054, %v1053, 0
        %1067 = vmatprep.subr.bf16.mxu0 0
        %1068 = vmatpush1.bf16.xpose.msra.mxu0 %v1062
        %1069 = vmatprep.subr.bf16.mxu0 0
        %1070 = vmatpush1.bf16.xpose.msra.mxu0 %v1065
        %1071 = vmatprep.subr.bf16.mxu0 0
        %1072 = vmatpush1.bf16.xpose.msra.mxu0 0
        %1073 = vmatprep.subr.bf16.mxu0 0
        %1074 = vmatpush1.bf16.xpose.msra.mxu0 0
        %1075 = vmatprep.subr.bf16.mxu0 0
        %1076 = vmatpush1.bf16.xpose.msra.mxu0 0
        %1077 = vmatprep.subr.bf16.mxu0 0
        %1078 = vmatpush1.bf16.xpose.msra.mxu0 0
        %1079 = vmatprep.subr.bf16.mxu0 0
        %1080 = vmatpush1.bf16.xpose.msra.mxu0 0
        %1081 = vmatprep.subr.bf16.mxu0 0
        %1082 = vmatpush1.bf16.xpose.msra.mxu0 0
        %1083 = vmatprep.subr.bf16.mxu0 0
        %1084 = vmatpush1.bf16.xpose.msra.mxu0 0
        %1085 = vmatprep.subr.bf16.mxu0 0
        %1086 = vmatpush1.bf16.xpose.msra.mxu0 0
        %1087 = vmatprep.subr.bf16.mxu0 0
        %1088 = vmatpush1.bf16.xpose.msra.mxu0 0
        %1089 = vmatprep.subr.bf16.mxu0 0
        %1090 = vmatpush1.bf16.xpose.msra.mxu0 0
        %1091 = vmatprep.subr.bf16.mxu0 0
        %1092 = vmatpush1.bf16.xpose.msra.mxu0 0
        %1093 = vmatprep.subr.bf16.mxu0 0
        %1094 = vmatpush1.bf16.xpose.msra.mxu0 0
        %1095 = vmatprep.subr.bf16.mxu0 0
        %1096 = vmatpush1.bf16.xpose.msra.mxu0 0
        %1097 = vmatprep.subr.bf16.mxu0 0
        %1098 = vmatpush1.bf16.xpose.msra.mxu0 0
        %1099 = vmatprep.mubr.bf16.mxu0 0
        %1100 = vmatmul.mubr.bf16.gmra.mrb[0].mxu0 %v1056
        %v1101 = vpop.f32.mrb[0].mxu0
        %v1102 = vadd.f32 0.0, %v1101
        %v1103 = vpop.f32.mrb[0].mxu0
        %v1104 = vpop.f32.mrb[0].mxu0
        %v1105 = vadd.f32 0.0, %v1104
        %v1106 = vpop.f32.mrb[0].mxu0
        %1107 = vmatprep.mubr.bf16.mxu0 0
        %1108 = vmatmul.mubr.bf16.gmra.mrb[0].mxu0 %v1059
        %v1109 = vpop.f32.mrb[0].mxu0
        %v1110 = vadd.f32 0.0, %v1109
        %v1111 = vpop.f32.mrb[0].mxu0
        %v1112 = vpop.f32.mrb[0].mxu0
        %v1113 = vadd.f32 0.0, %v1112
        %v1114 = vpop.f32.mrb[0].mxu0
        %1115 = vdwg.mxu0
        %v1116 = vmul.f32 %v1102, 0.125
        %v1117 = vmul.f32 %v1105, 0.125
        %v1118 = vmul.f32 %v1110, 0.125
        %v1119 = vmul.f32 %v1113, 0.125
        %v1121 = vlaneseq
        %v1122 = vshrl.u32 %v1121, 7
        %v1123 = vsub.s32 0, %v1122
        %v1124 = vrot.slane %v688, %v1123
        %v1126 = vadd.f32 %v1116, %v1124
        %v1127 = vadd.f32 %v1117, %v1124
        %v1128 = vadd.f32 %v1118, %v1124
        %v1129 = vadd.f32 %v1119, %v1124
        %vm1130 = vcmask 261120
        %v1131 = vsel %vm1130, %v1126, -inf
        %1132 = vmax.xlane.f32.xlu0 %v1131
        %v1133 = vpop.xlane.xlu0 %1132
        %v1134 = vsel %vm1130, %v1127, -inf
        %1135 = vmax.xlane.f32.xlu0 %v1134
        %v1136 = vpop.xlane.xlu0 %1135
        %v1137 = vsel %vm1130, %v1128, -inf
        %1138 = vmax.xlane.f32.xlu0 %v1137
        %v1139 = vpop.xlane.xlu0 %1138
        %v1140 = vsel %vm1130, %v1129, -inf
        %1141 = vmax.xlane.f32.xlu0 %v1140
        %v1142 = vpop.xlane.xlu0 %1141
        %v1143 = vsub.f32 %v1126, %v1133
        %v1144 = vsub.f32 %v1127, %v1136
        %v1145 = vsub.f32 %v1128, %v1139
        %v1146 = vsub.f32 %v1129, %v1142
        %v1147 = vmul.f32 %v1143, 1.442695
        %v1148 = vpow.pop %v1147
        %v1149 = vmul.f32 %v1144, 1.442695
        %v1150 = vpow.pop %v1149
        %v1151 = vmul.f32 %v1145, 1.442695
        %v1152 = vpow.pop %v1151
        %v1153 = vmul.f32 %v1146, 1.442695
        %v1154 = vpow.pop %v1153
        %v1155 = vsel %vm1130, %v1148, 0.0
        %1156 = vadd.xlane.f32.xlu0 %v1155
        %v1157 = vpop.xlane.xlu0 %1156
        %v1158 = vsel %vm1130, %v1150, 0.0
        %1159 = vadd.xlane.f32.xlu0 %v1158
        %v1160 = vpop.xlane.xlu0 %1159
        %v1161 = vsel %vm1130, %v1152, 0.0
        %1162 = vadd.xlane.f32.xlu0 %v1161
        %v1163 = vpop.xlane.xlu0 %1162
        %v1164 = vsel %vm1130, %v1154, 0.0
        %1165 = vadd.xlane.f32.xlu0 %v1164
        %v1166 = vpop.xlane.xlu0 %1165
        %v1167 = vrcp.pop %v1157
        %v1168 = vrcp.pop %v1160
        %v1169 = vrcp.pop %v1163
        %v1170 = vrcp.pop %v1166
        %v1171 = vmul.f32 %v1148, %v1167
        %v1172 = vmul.f32 %v1150, %v1168
        %v1173 = vmul.f32 %v1152, %v1169
        %v1174 = vmul.f32 %v1154, %v1170
        %v1175 = vpack.c.bf16 %v1172, %v1171
        %v1176 = vpack.c.bf16 %v1174, %v1173
        %v1177 = vpack.c.bf16 %v1023, %v1020
        %v1178 = vpack.c.bf16 %v1031, %v1028
        %v1180 = vsel %vm1130, %v1175, 0
        %v1183 = vsel %vm1130, %v1176, 0
        %1185 = vmatprep.subr.bf16.mxu0 0
        %1186 = vmatpush1.bf16.msra.mxu0 %v1177
        %1187 = vmatprep.subr.bf16.mxu0 0
        %1188 = vmatpush1.bf16.msra.mxu0 %v1178
        %1189 = vmatprep.subr.bf16.mxu0 0
        %1190 = vmatpush1.bf16.msra.mxu0 0
        %1191 = vmatprep.subr.bf16.mxu0 0
        %1192 = vmatpush1.bf16.msra.mxu0 0
        %1193 = vmatprep.subr.bf16.mxu0 0
        %1194 = vmatpush1.bf16.msra.mxu0 0
        %1195 = vmatprep.subr.bf16.mxu0 0
        %1196 = vmatpush1.bf16.msra.mxu0 0
        %1197 = vmatprep.subr.bf16.mxu0 0
        %1198 = vmatpush1.bf16.msra.mxu0 0
        %1199 = vmatprep.subr.bf16.mxu0 0
        %1200 = vmatpush1.bf16.msra.mxu0 0
        %1201 = vmatprep.subr.bf16.mxu0 0
        %1202 = vmatpush1.bf16.msra.mxu0 0
        %1203 = vmatprep.subr.bf16.mxu0 0
        %1204 = vmatpush1.bf16.msra.mxu0 0
        %1205 = vmatprep.subr.bf16.mxu0 0
        %1206 = vmatpush1.bf16.msra.mxu0 0
        %1207 = vmatprep.subr.bf16.mxu0 0
        %1208 = vmatpush1.bf16.msra.mxu0 0
        %1209 = vmatprep.subr.bf16.mxu0 0
        %1210 = vmatpush1.bf16.msra.mxu0 0
        %1211 = vmatprep.subr.bf16.mxu0 0
        %1212 = vmatpush1.bf16.msra.mxu0 0
        %1213 = vmatprep.subr.bf16.mxu0 0
        %1214 = vmatpush1.bf16.msra.mxu0 0
        %1215 = vmatprep.subr.bf16.mxu0 0
        %1216 = vmatpush1.bf16.msra.mxu0 0
        %1217 = vmatprep.mubr.bf16.mxu0 0
        %1218 = vmatmul.mubr.bf16.gmra.mrb[0].mxu0 %v1180
        %v1219 = vpop.f32.mrb[0].mxu0
        %v1220 = vadd.f32 0.0, %v1219
        %v1221 = vpop.f32.mrb[0].mxu0
        %v1222 = vpop.f32.mrb[0].mxu0
        %v1223 = vadd.f32 0.0, %v1222
        %v1224 = vpop.f32.mrb[0].mxu0
        %1225 = vmatprep.mubr.bf16.mxu0 0
        %1226 = vmatmul.mubr.bf16.gmra.mrb[0].mxu0 %v1183
        %v1227 = vpop.f32.mrb[0].mxu0
        %v1228 = vadd.f32 0.0, %v1227
        %v1229 = vpop.f32.mrb[0].mxu0
        %v1230 = vpop.f32.mrb[0].mxu0
        %v1231 = vadd.f32 0.0, %v1230
        %v1232 = vpop.f32.mrb[0].mxu0
        %1233 = vdwg.mxu0
        %v1234 = vpack.c.bf16 %v1223, %v1220
        %v1235 = vpack.c.bf16 %v1231, %v1228
        %1238 = vrot.lane.b32.xlu0 %v1050, 64
        %v1239 = vpop.permute.xlu0 %1238
        %1240 = vrot.lane.b32.xlu0 %v1051, 64
        %v1241 = vpop.permute.xlu0 %1240
        %1244 = vrot.lane.b32.xlu0 %v1052, 64
        %v1245 = vpop.permute.xlu0 %1244
        %1246 = vrot.lane.b32.xlu0 %v1053, 64
        %v1247 = vpop.permute.xlu0 %1246
        %v1249 = vsel %vm1054, %v1239, 0
        %v1252 = vsel %vm1054, %v1241, 0
        %v1255 = vsel %vm1054, %v1245, 0
        %v1258 = vsel %vm1054, %v1247, 0
        %1260 = vmatprep.subr.bf16.mxu0 0
        %1261 = vmatpush1.bf16.xpose.msra.mxu0 %v1255
        %1262 = vmatprep.subr.bf16.mxu0 0
        %1263 = vmatpush1.bf16.xpose.msra.mxu0 %v1258
        %1264 = vmatprep.subr.bf16.mxu0 0
        %1265 = vmatpush1.bf16.xpose.msra.mxu0 0
        %1266 = vmatprep.subr.bf16.mxu0 0
        %1267 = vmatpush1.bf16.xpose.msra.mxu0 0
        %1268 = vmatprep.subr.bf16.mxu0 0
        %1269 = vmatpush1.bf16.xpose.msra.mxu0 0
        %1270 = vmatprep.subr.bf16.mxu0 0
        %1271 = vmatpush1.bf16.xpose.msra.mxu0 0
        %1272 = vmatprep.subr.bf16.mxu0 0
        %1273 = vmatpush1.bf16.xpose.msra.mxu0 0
        %1274 = vmatprep.subr.bf16.mxu0 0
        %1275 = vmatpush1.bf16.xpose.msra.mxu0 0
        %1276 = vmatprep.subr.bf16.mxu0 0
        %1277 = vmatpush1.bf16.xpose.msra.mxu0 0
        %1278 = vmatprep.subr.bf16.mxu0 0
        %1279 = vmatpush1.bf16.xpose.msra.mxu0 0
        %1280 = vmatprep.subr.bf16.mxu0 0
        %1281 = vmatpush1.bf16.xpose.msra.mxu0 0
        %1282 = vmatprep.subr.bf16.mxu0 0
        %1283 = vmatpush1.bf16.xpose.msra.mxu0 0
        %1284 = vmatprep.subr.bf16.mxu0 0
        %1285 = vmatpush1.bf16.xpose.msra.mxu0 0
        %1286 = vmatprep.subr.bf16.mxu0 0
        %1287 = vmatpush1.bf16.xpose.msra.mxu0 0
        %1288 = vmatprep.subr.bf16.mxu0 0
        %1289 = vmatpush1.bf16.xpose.msra.mxu0 0
        %1290 = vmatprep.subr.bf16.mxu0 0
        %1291 = vmatpush1.bf16.xpose.msra.mxu0 0
        %1292 = vmatprep.mubr.bf16.mxu0 0
        %1293 = vmatmul.mubr.bf16.gmra.mrb[0].mxu0 %v1249
        %v1294 = vpop.f32.mrb[0].mxu0
        %v1295 = vadd.f32 0.0, %v1294
        %v1296 = vpop.f32.mrb[0].mxu0
        %v1297 = vpop.f32.mrb[0].mxu0
        %v1298 = vadd.f32 0.0, %v1297
        %v1299 = vpop.f32.mrb[0].mxu0
        %1300 = vmatprep.mubr.bf16.mxu0 0
        %1301 = vmatmul.mubr.bf16.gmra.mrb[0].mxu0 %v1252
        %v1302 = vpop.f32.mrb[0].mxu0
        %v1303 = vadd.f32 0.0, %v1302
        %v1304 = vpop.f32.mrb[0].mxu0
        %v1305 = vpop.f32.mrb[0].mxu0
        %v1306 = vadd.f32 0.0, %v1305
        %v1307 = vpop.f32.mrb[0].mxu0
        %1308 = vdwg.mxu0
        %v1309 = vmul.f32 %v1295, 0.125
        %v1310 = vmul.f32 %v1298, 0.125
        %v1311 = vmul.f32 %v1303, 0.125
        %v1312 = vmul.f32 %v1306, 0.125
        %v1313 = vadd.f32 %v1309, %v1124
        %v1314 = vadd.f32 %v1310, %v1124
        %v1315 = vadd.f32 %v1311, %v1124
        %v1316 = vadd.f32 %v1312, %v1124
        %v1317 = vsel %vm1130, %v1313, -inf
        %1318 = vmax.xlane.f32.xlu0 %v1317
        %v1319 = vpop.xlane.xlu0 %1318
        %v1320 = vsel %vm1130, %v1314, -inf
        %1321 = vmax.xlane.f32.xlu0 %v1320
        %v1322 = vpop.xlane.xlu0 %1321
        %v1323 = vsel %vm1130, %v1315, -inf
        %1324 = vmax.xlane.f32.xlu0 %v1323
        %v1325 = vpop.xlane.xlu0 %1324
        %v1326 = vsel %vm1130, %v1316, -inf
        %1327 = vmax.xlane.f32.xlu0 %v1326
        %v1328 = vpop.xlane.xlu0 %1327
        %v1329 = vsub.f32 %v1313, %v1319
        %v1330 = vsub.f32 %v1314, %v1322
        %v1331 = vsub.f32 %v1315, %v1325
        %v1332 = vsub.f32 %v1316, %v1328
        %v1333 = vmul.f32 %v1329, 1.442695
        %v1334 = vpow.pop %v1333
        %v1335 = vmul.f32 %v1330, 1.442695
        %v1336 = vpow.pop %v1335
        %v1337 = vmul.f32 %v1331, 1.442695
        %v1338 = vpow.pop %v1337
        %v1339 = vmul.f32 %v1332, 1.442695
        %v1340 = vpow.pop %v1339
        %v1341 = vsel %vm1130, %v1334, 0.0
        %1342 = vadd.xlane.f32.xlu0 %v1341
        %v1343 = vpop.xlane.xlu0 %1342
        %v1344 = vsel %vm1130, %v1336, 0.0
        %1345 = vadd.xlane.f32.xlu0 %v1344
        %v1346 = vpop.xlane.xlu0 %1345
        %v1347 = vsel %vm1130, %v1338, 0.0
        %1348 = vadd.xlane.f32.xlu0 %v1347
        %v1349 = vpop.xlane.xlu0 %1348
        %v1350 = vsel %vm1130, %v1340, 0.0
        %1351 = vadd.xlane.f32.xlu0 %v1350
        %v1352 = vpop.xlane.xlu0 %1351
        %v1353 = vrcp.pop %v1343
        %v1354 = vrcp.pop %v1346
        %v1355 = vrcp.pop %v1349
        %v1356 = vrcp.pop %v1352
        %v1357 = vmul.f32 %v1334, %v1353
        %v1358 = vmul.f32 %v1336, %v1354
        %v1359 = vmul.f32 %v1338, %v1355
        %v1360 = vmul.f32 %v1340, %v1356
        %v1361 = vpack.c.bf16 %v1358, %v1357
        %v1362 = vpack.c.bf16 %v1360, %v1359
        %1365 = vrot.lane.b32.xlu0 %v1177, 64
        %v1366 = vpop.permute.xlu0 %1365
        %1367 = vrot.lane.b32.xlu0 %v1178, 64
        %v1368 = vpop.permute.xlu0 %1367
        %v1372 = vsel %vm1130, %v1361, 0
        %v1375 = vsel %vm1130, %v1362, 0
        %1377 = vmatprep.subr.bf16.mxu0 0
        %1378 = vmatpush1.bf16.msra.mxu0 %v1366
        %1379 = vmatprep.subr.bf16.mxu0 0
        %1380 = vmatpush1.bf16.msra.mxu0 %v1368
        %1381 = vmatprep.subr.bf16.mxu0 0
        %1382 = vmatpush1.bf16.msra.mxu0 0
        %1383 = vmatprep.subr.bf16.mxu0 0
        %1384 = vmatpush1.bf16.msra.mxu0 0
        %1385 = vmatprep.subr.bf16.mxu0 0
        %1386 = vmatpush1.bf16.msra.mxu0 0
        %1387 = vmatprep.subr.bf16.mxu0 0
        %1388 = vmatpush1.bf16.msra.mxu0 0
        %1389 = vmatprep.subr.bf16.mxu0 0
        %1390 = vmatpush1.bf16.msra.mxu0 0
        %1391 = vmatprep.subr.bf16.mxu0 0
        %1392 = vmatpush1.bf16.msra.mxu0 0
        %1393 = vmatprep.subr.bf16.mxu0 0
        %1394 = vmatpush1.bf16.msra.mxu0 0
        %1395 = vmatprep.subr.bf16.mxu0 0
        %1396 = vmatpush1.bf16.msra.mxu0 0
        %1397 = vmatprep.subr.bf16.mxu0 0
        %1398 = vmatpush1.bf16.msra.mxu0 0
        %1399 = vmatprep.subr.bf16.mxu0 0
        %1400 = vmatpush1.bf16.msra.mxu0 0
        %1401 = vmatprep.subr.bf16.mxu0 0
        %1402 = vmatpush1.bf16.msra.mxu0 0
        %1403 = vmatprep.subr.bf16.mxu0 0
        %1404 = vmatpush1.bf16.msra.mxu0 0
        %1405 = vmatprep.subr.bf16.mxu0 0
        %1406 = vmatpush1.bf16.msra.mxu0 0
        %1407 = vmatprep.subr.bf16.mxu0 0
        %1408 = vmatpush1.bf16.msra.mxu0 0
        %1409 = vmatprep.mubr.bf16.mxu0 0
        %1410 = vmatmul.mubr.bf16.gmra.mrb[0].mxu0 %v1372
        %v1411 = vpop.f32.mrb[0].mxu0
        %v1412 = vadd.f32 0.0, %v1411
        %v1413 = vpop.f32.mrb[0].mxu0
        %v1414 = vpop.f32.mrb[0].mxu0
        %v1415 = vadd.f32 0.0, %v1414
        %v1416 = vpop.f32.mrb[0].mxu0
        %1417 = vmatprep.mubr.bf16.mxu0 0
        %1418 = vmatmul.mubr.bf16.gmra.mrb[0].mxu0 %v1375
        %v1419 = vpop.f32.mrb[0].mxu0
        %v1420 = vadd.f32 0.0, %v1419
        %v1421 = vpop.f32.mrb[0].mxu0
        %v1422 = vpop.f32.mrb[0].mxu0
        %v1423 = vadd.f32 0.0, %v1422
        %v1424 = vpop.f32.mrb[0].mxu0
        %1425 = vdwg.mxu0
        %v1426 = vpack.c.bf16 %v1415, %v1412
        %v1427 = vpack.c.bf16 %v1423, %v1420
        %v1436 = vunpack.c.l.b16 %v1042
        %v1437 = vunpack.c.l.b16 %v1043
        %v1438 = vunpack.c.l.b16 %v1044
        %v1439 = vunpack.c.l.b16 %v1045
        %v1440 = vunpack.c.l.b16 %v1046
        %v1441 = vunpack.c.l.b16 %v1047
        %v1442 = vunpack.c.l.b16 %v1048
        %v1443 = vunpack.c.l.b16 %v1049
        %v1444 = vpack.c.b16 %v1437, %v1436
        %v1445 = vpack.c.b16 %v1439, %v1438
        %v1446 = vpack.c.b16 %v1441, %v1440
        %v1447 = vpack.c.b16 %v1443, %v1442
        %v1453 = vsel %vm1054, %v1426, 0
        %v1456 = vsel %vm1054, %v1427, 0
        %1458 = vmatprep.subr.bf16.mxu0 0
        %1459 = vmatpush1.bf16.msra.mxu0 %v1444
        %1460 = vmatprep.subr.bf16.mxu0 0
        %1461 = vmatpush1.bf16.msra.mxu0 %v1445
        %1462 = vmatprep.subr.bf16.mxu0 0
        %1463 = vmatpush1.bf16.msra.mxu0 %v1446
        %1464 = vmatprep.subr.bf16.mxu0 0
        %1465 = vmatpush1.bf16.msra.mxu0 %v1447
        %1466 = vmatprep.subr.bf16.mxu0 0
        %1467 = vmatpush1.bf16.msra.mxu0 0
        %1468 = vmatprep.subr.bf16.mxu0 0
        %1469 = vmatpush1.bf16.msra.mxu0 0
        %1470 = vmatprep.subr.bf16.mxu0 0
        %1471 = vmatpush1.bf16.msra.mxu0 0
        %1472 = vmatprep.subr.bf16.mxu0 0
        %1473 = vmatpush1.bf16.msra.mxu0 0
        %1474 = vmatprep.subr.bf16.mxu0 0
        %1475 = vmatpush1.bf16.msra.mxu0 0
        %1476 = vmatprep.subr.bf16.mxu0 0
        %1477 = vmatpush1.bf16.msra.mxu0 0
        %1478 = vmatprep.subr.bf16.mxu0 0
        %1479 = vmatpush1.bf16.msra.mxu0 0
        %1480 = vmatprep.subr.bf16.mxu0 0
        %1481 = vmatpush1.bf16.msra.mxu0 0
        %1482 = vmatprep.subr.bf16.mxu0 0
        %1483 = vmatpush1.bf16.msra.mxu0 0
        %1484 = vmatprep.subr.bf16.mxu0 0
        %1485 = vmatpush1.bf16.msra.mxu0 0
        %1486 = vmatprep.subr.bf16.mxu0 0
        %1487 = vmatpush1.bf16.msra.mxu0 0
        %1488 = vmatprep.subr.bf16.mxu0 0
        %1489 = vmatpush1.bf16.msra.mxu0 0
        %1490 = vmatprep.mubr.bf16.mxu0 0
        %1491 = vmatmul.mubr.bf16.gmra.mrb[0].mxu0 %v1453
        %v1492 = vpop.f32.mrb[0].mxu0
        %v1493 = vadd.f32 0.0, %v1492
        %v1494 = vpop.f32.mrb[0].mxu0
        %v1495 = vpop.f32.mrb[0].mxu0
        %v1496 = vadd.f32 0.0, %v1495
        %v1497 = vpop.f32.mrb[0].mxu0
        %1498 = vmatprep.mubr.bf16.mxu0 0
        %1499 = vmatmul.mubr.bf16.gmra.mrb[0].mxu0 %v1456
        %v1500 = vpop.f32.mrb[0].mxu0
        %v1501 = vadd.f32 0.0, %v1500
        %v1502 = vpop.f32.mrb[0].mxu0
        %v1503 = vpop.f32.mrb[0].mxu0
        %v1504 = vadd.f32 0.0, %v1503
        %v1505 = vpop.f32.mrb[0].mxu0
        %1506 = vdwg.mxu0
        %v1515 = vunpack.c.l.b16 %v1034
        %v1516 = vunpack.c.l.b16 %v1035
        %v1517 = vunpack.c.l.b16 %v1036
        %v1518 = vunpack.c.l.b16 %v1037
        %v1519 = vunpack.c.l.b16 %v1038
        %v1520 = vunpack.c.l.b16 %v1039
        %v1521 = vunpack.c.l.b16 %v1040
        %v1522 = vunpack.c.l.b16 %v1041
        %v1523 = vpack.c.b16 %v1516, %v1515
        %v1524 = vpack.c.b16 %v1518, %v1517
        %v1525 = vpack.c.b16 %v1520, %v1519
        %v1526 = vpack.c.b16 %v1522, %v1521
        %v1532 = vsel %vm1054, %v1234, 0
        %v1535 = vsel %vm1054, %v1235, 0
        %1537 = vmatprep.subr.bf16.mxu0 0
        %1538 = vmatpush1.bf16.msra.mxu0 %v1523
        %1539 = vmatprep.subr.bf16.mxu0 0
        %1540 = vmatpush1.bf16.msra.mxu0 %v1524
        %1541 = vmatprep.subr.bf16.mxu0 0
        %1542 = vmatpush1.bf16.msra.mxu0 %v1525
        %1543 = vmatprep.subr.bf16.mxu0 0
        %1544 = vmatpush1.bf16.msra.mxu0 %v1526
        %1545 = vmatprep.subr.bf16.mxu0 0
        %1546 = vmatpush1.bf16.msra.mxu0 0
        %1547 = vmatprep.subr.bf16.mxu0 0
        %1548 = vmatpush1.bf16.msra.mxu0 0
        %1549 = vmatprep.subr.bf16.mxu0 0
        %1550 = vmatpush1.bf16.msra.mxu0 0
        %1551 = vmatprep.subr.bf16.mxu0 0
        %1552 = vmatpush1.bf16.msra.mxu0 0
        %1553 = vmatprep.subr.bf16.mxu0 0
        %1554 = vmatpush1.bf16.msra.mxu0 0
        %1555 = vmatprep.subr.bf16.mxu0 0
        %1556 = vmatpush1.bf16.msra.mxu0 0
        %1557 = vmatprep.subr.bf16.mxu0 0
        %1558 = vmatpush1.bf16.msra.mxu0 0
        %1559 = vmatprep.subr.bf16.mxu0 0
        %1560 = vmatpush1.bf16.msra.mxu0 0
        %1561 = vmatprep.subr.bf16.mxu0 0
        %1562 = vmatpush1.bf16.msra.mxu0 0
        %1563 = vmatprep.subr.bf16.mxu0 0
        %1564 = vmatpush1.bf16.msra.mxu0 0
        %1565 = vmatprep.subr.bf16.mxu0 0
        %1566 = vmatpush1.bf16.msra.mxu0 0
        %1567 = vmatprep.subr.bf16.mxu0 0
        %1568 = vmatpush1.bf16.msra.mxu0 0
        %1569 = vmatprep.mubr.bf16.mxu0 0
        %1570 = vmatmul.mubr.bf16.gmra.mrb[0].mxu0 %v1532
        %v1571 = vpop.f32.mrb[0].mxu0
        %v1572 = vadd.f32 %v1493, %v1571
        %v1573 = vpop.f32.mrb[0].mxu0
        %v1574 = vpop.f32.mrb[0].mxu0
        %v1575 = vadd.f32 %v1496, %v1574
        %v1576 = vpop.f32.mrb[0].mxu0
        %1577 = vmatprep.mubr.bf16.mxu0 0
        %1578 = vmatmul.mubr.bf16.gmra.mrb[0].mxu0 %v1535
        %v1579 = vpop.f32.mrb[0].mxu0
        %v1580 = vadd.f32 %v1501, %v1579
        %v1581 = vpop.f32.mrb[0].mxu0
        %v1582 = vpop.f32.mrb[0].mxu0
        %v1583 = vadd.f32 %v1504, %v1582
        %v1584 = vpop.f32.mrb[0].mxu0
        %1585 = vdwg.mxu0
        %v1586 = vadd.f32 %v684, %v1572
        %v1587 = vadd.f32 %v685, %v1575
        %v1588 = vadd.f32 %v686, %v1580
        %v1589 = vadd.f32 %v687, %v1583
        %v1590 = vld [vmem:[%s7] sm:$0x1]
        %v1592 = vlaneseq
        %v1593 = vshrl.u32 %v1592, 7
        %v1594 = vsub.s32 0, %v1593
        %v1595 = vrot.slane %v1590, %v1594
        %v1597 = vadd.f32 %v1586, %v1595
        %v1598 = vadd.f32 %v1587, %v1595
        %v1599 = vadd.f32 %v1588, %v1595
        %v1600 = vadd.f32 %v1589, %v1595
        %1601 = vadd.xlane.f32.xlu0 %v1597
        %v1602 = vpop.xlane.xlu0 %1601
        %1603 = vadd.xlane.f32.xlu0 %v1598
        %v1604 = vpop.xlane.xlu0 %1603
        %1605 = vadd.xlane.f32.xlu0 %v1599
        %v1606 = vpop.xlane.xlu0 %1605
        %1607 = vadd.xlane.f32.xlu0 %v1600
        %v1608 = vpop.xlane.xlu0 %1607
        %v1609 = vmul.f32 %v1602, %v700
        %v1610 = vmul.f32 %v1604, %v700
        %v1611 = vmul.f32 %v1606, %v700
        %v1612 = vmul.f32 %v1608, %v700
        %v1613 = vsub.f32 %v1597, %v1609
        %v1614 = vsub.f32 %v1598, %v1610
        %v1615 = vsub.f32 %v1599, %v1611
        %v1616 = vsub.f32 %v1600, %v1612
        %v1617 = vmul.f32 %v1613, %v1613
        %v1618 = vmul.f32 %v1614, %v1614
        %v1619 = vmul.f32 %v1615, %v1615
        %v1620 = vmul.f32 %v1616, %v1616
        %1621 = vadd.xlane.f32.xlu0 %v1617
        %v1622 = vpop.xlane.xlu0 %1621
        %1623 = vadd.xlane.f32.xlu0 %v1618
        %v1624 = vpop.xlane.xlu0 %1623
        %1625 = vadd.xlane.f32.xlu0 %v1619
        %v1626 = vpop.xlane.xlu0 %1625
        %1627 = vadd.xlane.f32.xlu0 %v1620
        %v1628 = vpop.xlane.xlu0 %1627
        %v1629 = vmul.f32 %v1622, %v700
        %v1630 = vmul.f32 %v1624, %v700
        %v1631 = vmul.f32 %v1626, %v700
        %v1632 = vmul.f32 %v1628, %v700
        %v1633 = vadd.f32 %v1629, 1e-05
        %v1634 = vadd.f32 %v1630, 1e-05
        %v1635 = vadd.f32 %v1631, 1e-05
        %v1636 = vadd.f32 %v1632, 1e-05
        %v1637 = vrsqrt.pop %v1633
        %v1638 = vrsqrt.pop %v1634
        %v1639 = vrsqrt.pop %v1635
        %v1640 = vrsqrt.pop %v1636
        %v1641 = vmul.f32 %v1613, %v1637
        %v1642 = vmul.f32 %v1614, %v1638
        %v1643 = vmul.f32 %v1615, %v1639
        %v1644 = vmul.f32 %v1616, %v1640
        %v1645 = vlaneseq
        %v1646 = vshrl.u32 %v1645, 7
        %v1647 = vsub.s32 2, %v1646
        %v1648 = vrot.slane %v691, %v1647
        %v1649 = vmul.f32 %v1641, %v1648
        %v1650 = vmul.f32 %v1642, %v1648
        %v1651 = vmul.f32 %v1643, %v1648
        %v1652 = vmul.f32 %v1644, %v1648
        %v1653 = vlaneseq
        %v1654 = vshrl.u32 %v1653, 7
        %v1655 = vsub.s32 3, %v1654
        %v1656 = vrot.slane %v691, %v1655
        %v1657 = vadd.f32 %v1649, %v1656
        %v1658 = vadd.f32 %v1650, %v1656
        %v1659 = vadd.f32 %v1651, %v1656
        %v1660 = vadd.f32 %v1652, %v1656
        %v1661 = vpack.c.bf16 %v1658, %v1657
        %v1662 = vpack.c.bf16 %v1660, %v1659
        %v1663 = vld [vmem:[#allocation13] sm:$0xff]
        %v1664 = vld [vmem:[#allocation13 + $0x8] sm:$0xff]
        %v1665 = vld [vmem:[#allocation13 + $0x10] sm:$0xff]
        %v1666 = vld [vmem:[#allocation13 + $0x18] sm:$0xff]
        %v1667 = vld [vmem:[#allocation13 + $0x20] sm:$0xff]
        %v1668 = vld [vmem:[#allocation13 + $0x28] sm:$0xff]
        %v1669 = vld [vmem:[#allocation13 + $0x30] sm:$0xff]
        %v1670 = vld [vmem:[#allocation13 + $0x38] sm:$0xff]
        %v1671 = vld [vmem:[#allocation13 + $0x40] sm:$0xff]
        %v1672 = vld [vmem:[#allocation13 + $0x48] sm:$0xff]
        %v1673 = vld [vmem:[#allocation13 + $0x50] sm:$0xff]
        %v1674 = vld [vmem:[#allocation13 + $0x58] sm:$0xff]
        %v1675 = vld [vmem:[#allocation13 + $0x60] sm:$0xff]
        %v1676 = vld [vmem:[#allocation13 + $0x68] sm:$0xff]
        %v1677 = vld [vmem:[#allocation13 + $0x70] sm:$0xff]
        %v1678 = vld [vmem:[#allocation13 + $0x78] sm:$0xff]
        %v1679 = vld [vmem:[%s10] sm:$0x3]
        %v1681 = vlaneseq
        %v1682 = vshrl.u32 %v1681, 7
        %v1683 = vsub.s32 0, %v1682
        %v1684 = vrot.slane %v1679, %v1683
        %v1685 = vlaneseq
        %v1686 = vshrl.u32 %v1685, 7
        %v1687 = vsub.s32 1, %v1686
        %v1688 = vrot.slane %v1679, %v1687
        %v1707 = vunpack.c.l.b16 %v1663
        %v1708 = vunpack.c.h.b16 %v1663
        %v1709 = vunpack.c.l.b16 %v1664
        %v1710 = vunpack.c.h.b16 %v1664
        %v1711 = vunpack.c.l.b16 %v1665
        %v1712 = vunpack.c.h.b16 %v1665
        %v1713 = vunpack.c.l.b16 %v1666
        %v1714 = vunpack.c.h.b16 %v1666
        %v1715 = vunpack.c.l.b16 %v1667
        %v1716 = vunpack.c.h.b16 %v1667
        %v1717 = vunpack.c.l.b16 %v1668
        %v1718 = vunpack.c.h.b16 %v1668
        %v1719 = vunpack.c.l.b16 %v1669
        %v1720 = vunpack.c.h.b16 %v1669
        %v1721 = vunpack.c.l.b16 %v1670
        %v1722 = vunpack.c.h.b16 %v1670
        %v1723 = vunpack.c.l.b16 %v1671
        %v1724 = vunpack.c.h.b16 %v1671
        %v1725 = vunpack.c.l.b16 %v1672
        %v1726 = vunpack.c.h.b16 %v1672
        %v1727 = vunpack.c.l.b16 %v1673
        %v1728 = vunpack.c.h.b16 %v1673
        %v1729 = vunpack.c.l.b16 %v1674
        %v1730 = vunpack.c.h.b16 %v1674
        %v1731 = vunpack.c.l.b16 %v1675
        %v1732 = vunpack.c.h.b16 %v1675
        %v1733 = vunpack.c.l.b16 %v1676
        %v1734 = vunpack.c.h.b16 %v1676
        %v1735 = vunpack.c.l.b16 %v1677
        %v1736 = vunpack.c.h.b16 %v1677
        %v1737 = vunpack.c.l.b16 %v1678
        %v1738 = vunpack.c.h.b16 %v1678
        %v1739 = vpack.c.b16 %v1709, %v1707
        %v1740 = vpack.c.b16 %v1710, %v1708
        %v1741 = vpack.c.b16 %v1713, %v1711
        %v1742 = vpack.c.b16 %v1714, %v1712
        %v1743 = vpack.c.b16 %v1717, %v1715
        %v1744 = vpack.c.b16 %v1718, %v1716
        %v1745 = vpack.c.b16 %v1721, %v1719
        %v1746 = vpack.c.b16 %v1722, %v1720
        %v1747 = vpack.c.b16 %v1725, %v1723
        %v1748 = vpack.c.b16 %v1726, %v1724
        %v1749 = vpack.c.b16 %v1729, %v1727
        %v1750 = vpack.c.b16 %v1730, %v1728
        %v1751 = vpack.c.b16 %v1733, %v1731
        %v1752 = vpack.c.b16 %v1734, %v1732
        %v1753 = vpack.c.b16 %v1737, %v1735
        %v1754 = vpack.c.b16 %v1738, %v1736
        %1771 = vmatprep.subr.bf16.mxu0 %v1740
        %1772 = vmatpush1.bf16.msra.mxu0 %v1739
        %1773 = vmatprep.subr.bf16.mxu0 %v1742
        %1774 = vmatpush1.bf16.msra.mxu0 %v1741
        %1775 = vmatprep.subr.bf16.mxu0 %v1744
        %1776 = vmatpush1.bf16.msra.mxu0 %v1743
        %1777 = vmatprep.subr.bf16.mxu0 %v1746
        %1778 = vmatpush1.bf16.msra.mxu0 %v1745
        %1779 = vmatprep.subr.bf16.mxu0 %v1748
        %1780 = vmatpush1.bf16.msra.mxu0 %v1747
        %1781 = vmatprep.subr.bf16.mxu0 %v1750
        %1782 = vmatpush1.bf16.msra.mxu0 %v1749
        %1783 = vmatprep.subr.bf16.mxu0 %v1752
        %1784 = vmatpush1.bf16.msra.mxu0 %v1751
        %1785 = vmatprep.subr.bf16.mxu0 %v1754
        %1786 = vmatpush1.bf16.msra.mxu0 %v1753
        %1787 = vmatprep.subr.bf16.mxu0 0
        %1788 = vmatpush1.bf16.msra.mxu0 0
        %1789 = vmatprep.subr.bf16.mxu0 0
        %1790 = vmatpush1.bf16.msra.mxu0 0
        %1791 = vmatprep.subr.bf16.mxu0 0
        %1792 = vmatpush1.bf16.msra.mxu0 0
        %1793 = vmatprep.subr.bf16.mxu0 0
        %1794 = vmatpush1.bf16.msra.mxu0 0
        %1795 = vmatprep.subr.bf16.mxu0 0
        %1796 = vmatpush1.bf16.msra.mxu0 0
        %1797 = vmatprep.subr.bf16.mxu0 0
        %1798 = vmatpush1.bf16.msra.mxu0 0
        %1799 = vmatprep.subr.bf16.mxu0 0
        %1800 = vmatpush1.bf16.msra.mxu0 0
        %1801 = vmatprep.subr.bf16.mxu0 0
        %1802 = vmatpush1.bf16.msra.mxu0 0
        %1803 = vmatprep.mubr.bf16.mxu0 0
        %1804 = vmatmul.mubr.bf16.gmra.mrb[0].mxu0 %v1661
        %v1805 = vpop.f32.mrb[0].mxu0
        %v1806 = vadd.f32 %v1684, %v1805
        %v1807 = vpop.f32.mrb[0].mxu0
        %v1808 = vadd.f32 %v1688, %v1807
        %v1809 = vpop.f32.mrb[0].mxu0
        %v1810 = vadd.f32 %v1684, %v1809
        %v1811 = vpop.f32.mrb[0].mxu0
        %v1812 = vadd.f32 %v1688, %v1811
        %1813 = vmatprep.mubr.bf16.mxu0 0
        %1814 = vmatmul.mubr.bf16.gmra.mrb[0].mxu0 %v1662
        %v1815 = vpop.f32.mrb[0].mxu0
        %v1816 = vadd.f32 %v1684, %v1815
        %v1817 = vpop.f32.mrb[0].mxu0
        %v1818 = vadd.f32 %v1688, %v1817
        %v1819 = vpop.f32.mrb[0].mxu0
        %v1820 = vadd.f32 %v1684, %v1819
        %v1821 = vpop.f32.mrb[0].mxu0
        %v1822 = vadd.f32 %v1688, %v1821
        %1823 = vdwg.mxu0
        %v1824 = vmax.f32 %v1806, 0.0
        %v1825 = vmax.f32 %v1808, 0.0
        %v1826 = vmax.f32 %v1810, 0.0
        %v1827 = vmax.f32 %v1812, 0.0
        %v1828 = vmax.f32 %v1816, 0.0
        %v1829 = vmax.f32 %v1818, 0.0
        %v1830 = vmax.f32 %v1820, 0.0
        %v1831 = vmax.f32 %v1822, 0.0
        %v1832 = vpack.c.bf16 %v1826, %v1824
        %v1833 = vpack.c.bf16 %v1827, %v1825
        %v1834 = vpack.c.bf16 %v1830, %v1828
        %v1835 = vpack.c.bf16 %v1831, %v1829
        %v1836 = vld [vmem:[#allocation14] sm:$0xf]
        %v1837 = vld [vmem:[#allocation14 + $0x4] sm:$0xf]
        %v1838 = vld [vmem:[#allocation14 + $0x8] sm:$0xf]
        %v1839 = vld [vmem:[#allocation14 + $0xc] sm:$0xf]
        %v1840 = vld [vmem:[#allocation14 + $0x10] sm:$0xf]
        %v1841 = vld [vmem:[#allocation14 + $0x14] sm:$0xf]
        %v1842 = vld [vmem:[#allocation14 + $0x18] sm:$0xf]
        %v1843 = vld [vmem:[#allocation14 + $0x1c] sm:$0xf]
        %v1844 = vld [vmem:[#allocation14 + $0x20] sm:$0xf]
        %v1845 = vld [vmem:[#allocation14 + $0x24] sm:$0xf]
        %v1846 = vld [vmem:[#allocation14 + $0x28] sm:$0xf]
        %v1847 = vld [vmem:[#allocation14 + $0x2c] sm:$0xf]
        %v1848 = vld [vmem:[#allocation14 + $0x30] sm:$0xf]
        %v1849 = vld [vmem:[#allocation14 + $0x34] sm:$0xf]
        %v1850 = vld [vmem:[#allocation14 + $0x38] sm:$0xf]
        %v1851 = vld [vmem:[#allocation14 + $0x3c] sm:$0xf]
        %v1852 = vld [vmem:[#allocation14 + $0x40] sm:$0xf]
        %v1853 = vld [vmem:[#allocation14 + $0x44] sm:$0xf]
        %v1854 = vld [vmem:[#allocation14 + $0x48] sm:$0xf]
        %v1855 = vld [vmem:[#allocation14 + $0x4c] sm:$0xf]
        %v1856 = vld [vmem:[#allocation14 + $0x50] sm:$0xf]
        %v1857 = vld [vmem:[#allocation14 + $0x54] sm:$0xf]
        %v1858 = vld [vmem:[#allocation14 + $0x58] sm:$0xf]
        %v1859 = vld [vmem:[#allocation14 + $0x5c] sm:$0xf]
        %v1860 = vld [vmem:[#allocation14 + $0x60] sm:$0xf]
        %v1861 = vld [vmem:[#allocation14 + $0x64] sm:$0xf]
        %v1862 = vld [vmem:[#allocation14 + $0x68] sm:$0xf]
        %v1863 = vld [vmem:[#allocation14 + $0x6c] sm:$0xf]
        %v1864 = vld [vmem:[#allocation14 + $0x70] sm:$0xf]
        %v1865 = vld [vmem:[#allocation14 + $0x74] sm:$0xf]
        %v1866 = vld [vmem:[#allocation14 + $0x78] sm:$0xf]
        %v1867 = vld [vmem:[#allocation14 + $0x7c] sm:$0xf]
        %v1868 = vld [vmem:[%s12] sm:$0x1]
        %v1870 = vlaneseq
        %v1871 = vshrl.u32 %v1870, 7
        %v1872 = vsub.s32 0, %v1871
        %v1873 = vrot.slane %v1868, %v1872
        %v1907 = vunpack.c.l.b16 %v1836
        %v1908 = vunpack.c.l.b16 %v1837
        %v1909 = vunpack.c.l.b16 %v1838
        %v1910 = vunpack.c.l.b16 %v1839
        %v1911 = vunpack.c.l.b16 %v1840
        %v1912 = vunpack.c.l.b16 %v1841
        %v1913 = vunpack.c.l.b16 %v1842
        %v1914 = vunpack.c.l.b16 %v1843
        %v1915 = vunpack.c.l.b16 %v1844
        %v1916 = vunpack.c.l.b16 %v1845
        %v1917 = vunpack.c.l.b16 %v1846
        %v1918 = vunpack.c.l.b16 %v1847
        %v1919 = vunpack.c.l.b16 %v1848
        %v1920 = vunpack.c.l.b16 %v1849
        %v1921 = vunpack.c.l.b16 %v1850
        %v1922 = vunpack.c.l.b16 %v1851
        %v1923 = vunpack.c.l.b16 %v1852
        %v1924 = vunpack.c.l.b16 %v1853
        %v1925 = vunpack.c.l.b16 %v1854
        %v1926 = vunpack.c.l.b16 %v1855
        %v1927 = vunpack.c.l.b16 %v1856
        %v1928 = vunpack.c.l.b16 %v1857
        %v1929 = vunpack.c.l.b16 %v1858
        %v1930 = vunpack.c.l.b16 %v1859
        %v1931 = vunpack.c.l.b16 %v1860
        %v1932 = vunpack.c.l.b16 %v1861
        %v1933 = vunpack.c.l.b16 %v1862
        %v1934 = vunpack.c.l.b16 %v1863
        %v1935 = vunpack.c.l.b16 %v1864
        %v1936 = vunpack.c.l.b16 %v1865
        %v1937 = vunpack.c.l.b16 %v1866
        %v1938 = vunpack.c.l.b16 %v1867
        %v1939 = vpack.c.b16 %v1908, %v1907
        %v1940 = vpack.c.b16 %v1910, %v1909
        %v1941 = vpack.c.b16 %v1912, %v1911
        %v1942 = vpack.c.b16 %v1914, %v1913
        %v1943 = vpack.c.b16 %v1916, %v1915
        %v1944 = vpack.c.b16 %v1918, %v1917
        %v1945 = vpack.c.b16 %v1920, %v1919
        %v1946 = vpack.c.b16 %v1922, %v1921
        %v1947 = vpack.c.b16 %v1924, %v1923
        %v1948 = vpack.c.b16 %v1926, %v1925
        %v1949 = vpack.c.b16 %v1928, %v1927
        %v1950 = vpack.c.b16 %v1930, %v1929
        %v1951 = vpack.c.b16 %v1932, %v1931
        %v1952 = vpack.c.b16 %v1934, %v1933
        %v1953 = vpack.c.b16 %v1936, %v1935
        %v1954 = vpack.c.b16 %v1938, %v1937
        %1971 = vmatprep.subr.bf16.mxu0 0
        %1972 = vmatpush1.bf16.msra.mxu0 %v1939
        %1973 = vmatprep.subr.bf16.mxu0 0
        %1974 = vmatpush1.bf16.msra.mxu0 %v1940
        %1975 = vmatprep.subr.bf16.mxu0 0
        %1976 = vmatpush1.bf16.msra.mxu0 %v1941
        %1977 = vmatprep.subr.bf16.mxu0 0
        %1978 = vmatpush1.bf16.msra.mxu0 %v1942
        %1979 = vmatprep.subr.bf16.mxu0 0
        %1980 = vmatpush1.bf16.msra.mxu0 %v1943
        %1981 = vmatprep.subr.bf16.mxu0 0
        %1982 = vmatpush1.bf16.msra.mxu0 %v1944
        %1983 = vmatprep.subr.bf16.mxu0 0
        %1984 = vmatpush1.bf16.msra.mxu0 %v1945
        %1985 = vmatprep.subr.bf16.mxu0 0
        %1986 = vmatpush1.bf16.msra.mxu0 %v1946
        %1987 = vmatprep.subr.bf16.mxu0 0
        %1988 = vmatpush1.bf16.msra.mxu0 %v1947
        %1989 = vmatprep.subr.bf16.mxu0 0
        %1990 = vmatpush1.bf16.msra.mxu0 %v1948
        %1991 = vmatprep.subr.bf16.mxu0 0
        %1992 = vmatpush1.bf16.msra.mxu0 %v1949
        %1993 = vmatprep.subr.bf16.mxu0 0
        %1994 = vmatpush1.bf16.msra.mxu0 %v1950
        %1995 = vmatprep.subr.bf16.mxu0 0
        %1996 = vmatpush1.bf16.msra.mxu0 %v1951
        %1997 = vmatprep.subr.bf16.mxu0 0
        %1998 = vmatpush1.bf16.msra.mxu0 %v1952
        %1999 = vmatprep.subr.bf16.mxu0 0
        %2000 = vmatpush1.bf16.msra.mxu0 %v1953
        %2001 = vmatprep.subr.bf16.mxu0 0
        %2002 = vmatpush1.bf16.msra.mxu0 %v1954
        %2003 = vmatprep.mubr.bf16.mxu0 %v1833
        %2004 = vmatmul.mubr.bf16.gmra.mrb[0].mxu0 %v1832
        %v2005 = vpop.f32.mrb[0].mxu0
        %v2006 = vadd.f32 %v1873, %v2005
        %v2007 = vpop.f32.mrb[0].mxu0
        %v2008 = vpop.f32.mrb[0].mxu0
        %v2009 = vadd.f32 %v1873, %v2008
        %v2010 = vpop.f32.mrb[0].mxu0
        %2011 = vmatprep.mubr.bf16.mxu0 %v1835
        %2012 = vmatmul.mubr.bf16.gmra.mrb[0].mxu0 %v1834
        %v2013 = vpop.f32.mrb[0].mxu0
        %v2014 = vadd.f32 %v1873, %v2013
        %v2015 = vpop.f32.mrb[0].mxu0
        %v2016 = vpop.f32.mrb[0].mxu0
        %v2017 = vadd.f32 %v1873, %v2016
        %v2018 = vpop.f32.mrb[0].mxu0
        %2019 = vdwg.mxu0
        %v2020 = vadd.f32 %v1597, %v2006
        %v2021 = vadd.f32 %v1598, %v2009
        %v2022 = vadd.f32 %v1599, %v2014
        %v2023 = vadd.f32 %v1600, %v2017
        %s2024 = scalar_lea.vmem %s8, 4
        %v2025 = vld [vmem:[%s2024] sm:$0xf]
        %2026 = vadd.xlane.f32.xlu0 %v2020
        %v2027 = vpop.xlane.xlu0 %2026
        %2028 = vadd.xlane.f32.xlu0 %v2021
        %v2029 = vpop.xlane.xlu0 %2028
        %2030 = vadd.xlane.f32.xlu0 %v2022
        %v2031 = vpop.xlane.xlu0 %2030
        %2032 = vadd.xlane.f32.xlu0 %v2023
        %v2033 = vpop.xlane.xlu0 %2032
        %v2034 = vmul.f32 %v2027, %v700
        %v2035 = vmul.f32 %v2029, %v700
        %v2036 = vmul.f32 %v2031, %v700
        %v2037 = vmul.f32 %v2033, %v700
        %v2038 = vsub.f32 %v2020, %v2034
        %v2039 = vsub.f32 %v2021, %v2035
        %v2040 = vsub.f32 %v2022, %v2036
        %v2041 = vsub.f32 %v2023, %v2037
        %v2042 = vmul.f32 %v2038, %v2038
        %v2043 = vmul.f32 %v2039, %v2039
        %v2044 = vmul.f32 %v2040, %v2040
        %v2045 = vmul.f32 %v2041, %v2041
        %2046 = vadd.xlane.f32.xlu0 %v2042
        %v2047 = vpop.xlane.xlu0 %2046
        %2048 = vadd.xlane.f32.xlu0 %v2043
        %v2049 = vpop.xlane.xlu0 %2048
        %2050 = vadd.xlane.f32.xlu0 %v2044
        %v2051 = vpop.xlane.xlu0 %2050
        %2052 = vadd.xlane.f32.xlu0 %v2045
        %v2053 = vpop.xlane.xlu0 %2052
        %v2054 = vmul.f32 %v2047, %v700
        %v2055 = vmul.f32 %v2049, %v700
        %v2056 = vmul.f32 %v2051, %v700
        %v2057 = vmul.f32 %v2053, %v700
        %v2058 = vadd.f32 %v2054, 1e-05
        %v2059 = vadd.f32 %v2055, 1e-05
        %v2060 = vadd.f32 %v2056, 1e-05
        %v2061 = vadd.f32 %v2057, 1e-05
        %v2062 = vrsqrt.pop %v2058
        %v2063 = vrsqrt.pop %v2059
        %v2064 = vrsqrt.pop %v2060
        %v2065 = vrsqrt.pop %v2061
        %v2066 = vmul.f32 %v2038, %v2062
        %v2067 = vmul.f32 %v2039, %v2063
        %v2068 = vmul.f32 %v2040, %v2064
        %v2069 = vmul.f32 %v2041, %v2065
        %v2070 = vlaneseq
        %v2071 = vshrl.u32 %v2070, 7
        %v2072 = vsub.s32 0, %v2071
        %v2073 = vrot.slane %v2025, %v2072
        %v2074 = vmul.f32 %v2066, %v2073
        %v2075 = vmul.f32 %v2067, %v2073
        %v2076 = vmul.f32 %v2068, %v2073
        %v2077 = vmul.f32 %v2069, %v2073
        %v2078 = vlaneseq
        %v2079 = vshrl.u32 %v2078, 7
        %v2080 = vsub.s32 1, %v2079
        %v2081 = vrot.slane %v2025, %v2080
        %v2082 = vadd.f32 %v2074, %v2081
        %v2083 = vadd.f32 %v2075, %v2081
        %v2084 = vadd.f32 %v2076, %v2081
        %v2085 = vadd.f32 %v2077, %v2081
        %v2086 = vpack.c.bf16 %v2083, %v2082
        %v2087 = vpack.c.bf16 %v2085, %v2084
        %s2088 = scalar_lea.vmem [#allocation10], 192
        %v2089 = vld [vmem:[%s2088] sm:$0xff]
        %v2090 = vld [vmem:[%s2088 + $0x8] sm:$0xf]
        %v2091 = vld [vmem:[%s2088 + $0xc] sm:$0xff]
        %v2092 = vld [vmem:[%s2088 + $0x14] sm:$0xf]
        %v2093 = vld [vmem:[%s2088 + $0x18] sm:$0xff]
        %v2094 = vld [vmem:[%s2088 + $0x20] sm:$0xf]
        %v2095 = vld [vmem:[%s2088 + $0x24] sm:$0xff]
        %v2096 = vld [vmem:[%s2088 + $0x2c] sm:$0xf]
        %v2097 = vld [vmem:[%s2088 + $0x30] sm:$0xff]
        %v2098 = vld [vmem:[%s2088 + $0x38] sm:$0xf]
        %v2099 = vld [vmem:[%s2088 + $0x3c] sm:$0xff]
        %v2100 = vld [vmem:[%s2088 + $0x44] sm:$0xf]
        %v2101 = vld [vmem:[%s2088 + $0x48] sm:$0xff]
        %v2102 = vld [vmem:[%s2088 + $0x50] sm:$0xf]
        %v2103 = vld [vmem:[%s2088 + $0x54] sm:$0xff]
        %v2104 = vld [vmem:[%s2088 + $0x5c] sm:$0xf]
        %v2105 = vld [vmem:[%s2088 + $0x60] sm:$0xff]
        %v2106 = vld [vmem:[%s2088 + $0x68] sm:$0xf]
        %v2107 = vld [vmem:[%s2088 + $0x6c] sm:$0xff]
        %v2108 = vld [vmem:[%s2088 + $0x74] sm:$0xf]
        %v2109 = vld [vmem:[%s2088 + $0x78] sm:$0xff]
        %v2110 = vld [vmem:[%s2088 + $0x80] sm:$0xf]
        %v2111 = vld [vmem:[%s2088 + $0x84] sm:$0xff]
        %v2112 = vld [vmem:[%s2088 + $0x8c] sm:$0xf]
        %v2113 = vld [vmem:[%s2088 + $0x90] sm:$0xff]
        %v2114 = vld [vmem:[%s2088 + $0x98] sm:$0xf]
        %v2115 = vld [vmem:[%s2088 + $0x9c] sm:$0xff]
        %v2116 = vld [vmem:[%s2088 + $0xa4] sm:$0xf]
        %v2117 = vld [vmem:[%s2088 + $0xa8] sm:$0xff]
        %v2118 = vld [vmem:[%s2088 + $0xb0] sm:$0xf]
        %v2119 = vld [vmem:[%s2088 + $0xb4] sm:$0xff]
        %v2120 = vld [vmem:[%s2088 + $0xbc] sm:$0xf]
        %s2121 = scalar_lea.vmem %s5, 3
        %v2122 = vld [vmem:[%s2121] sm:$0x7]
        %v2124 = vlaneseq
        %v2125 = vshrl.u32 %v2124, 7
        %v2126 = vsub.s32 0, %v2125
        %v2127 = vrot.slane %v2122, %v2126
        %v2128 = vlaneseq
        %v2129 = vshrl.u32 %v2128, 7
        %v2130 = vsub.s32 1, %v2129
        %v2131 = vrot.slane %v2122, %v2130
        %v2132 = vlaneseq
        %v2133 = vshrl.u32 %v2132, 7
        %v2134 = vsub.s32 2, %v2133
        %v2135 = vrot.slane %v2122, %v2134
        %v2171 = vunpack.c.l.b16 %v2089
        %v2172 = vunpack.c.h.b16 %v2089
        %v2173 = vunpack.c.l.b16 %v2090
        %v2174 = vunpack.c.l.b16 %v2091
        %v2175 = vunpack.c.h.b16 %v2091
        %v2176 = vunpack.c.l.b16 %v2092
        %v2177 = vunpack.c.l.b16 %v2093
        %v2178 = vunpack.c.h.b16 %v2093
        %v2179 = vunpack.c.l.b16 %v2094
        %v2180 = vunpack.c.l.b16 %v2095
        %v2181 = vunpack.c.h.b16 %v2095
        %v2182 = vunpack.c.l.b16 %v2096
        %v2183 = vunpack.c.l.b16 %v2097
        %v2184 = vunpack.c.h.b16 %v2097
        %v2185 = vunpack.c.l.b16 %v2098
        %v2186 = vunpack.c.l.b16 %v2099
        %v2187 = vunpack.c.h.b16 %v2099
        %v2188 = vunpack.c.l.b16 %v2100
        %v2189 = vunpack.c.l.b16 %v2101
        %v2190 = vunpack.c.h.b16 %v2101
        %v2191 = vunpack.c.l.b16 %v2102
        %v2192 = vunpack.c.l.b16 %v2103
        %v2193 = vunpack.c.h.b16 %v2103
        %v2194 = vunpack.c.l.b16 %v2104
        %v2195 = vunpack.c.l.b16 %v2105
        %v2196 = vunpack.c.h.b16 %v2105
        %v2197 = vunpack.c.l.b16 %v2106
        %v2198 = vunpack.c.l.b16 %v2107
        %v2199 = vunpack.c.h.b16 %v2107
        %v2200 = vunpack.c.l.b16 %v2108
        %v2201 = vunpack.c.l.b16 %v2109
        %v2202 = vunpack.c.h.b16 %v2109
        %v2203 = vunpack.c.l.b16 %v2110
        %v2204 = vunpack.c.l.b16 %v2111
        %v2205 = vunpack.c.h.b16 %v2111
        %v2206 = vunpack.c.l.b16 %v2112
        %v2207 = vunpack.c.l.b16 %v2113
        %v2208 = vunpack.c.h.b16 %v2113
        %v2209 = vunpack.c.l.b16 %v2114
        %v2210 = vunpack.c.l.b16 %v2115
        %v2211 = vunpack.c.h.b16 %v2115
        %v2212 = vunpack.c.l.b16 %v2116
        %v2213 = vunpack.c.l.b16 %v2117
        %v2214 = vunpack.c.h.b16 %v2117
        %v2215 = vunpack.c.l.b16 %v2118
        %v2216 = vunpack.c.l.b16 %v2119
        %v2217 = vunpack.c.h.b16 %v2119
        %v2218 = vunpack.c.l.b16 %v2120
        %v2219 = vpack.c.b16 %v2174, %v2171
        %v2220 = vpack.c.b16 %v2175, %v2172
        %v2221 = vpack.c.b16 %v2176, %v2173
        %v2222 = vpack.c.b16 %v2180, %v2177
        %v2223 = vpack.c.b16 %v2181, %v2178
        %v2224 = vpack.c.b16 %v2182, %v2179
        %v2225 = vpack.c.b16 %v2186, %v2183
        %v2226 = vpack.c.b16 %v2187, %v2184
        %v2227 = vpack.c.b16 %v2188, %v2185
        %v2228 = vpack.c.b16 %v2192, %v2189
        %v2229 = vpack.c.b16 %v2193, %v2190
        %v2230 = vpack.c.b16 %v2194, %v2191
        %v2231 = vpack.c.b16 %v2198, %v2195
        %v2232 = vpack.c.b16 %v2199, %v2196
        %v2233 = vpack.c.b16 %v2200, %v2197
        %v2234 = vpack.c.b16 %v2204, %v2201
        %v2235 = vpack.c.b16 %v2205, %v2202
        %v2236 = vpack.c.b16 %v2206, %v2203
        %v2237 = vpack.c.b16 %v2210, %v2207
        %v2238 = vpack.c.b16 %v2211, %v2208
        %v2239 = vpack.c.b16 %v2212, %v2209
        %v2240 = vpack.c.b16 %v2216, %v2213
        %v2241 = vpack.c.b16 %v2217, %v2214
        %v2242 = vpack.c.b16 %v2218, %v2215
        %2267 = vmatprep.subr.bf16.mxu0 %v2220
        %2268 = vmatpush1.bf16.msra.mxu0 %v2219
        %2269 = vmatprep.subr.bf16.mxu0 %v2223
        %2270 = vmatpush1.bf16.msra.mxu0 %v2222
        %2271 = vmatprep.subr.bf16.mxu0 %v2226
        %2272 = vmatpush1.bf16.msra.mxu0 %v2225
        %2273 = vmatprep.subr.bf16.mxu0 %v2229
        %2274 = vmatpush1.bf16.msra.mxu0 %v2228
        %2275 = vmatprep.subr.bf16.mxu0 %v2232
        %2276 = vmatpush1.bf16.msra.mxu0 %v2231
        %2277 = vmatprep.subr.bf16.mxu0 %v2235
        %2278 = vmatpush1.bf16.msra.mxu0 %v2234
        %2279 = vmatprep.subr.bf16.mxu0 %v2238
        %2280 = vmatpush1.bf16.msra.mxu0 %v2237
        %2281 = vmatprep.subr.bf16.mxu0 %v2241
        %2282 = vmatpush1.bf16.msra.mxu0 %v2240
        %2283 = vmatprep.subr.bf16.mxu0 0
        %2284 = vmatpush1.bf16.msra.mxu0 0
        %2285 = vmatprep.subr.bf16.mxu0 0
        %2286 = vmatpush1.bf16.msra.mxu0 0
        %2287 = vmatprep.subr.bf16.mxu0 0
        %2288 = vmatpush1.bf16.msra.mxu0 0
        %2289 = vmatprep.subr.bf16.mxu0 0
        %2290 = vmatpush1.bf16.msra.mxu0 0
        %2291 = vmatprep.subr.bf16.mxu0 0
        %2292 = vmatpush1.bf16.msra.mxu0 0
        %2293 = vmatprep.subr.bf16.mxu0 0
        %2294 = vmatpush1.bf16.msra.mxu0 0
        %2295 = vmatprep.subr.bf16.mxu0 0
        %2296 = vmatpush1.bf16.msra.mxu0 0
        %2297 = vmatprep.subr.bf16.mxu0 0
        %2298 = vmatpush1.bf16.msra.mxu0 0
        %2299 = vmatprep.mubr.bf16.mxu0 0
        %2300 = vmatmul.mubr.bf16.gmra.mrb[0].mxu0 %v2086
        %v2301 = vpop.f32.mrb[0].mxu0
        %v2302 = vadd.f32 %v2127, %v2301
        %v2303 = vpop.f32.mrb[0].mxu0
        %v2304 = vadd.f32 %v2131, %v2303
        %v2305 = vpop.f32.mrb[0].mxu0
        %v2306 = vadd.f32 %v2127, %v2305
        %v2307 = vpop.f32.mrb[0].mxu0
        %v2308 = vadd.f32 %v2131, %v2307
        %2309 = vmatprep.mubr.bf16.mxu0 0
        %2310 = vmatmul.mubr.bf16.gmra.mrb[0].mxu0 %v2087
        %v2311 = vpop.f32.mrb[0].mxu0
        %v2312 = vadd.f32 %v2127, %v2311
        %v2313 = vpop.f32.mrb[0].mxu0
        %v2314 = vadd.f32 %v2131, %v2313
        %v2315 = vpop.f32.mrb[0].mxu0
        %v2316 = vadd.f32 %v2127, %v2315
        %v2317 = vpop.f32.mrb[0].mxu0
        %v2318 = vadd.f32 %v2131, %v2317
        %2319 = vdwg.mxu0
        %2320 = vmatprep.subr.bf16.mxu0 0
        %2321 = vmatpush1.bf16.msra.mxu0 %v2221
        %2322 = vmatprep.subr.bf16.mxu0 0
        %2323 = vmatpush1.bf16.msra.mxu0 %v2224
        %2324 = vmatprep.subr.bf16.mxu0 0
        %2325 = vmatpush1.bf16.msra.mxu0 %v2227
        %2326 = vmatprep.subr.bf16.mxu0 0
        %2327 = vmatpush1.bf16.msra.mxu0 %v2230
        %2328 = vmatprep.subr.bf16.mxu0 0
        %2329 = vmatpush1.bf16.msra.mxu0 %v2233
        %2330 = vmatprep.subr.bf16.mxu0 0
        %2331 = vmatpush1.bf16.msra.mxu0 %v2236
        %2332 = vmatprep.subr.bf16.mxu0 0
        %2333 = vmatpush1.bf16.msra.mxu0 %v2239
        %2334 = vmatprep.subr.bf16.mxu0 0
        %2335 = vmatpush1.bf16.msra.mxu0 %v2242
        %2336 = vmatprep.subr.bf16.mxu0 0
        %2337 = vmatpush1.bf16.msra.mxu0 0
        %2338 = vmatprep.subr.bf16.mxu0 0
        %2339 = vmatpush1.bf16.msra.mxu0 0
        %2340 = vmatprep.subr.bf16.mxu0 0
        %2341 = vmatpush1.bf16.msra.mxu0 0
        %2342 = vmatprep.subr.bf16.mxu0 0
        %2343 = vmatpush1.bf16.msra.mxu0 0
        %2344 = vmatprep.subr.bf16.mxu0 0
        %2345 = vmatpush1.bf16.msra.mxu0 0
        %2346 = vmatprep.subr.bf16.mxu0 0
        %2347 = vmatpush1.bf16.msra.mxu0 0
        %2348 = vmatprep.subr.bf16.mxu0 0
        %2349 = vmatpush1.bf16.msra.mxu0 0
        %2350 = vmatprep.subr.bf16.mxu0 0
        %2351 = vmatpush1.bf16.msra.mxu0 0
        %2352 = vmatprep.mubr.bf16.mxu0 0
        %2353 = vmatmul.mubr.bf16.gmra.mrb[0].mxu0 %v2086
        %v2354 = vpop.f32.mrb[0].mxu0
        %v2355 = vadd.f32 %v2135, %v2354
        %v2356 = vpop.f32.mrb[0].mxu0
        %v2357 = vpop.f32.mrb[0].mxu0
        %v2358 = vadd.f32 %v2135, %v2357
        %v2359 = vpop.f32.mrb[0].mxu0
        %2360 = vmatprep.mubr.bf16.mxu0 0
        %2361 = vmatmul.mubr.bf16.gmra.mrb[0].mxu0 %v2087
        %v2362 = vpop.f32.mrb[0].mxu0
        %v2363 = vadd.f32 %v2135, %v2362
        %v2364 = vpop.f32.mrb[0].mxu0
        %v2365 = vpop.f32.mrb[0].mxu0
        %v2366 = vadd.f32 %v2135, %v2365
        %v2367 = vpop.f32.mrb[0].mxu0
        %2368 = vdwg.mxu0
        %s2369 = scalar_lea.vmem [#allocation11], 64
        %v2370 = vld [vmem:[%s2369] sm:$0xf]
        %v2371 = vld [vmem:[%s2369 + $0x4] sm:$0xf]
        %v2372 = vld [vmem:[%s2369 + $0x8] sm:$0xf]
        %v2373 = vld [vmem:[%s2369 + $0xc] sm:$0xf]
        %v2374 = vld [vmem:[%s2369 + $0x10] sm:$0xf]
        %v2375 = vld [vmem:[%s2369 + $0x14] sm:$0xf]
        %v2376 = vld [vmem:[%s2369 + $0x18] sm:$0xf]
        %v2377 = vld [vmem:[%s2369 + $0x1c] sm:$0xf]
        %v2378 = vld [vmem:[%s2369 + $0x20] sm:$0xf]
        %v2379 = vld [vmem:[%s2369 + $0x24] sm:$0xf]
        %v2380 = vld [vmem:[%s2369 + $0x28] sm:$0xf]
        %v2381 = vld [vmem:[%s2369 + $0x2c] sm:$0xf]
        %v2382 = vld [vmem:[%s2369 + $0x30] sm:$0xf]
        %v2383 = vld [vmem:[%s2369 + $0x34] sm:$0xf]
        %v2384 = vld [vmem:[%s2369 + $0x38] sm:$0xf]
        %v2385 = vld [vmem:[%s2369 + $0x3c] sm:$0xf]
        %v2386 = vpack.c.bf16 %v2306, %v2302
        %v2387 = vpack.c.bf16 %v2316, %v2312
        %v2388 = vpack.c.bf16 %v2308, %v2304
        %v2389 = vpack.c.bf16 %v2318, %v2314
        %v2391 = vsel %vm1054, %v2386, 0
        %v2394 = vsel %vm1054, %v2387, 0
        %v2397 = vsel %vm1054, %v2388, 0
        %v2400 = vsel %vm1054, %v2389, 0
        %2402 = vmatprep.subr.bf16.mxu0 0
        %2403 = vmatpush1.bf16.xpose.msra.mxu0 %v2397
        %2404 = vmatprep.subr.bf16.mxu0 0
        %2405 = vmatpush1.bf16.xpose.msra.mxu0 %v2400
        %2406 = vmatprep.subr.bf16.mxu0 0
        %2407 = vmatpush1.bf16.xpose.msra.mxu0 0
        %2408 = vmatprep.subr.bf16.mxu0 0
        %2409 = vmatpush1.bf16.xpose.msra.mxu0 0
        %2410 = vmatprep.subr.bf16.mxu0 0
        %2411 = vmatpush1.bf16.xpose.msra.mxu0 0
        %2412 = vmatprep.subr.bf16.mxu0 0
        %2413 = vmatpush1.bf16.xpose.msra.mxu0 0
        %2414 = vmatprep.subr.bf16.mxu0 0
        %2415 = vmatpush1.bf16.xpose.msra.mxu0 0
        %2416 = vmatprep.subr.bf16.mxu0 0
        %2417 = vmatpush1.bf16.xpose.msra.mxu0 0
        %2418 = vmatprep.subr.bf16.mxu0 0
        %2419 = vmatpush1.bf16.xpose.msra.mxu0 0
        %2420 = vmatprep.subr.bf16.mxu0 0
        %2421 = vmatpush1.bf16.xpose.msra.mxu0 0
        %2422 = vmatprep.subr.bf16.mxu0 0
        %2423 = vmatpush1.bf16.xpose.msra.mxu0 0
        %2424 = vmatprep.subr.bf16.mxu0 0
        %2425 = vmatpush1.bf16.xpose.msra.mxu0 0
        %2426 = vmatprep.subr.bf16.mxu0 0
        %2427 = vmatpush1.bf16.xpose.msra.mxu0 0
        %2428 = vmatprep.subr.bf16.mxu0 0
        %2429 = vmatpush1.bf16.xpose.msra.mxu0 0
        %2430 = vmatprep.subr.bf16.mxu0 0
        %2431 = vmatpush1.bf16.xpose.msra.mxu0 0
        %2432 = vmatprep.subr.bf16.mxu0 0
        %2433 = vmatpush1.bf16.xpose.msra.mxu0 0
        %2434 = vmatprep.mubr.bf16.mxu0 0
        %2435 = vmatmul.mubr.bf16.gmra.mrb[0].mxu0 %v2391
        %v2436 = vpop.f32.mrb[0].mxu0
        %v2437 = vadd.f32 0.0, %v2436
        %v2438 = vpop.f32.mrb[0].mxu0
        %v2439 = vpop.f32.mrb[0].mxu0
        %v2440 = vadd.f32 0.0, %v2439
        %v2441 = vpop.f32.mrb[0].mxu0
        %2442 = vmatprep.mubr.bf16.mxu0 0
        %2443 = vmatmul.mubr.bf16.gmra.mrb[0].mxu0 %v2394
        %v2444 = vpop.f32.mrb[0].mxu0
        %v2445 = vadd.f32 0.0, %v2444
        %v2446 = vpop.f32.mrb[0].mxu0
        %v2447 = vpop.f32.mrb[0].mxu0
        %v2448 = vadd.f32 0.0, %v2447
        %v2449 = vpop.f32.mrb[0].mxu0
        %2450 = vdwg.mxu0
        %v2451 = vmul.f32 %v2437, 0.125
        %v2452 = vmul.f32 %v2440, 0.125
        %v2453 = vmul.f32 %v2445, 0.125
        %v2454 = vmul.f32 %v2448, 0.125
        %v2455 = vadd.f32 %v2451, %v1124
        %v2456 = vadd.f32 %v2452, %v1124
        %v2457 = vadd.f32 %v2453, %v1124
        %v2458 = vadd.f32 %v2454, %v1124
        %v2459 = vsel %vm1130, %v2455, -inf
        %2460 = vmax.xlane.f32.xlu0 %v2459
        %v2461 = vpop.xlane.xlu0 %2460
        %v2462 = vsel %vm1130, %v2456, -inf
        %2463 = vmax.xlane.f32.xlu0 %v2462
        %v2464 = vpop.xlane.xlu0 %2463
        %v2465 = vsel %vm1130, %v2457, -inf
        %2466 = vmax.xlane.f32.xlu0 %v2465
        %v2467 = vpop.xlane.xlu0 %2466
        %v2468 = vsel %vm1130, %v2458, -inf
        %2469 = vmax.xlane.f32.xlu0 %v2468
        %v2470 = vpop.xlane.xlu0 %2469
        %v2471 = vsub.f32 %v2455, %v2461
        %v2472 = vsub.f32 %v2456, %v2464
        %v2473 = vsub.f32 %v2457, %v2467
        %v2474 = vsub.f32 %v2458, %v2470
        %v2475 = vmul.f32 %v2471, 1.442695
        %v2476 = vpow.pop %v2475
        %v2477 = vmul.f32 %v2472, 1.442695
        %v2478 = vpow.pop %v2477
        %v2479 = vmul.f32 %v2473, 1.442695
        %v2480 = vpow.pop %v2479
        %v2481 = vmul.f32 %v2474, 1.442695
        %v2482 = vpow.pop %v2481
        %v2483 = vsel %vm1130, %v2476, 0.0
        %2484 = vadd.xlane.f32.xlu0 %v2483
        %v2485 = vpop.xlane.xlu0 %2484
        %v2486 = vsel %vm1130, %v2478, 0.0
        %2487 = vadd.xlane.f32.xlu0 %v2486
        %v2488 = vpop.xlane.xlu0 %2487
        %v2489 = vsel %vm1130, %v2480, 0.0
        %2490 = vadd.xlane.f32.xlu0 %v2489
        %v2491 = vpop.xlane.xlu0 %2490
        %v2492 = vsel %vm1130, %v2482, 0.0
        %2493 = vadd.xlane.f32.xlu0 %v2492
        %v2494 = vpop.xlane.xlu0 %2493
        %v2495 = vrcp.pop %v2485
        %v2496 = vrcp.pop %v2488
        %v2497 = vrcp.pop %v2491
        %v2498 = vrcp.pop %v2494
        %v2499 = vmul.f32 %v2476, %v2495
        %v2500 = vmul.f32 %v2478, %v2496
        %v2501 = vmul.f32 %v2480, %v2497
        %v2502 = vmul.f32 %v2482, %v2498
        %v2503 = vpack.c.bf16 %v2500, %v2499
        %v2504 = vpack.c.bf16 %v2502, %v2501
        %v2505 = vpack.c.bf16 %v2358, %v2355
        %v2506 = vpack.c.bf16 %v2366, %v2363
        %v2508 = vsel %vm1130, %v2503, 0
        %v2511 = vsel %vm1130, %v2504, 0
        %2513 = vmatprep.subr.bf16.mxu0 0
        %2514 = vmatpush1.bf16.msra.mxu0 %v2505
        %2515 = vmatprep.subr.bf16.mxu0 0
        %2516 = vmatpush1.bf16.msra.mxu0 %v2506
        %2517 = vmatprep.subr.bf16.mxu0 0
        %2518 = vmatpush1.bf16.msra.mxu0 0
        %2519 = vmatprep.subr.bf16.mxu0 0
        %2520 = vmatpush1.bf16.msra.mxu0 0
        %2521 = vmatprep.subr.bf16.mxu0 0
        %2522 = vmatpush1.bf16.msra.mxu0 0
        %2523 = vmatprep.subr.bf16.mxu0 0
        %2524 = vmatpush1.bf16.msra.mxu0 0
        %2525 = vmatprep.subr.bf16.mxu0 0
        %2526 = vmatpush1.bf16.msra.mxu0 0
        %2527 = vmatprep.subr.bf16.mxu0 0
        %2528 = vmatpush1.bf16.msra.mxu0 0
        %2529 = vmatprep.subr.bf16.mxu0 0
        %2530 = vmatpush1.bf16.msra.mxu0 0
        %2531 = vmatprep.subr.bf16.mxu0 0
        %2532 = vmatpush1.bf16.msra.mxu0 0
        %2533 = vmatprep.subr.bf16.mxu0 0
        %2534 = vmatpush1.bf16.msra.mxu0 0
        %2535 = vmatprep.subr.bf16.mxu0 0
        %2536 = vmatpush1.bf16.msra.mxu0 0
        %2537 = vmatprep.subr.bf16.mxu0 0
        %2538 = vmatpush1.bf16.msra.mxu0 0
        %2539 = vmatprep.subr.bf16.mxu0 0
        %2540 = vmatpush1.bf16.msra.mxu0 0
        %2541 = vmatprep.subr.bf16.mxu0 0
        %2542 = vmatpush1.bf16.msra.mxu0 0
        %2543 = vmatprep.subr.bf16.mxu0 0
        %2544 = vmatpush1.bf16.msra.mxu0 0
        %2545 = vmatprep.mubr.bf16.mxu0 0
        %2546 = vmatmul.mubr.bf16.gmra.mrb[0].mxu0 %v2508
        %v2547 = vpop.f32.mrb[0].mxu0
        %v2548 = vadd.f32 0.0, %v2547
        %v2549 = vpop.f32.mrb[0].mxu0
        %v2550 = vpop.f32.mrb[0].mxu0
        %v2551 = vadd.f32 0.0, %v2550
        %v2552 = vpop.f32.mrb[0].mxu0
        %2553 = vmatprep.mubr.bf16.mxu0 0
        %2554 = vmatmul.mubr.bf16.gmra.mrb[0].mxu0 %v2511
        %v2555 = vpop.f32.mrb[0].mxu0
        %v2556 = vadd.f32 0.0, %v2555
        %v2557 = vpop.f32.mrb[0].mxu0
        %v2558 = vpop.f32.mrb[0].mxu0
        %v2559 = vadd.f32 0.0, %v2558
        %v2560 = vpop.f32.mrb[0].mxu0
        %2561 = vdwg.mxu0
        %v2562 = vpack.c.bf16 %v2551, %v2548
        %v2563 = vpack.c.bf16 %v2559, %v2556
        %2566 = vrot.lane.b32.xlu0 %v2386, 64
        %v2567 = vpop.permute.xlu0 %2566
        %2568 = vrot.lane.b32.xlu0 %v2387, 64
        %v2569 = vpop.permute.xlu0 %2568
        %2572 = vrot.lane.b32.xlu0 %v2388, 64
        %v2573 = vpop.permute.xlu0 %2572
        %2574 = vrot.lane.b32.xlu0 %v2389, 64
        %v2575 = vpop.permute.xlu0 %2574
        %v2577 = vsel %vm1054, %v2567, 0
        %v2580 = vsel %vm1054, %v2569, 0
        %v2583 = vsel %vm1054, %v2573, 0
        %v2586 = vsel %vm1054, %v2575, 0
        %2588 = vmatprep.subr.bf16.mxu0 0
        %2589 = vmatpush1.bf16.xpose.msra.mxu0 %v2583
        %2590 = vmatprep.subr.bf16.mxu0 0
        %2591 = vmatpush1.bf16.xpose.msra.mxu0 %v2586
        %2592 = vmatprep.subr.bf16.mxu0 0
        %2593 = vmatpush1.bf16.xpose.msra.mxu0 0
        %2594 = vmatprep.subr.bf16.mxu0 0
        %2595 = vmatpush1.bf16.xpose.msra.mxu0 0
        %2596 = vmatprep.subr.bf16.mxu0 0
        %2597 = vmatpush1.bf16.xpose.msra.mxu0 0
        %2598 = vmatprep.subr.bf16.mxu0 0
        %2599 = vmatpush1.bf16.xpose.msra.mxu0 0
        %2600 = vmatprep.subr.bf16.mxu0 0
        %2601 = vmatpush1.bf16.xpose.msra.mxu0 0
        %2602 = vmatprep.subr.bf16.mxu0 0
        %2603 = vmatpush1.bf16.xpose.msra.mxu0 0
        %2604 = vmatprep.subr.bf16.mxu0 0
        %2605 = vmatpush1.bf16.xpose.msra.mxu0 0
        %2606 = vmatprep.subr.bf16.mxu0 0
        %2607 = vmatpush1.bf16.xpose.msra.mxu0 0
        %2608 = vmatprep.subr.bf16.mxu0 0
        %2609 = vmatpush1.bf16.xpose.msra.mxu0 0
        %2610 = vmatprep.subr.bf16.mxu0 0
        %2611 = vmatpush1.bf16.xpose.msra.mxu0 0
        %2612 = vmatprep.subr.bf16.mxu0 0
        %2613 = vmatpush1.bf16.xpose.msra.mxu0 0
        %2614 = vmatprep.subr.bf16.mxu0 0
        %2615 = vmatpush1.bf16.xpose.msra.mxu0 0
        %2616 = vmatprep.subr.bf16.mxu0 0
        %2617 = vmatpush1.bf16.xpose.msra.mxu0 0
        %2618 = vmatprep.subr.bf16.mxu0 0
        %2619 = vmatpush1.bf16.xpose.msra.mxu0 0
        %2620 = vmatprep.mubr.bf16.mxu0 0
        %2621 = vmatmul.mubr.bf16.gmra.mrb[0].mxu0 %v2577
        %v2622 = vpop.f32.mrb[0].mxu0
        %v2623 = vadd.f32 0.0, %v2622
        %v2624 = vpop.f32.mrb[0].mxu0
        %v2625 = vpop.f32.mrb[0].mxu0
        %v2626 = vadd.f32 0.0, %v2625
        %v2627 = vpop.f32.mrb[0].mxu0
        %2628 = vmatprep.mubr.bf16.mxu0 0
        %2629 = vmatmul.mubr.bf16.gmra.mrb[0].mxu0 %v2580
        %v2630 = vpop.f32.mrb[0].mxu0
        %v2631 = vadd.f32 0.0, %v2630
        %v2632 = vpop.f32.mrb[0].mxu0
        %v2633 = vpop.f32.mrb[0].mxu0
        %v2634 = vadd.f32 0.0, %v2633
        %v2635 = vpop.f32.mrb[0].mxu0
        %2636 = vdwg.mxu0
        %v2637 = vmul.f32 %v2623, 0.125
        %v2638 = vmul.f32 %v2626, 0.125
        %v2639 = vmul.f32 %v2631, 0.125
        %v2640 = vmul.f32 %v2634, 0.125
        %v2641 = vadd.f32 %v2637, %v1124
        %v2642 = vadd.f32 %v2638, %v1124
        %v2643 = vadd.f32 %v2639, %v1124
        %v2644 = vadd.f32 %v2640, %v1124
        %v2645 = vsel %vm1130, %v2641, -inf
        %2646 = vmax.xlane.f32.xlu0 %v2645
        %v2647 = vpop.xlane.xlu0 %2646
        %v2648 = vsel %vm1130, %v2642, -inf
        %2649 = vmax.xlane.f32.xlu0 %v2648
        %v2650 = vpop.xlane.xlu0 %2649
        %v2651 = vsel %vm1130, %v2643, -inf
        %2652 = vmax.xlane.f32.xlu0 %v2651
        %v2653 = vpop.xlane.xlu0 %2652
        %v2654 = vsel %vm1130, %v2644, -inf
        %2655 = vmax.xlane.f32.xlu0 %v2654
        %v2656 = vpop.xlane.xlu0 %2655
        %v2657 = vsub.f32 %v2641, %v2647
        %v2658 = vsub.f32 %v2642, %v2650
        %v2659 = vsub.f32 %v2643, %v2653
        %v2660 = vsub.f32 %v2644, %v2656
        %v2661 = vmul.f32 %v2657, 1.442695
        %v2662 = vpow.pop %v2661
        %v2663 = vmul.f32 %v2658, 1.442695
        %v2664 = vpow.pop %v2663
        %v2665 = vmul.f32 %v2659, 1.442695
        %v2666 = vpow.pop %v2665
        %v2667 = vmul.f32 %v2660, 1.442695
        %v2668 = vpow.pop %v2667
        %v2669 = vsel %vm1130, %v2662, 0.0
        %2670 = vadd.xlane.f32.xlu0 %v2669
        %v2671 = vpop.xlane.xlu0 %2670
        %v2672 = vsel %vm1130, %v2664, 0.0
        %2673 = vadd.xlane.f32.xlu0 %v2672
        %v2674 = vpop.xlane.xlu0 %2673
        %v2675 = vsel %vm1130, %v2666, 0.0
        %2676 = vadd.xlane.f32.xlu0 %v2675
        %v2677 = vpop.xlane.xlu0 %2676
        %v2678 = vsel %vm1130, %v2668, 0.0
        %2679 = vadd.xlane.f32.xlu0 %v2678
        %v2680 = vpop.xlane.xlu0 %2679
        %v2681 = vrcp.pop %v2671
        %v2682 = vrcp.pop %v2674
        %v2683 = vrcp.pop %v2677
        %v2684 = vrcp.pop %v2680
        %v2685 = vmul.f32 %v2662, %v2681
        %v2686 = vmul.f32 %v2664, %v2682
        %v2687 = vmul.f32 %v2666, %v2683
        %v2688 = vmul.f32 %v2668, %v2684
        %v2689 = vpack.c.bf16 %v2686, %v2685
        %v2690 = vpack.c.bf16 %v2688, %v2687
        %2693 = vrot.lane.b32.xlu0 %v2505, 64
        %v2694 = vpop.permute.xlu0 %2693
        %2695 = vrot.lane.b32.xlu0 %v2506, 64
        %v2696 = vpop.permute.xlu0 %2695
        %v2700 = vsel %vm1130, %v2689, 0
        %v2703 = vsel %vm1130, %v2690, 0
        %2705 = vmatprep.subr.bf16.mxu0 0
        %2706 = vmatpush1.bf16.msra.mxu0 %v2694
        %2707 = vmatprep.subr.bf16.mxu0 0
        %2708 = vmatpush1.bf16.msra.mxu0 %v2696
        %2709 = vmatprep.subr.bf16.mxu0 0
        %2710 = vmatpush1.bf16.msra.mxu0 0
        %2711 = vmatprep.subr.bf16.mxu0 0
        %2712 = vmatpush1.bf16.msra.mxu0 0
        %2713 = vmatprep.subr.bf16.mxu0 0
        %2714 = vmatpush1.bf16.msra.mxu0 0
        %2715 = vmatprep.subr.bf16.mxu0 0
        %2716 = vmatpush1.bf16.msra.mxu0 0
        %2717 = vmatprep.subr.bf16.mxu0 0
        %2718 = vmatpush1.bf16.msra.mxu0 0
        %2719 = vmatprep.subr.bf16.mxu0 0
        %2720 = vmatpush1.bf16.msra.mxu0 0
        %2721 = vmatprep.subr.bf16.mxu0 0
        %2722 = vmatpush1.bf16.msra.mxu0 0
        %2723 = vmatprep.subr.bf16.mxu0 0
        %2724 = vmatpush1.bf16.msra.mxu0 0
        %2725 = vmatprep.subr.bf16.mxu0 0
        %2726 = vmatpush1.bf16.msra.mxu0 0
        %2727 = vmatprep.subr.bf16.mxu0 0
        %2728 = vmatpush1.bf16.msra.mxu0 0
        %2729 = vmatprep.subr.bf16.mxu0 0
        %2730 = vmatpush1.bf16.msra.mxu0 0
        %2731 = vmatprep.subr.bf16.mxu0 0
        %2732 = vmatpush1.bf16.msra.mxu0 0
        %2733 = vmatprep.subr.bf16.mxu0 0
        %2734 = vmatpush1.bf16.msra.mxu0 0
        %2735 = vmatprep.subr.bf16.mxu0 0
        %2736 = vmatpush1.bf16.msra.mxu0 0
        %2737 = vmatprep.mubr.bf16.mxu0 0
        %2738 = vmatmul.mubr.bf16.gmra.mrb[0].mxu0 %v2700
        %v2739 = vpop.f32.mrb[0].mxu0
        %v2740 = vadd.f32 0.0, %v2739
        %v2741 = vpop.f32.mrb[0].mxu0
        %v2742 = vpop.f32.mrb[0].mxu0
        %v2743 = vadd.f32 0.0, %v2742
        %v2744 = vpop.f32.mrb[0].mxu0
        %2745 = vmatprep.mubr.bf16.mxu0 0
        %2746 = vmatmul.mubr.bf16.gmra.mrb[0].mxu0 %v2703
        %v2747 = vpop.f32.mrb[0].mxu0
        %v2748 = vadd.f32 0.0, %v2747
        %v2749 = vpop.f32.mrb[0].mxu0
        %v2750 = vpop.f32.mrb[0].mxu0
        %v2751 = vadd.f32 0.0, %v2750
        %v2752 = vpop.f32.mrb[0].mxu0
        %2753 = vdwg.mxu0
        %v2754 = vpack.c.bf16 %v2743, %v2740
        %v2755 = vpack.c.bf16 %v2751, %v2748
        %v2764 = vunpack.c.l.b16 %v2378
        %v2765 = vunpack.c.l.b16 %v2379
        %v2766 = vunpack.c.l.b16 %v2380
        %v2767 = vunpack.c.l.b16 %v2381
        %v2768 = vunpack.c.l.b16 %v2382
        %v2769 = vunpack.c.l.b16 %v2383
        %v2770 = vunpack.c.l.b16 %v2384
        %v2771 = vunpack.c.l.b16 %v2385
        %v2772 = vpack.c.b16 %v2765, %v2764
        %v2773 = vpack.c.b16 %v2767, %v2766
        %v2774 = vpack.c.b16 %v2769, %v2768
        %v2775 = vpack.c.b16 %v2771, %v2770
        %v2781 = vsel %vm1054, %v2754, 0
        %v2784 = vsel %vm1054, %v2755, 0
        %2786 = vmatprep.subr.bf16.mxu0 0
        %2787 = vmatpush1.bf16.msra.mxu0 %v2772
        %2788 = vmatprep.subr.bf16.mxu0 0
        %2789 = vmatpush1.bf16.msra.mxu0 %v2773
        %2790 = vmatprep.subr.bf16.mxu0 0
        %2791 = vmatpush1.bf16.msra.mxu0 %v2774
        %2792 = vmatprep.subr.bf16.mxu0 0
        %2793 = vmatpush1.bf16.msra.mxu0 %v2775
        %2794 = vmatprep.subr.bf16.mxu0 0
        %2795 = vmatpush1.bf16.msra.mxu0 0
        %2796 = vmatprep.subr.bf16.mxu0 0
        %2797 = vmatpush1.bf16.msra.mxu0 0
        %2798 = vmatprep.subr.bf16.mxu0 0
        %2799 = vmatpush1.bf16.msra.mxu0 0
        %2800 = vmatprep.subr.bf16.mxu0 0
        %2801 = vmatpush1.bf16.msra.mxu0 0
        %2802 = vmatprep.subr.bf16.mxu0 0
        %2803 = vmatpush1.bf16.msra.mxu0 0
        %2804 = vmatprep.subr.bf16.mxu0 0
        %2805 = vmatpush1.bf16.msra.mxu0 0
        %2806 = vmatprep.subr.bf16.mxu0 0
        %2807 = vmatpush1.bf16.msra.mxu0 0
        %2808 = vmatprep.subr.bf16.mxu0 0
        %2809 = vmatpush1.bf16.msra.mxu0 0
        %2810 = vmatprep.subr.bf16.mxu0 0
        %2811 = vmatpush1.bf16.msra.mxu0 0
        %2812 = vmatprep.subr.bf16.mxu0 0
        %2813 = vmatpush1.bf16.msra.mxu0 0
        %2814 = vmatprep.subr.bf16.mxu0 0
        %2815 = vmatpush1.bf16.msra.mxu0 0
        %2816 = vmatprep.subr.bf16.mxu0 0
        %2817 = vmatpush1.bf16.msra.mxu0 0
        %2818 = vmatprep.mubr.bf16.mxu0 0
        %2819 = vmatmul.mubr.bf16.gmra.mrb[0].mxu0 %v2781
        %v2820 = vpop.f32.mrb[0].mxu0
        %v2821 = vadd.f32 0.0, %v2820
        %v2822 = vpop.f32.mrb[0].mxu0
        %v2823 = vpop.f32.mrb[0].mxu0
        %v2824 = vadd.f32 0.0, %v2823
        %v2825 = vpop.f32.mrb[0].mxu0
        %2826 = vmatprep.mubr.bf16.mxu0 0
        %2827 = vmatmul.mubr.bf16.gmra.mrb[0].mxu0 %v2784
        %v2828 = vpop.f32.mrb[0].mxu0
        %v2829 = vadd.f32 0.0, %v2828
        %v2830 = vpop.f32.mrb[0].mxu0
        %v2831 = vpop.f32.mrb[0].mxu0
        %v2832 = vadd.f32 0.0, %v2831
        %v2833 = vpop.f32.mrb[0].mxu0
        %2834 = vdwg.mxu0
        %v2843 = vunpack.c.l.b16 %v2370
        %v2844 = vunpack.c.l.b16 %v2371
        %v2845 = vunpack.c.l.b16 %v2372
        %v2846 = vunpack.c.l.b16 %v2373
        %v2847 = vunpack.c.l.b16 %v2374
        %v2848 = vunpack.c.l.b16 %v2375
        %v2849 = vunpack.c.l.b16 %v2376
        %v2850 = vunpack.c.l.b16 %v2377
        %v2851 = vpack.c.b16 %v2844, %v2843
        %v2852 = vpack.c.b16 %v2846, %v2845
        %v2853 = vpack.c.b16 %v2848, %v2847
        %v2854 = vpack.c.b16 %v2850, %v2849
        %v2860 = vsel %vm1054, %v2562, 0
        %v2863 = vsel %vm1054, %v2563, 0
        %2865 = vmatprep.subr.bf16.mxu0 0
        %2866 = vmatpush1.bf16.msra.mxu0 %v2851
        %2867 = vmatprep.subr.bf16.mxu0 0
        %2868 = vmatpush1.bf16.msra.mxu0 %v2852
        %2869 = vmatprep.subr.bf16.mxu0 0
        %2870 = vmatpush1.bf16.msra.mxu0 %v2853
        %2871 = vmatprep.subr.bf16.mxu0 0
        %2872 = vmatpush1.bf16.msra.mxu0 %v2854
        %2873 = vmatprep.subr.bf16.mxu0 0
        %2874 = vmatpush1.bf16.msra.mxu0 0
        %2875 = vmatprep.subr.bf16.mxu0 0
        %2876 = vmatpush1.bf16.msra.mxu0 0
        %2877 = vmatprep.subr.bf16.mxu0 0
        %2878 = vmatpush1.bf16.msra.mxu0 0
        %2879 = vmatprep.subr.bf16.mxu0 0
        %2880 = vmatpush1.bf16.msra.mxu0 0
        %2881 = vmatprep.subr.bf16.mxu0 0
        %2882 = vmatpush1.bf16.msra.mxu0 0
        %2883 = vmatprep.subr.bf16.mxu0 0
        %2884 = vmatpush1.bf16.msra.mxu0 0
        %2885 = vmatprep.subr.bf16.mxu0 0
        %2886 = vmatpush1.bf16.msra.mxu0 0
        %2887 = vmatprep.subr.bf16.mxu0 0
        %2888 = vmatpush1.bf16.msra.mxu0 0
        %2889 = vmatprep.subr.bf16.mxu0 0
        %2890 = vmatpush1.bf16.msra.mxu0 0
        %2891 = vmatprep.subr.bf16.mxu0 0
        %2892 = vmatpush1.bf16.msra.mxu0 0
        %2893 = vmatprep.subr.bf16.mxu0 0
        %2894 = vmatpush1.bf16.msra.mxu0 0
        %2895 = vmatprep.subr.bf16.mxu0 0
        %2896 = vmatpush1.bf16.msra.mxu0 0
        %2897 = vmatprep.mubr.bf16.mxu0 0
        %2898 = vmatmul.mubr.bf16.gmra.mrb[0].mxu0 %v2860
        %v2899 = vpop.f32.mrb[0].mxu0
        %v2900 = vadd.f32 %v2821, %v2899
        %v2901 = vpop.f32.mrb[0].mxu0
        %v2902 = vpop.f32.mrb[0].mxu0
        %v2903 = vadd.f32 %v2824, %v2902
        %v2904 = vpop.f32.mrb[0].mxu0
        %2905 = vmatprep.mubr.bf16.mxu0 0
        %2906 = vmatmul.mubr.bf16.gmra.mrb[0].mxu0 %v2863
        %v2907 = vpop.f32.mrb[0].mxu0
        %v2908 = vadd.f32 %v2829, %v2907
        %v2909 = vpop.f32.mrb[0].mxu0
        %v2910 = vpop.f32.mrb[0].mxu0
        %v2911 = vadd.f32 %v2832, %v2910
        %v2912 = vpop.f32.mrb[0].mxu0
        %2913 = vdwg.mxu0
        %v2914 = vadd.f32 %v2020, %v2900
        %v2915 = vadd.f32 %v2021, %v2903
        %v2916 = vadd.f32 %v2022, %v2908
        %v2917 = vadd.f32 %v2023, %v2911
        %s2918 = scalar_lea.vmem %s7, 1
        %v2919 = vld [vmem:[%s2918] sm:$0x1]
        %v2921 = vlaneseq
        %v2922 = vshrl.u32 %v2921, 7
        %v2923 = vsub.s32 0, %v2922
        %v2924 = vrot.slane %v2919, %v2923
        %v2926 = vadd.f32 %v2914, %v2924
        %v2927 = vadd.f32 %v2915, %v2924
        %v2928 = vadd.f32 %v2916, %v2924
        %v2929 = vadd.f32 %v2917, %v2924
        %2930 = vadd.xlane.f32.xlu0 %v2926
        %v2931 = vpop.xlane.xlu0 %2930
        %2932 = vadd.xlane.f32.xlu0 %v2927
        %v2933 = vpop.xlane.xlu0 %2932
        %2934 = vadd.xlane.f32.xlu0 %v2928
        %v2935 = vpop.xlane.xlu0 %2934
        %2936 = vadd.xlane.f32.xlu0 %v2929
        %v2937 = vpop.xlane.xlu0 %2936
        %v2938 = vmul.f32 %v2931, %v700
        %v2939 = vmul.f32 %v2933, %v700
        %v2940 = vmul.f32 %v2935, %v700
        %v2941 = vmul.f32 %v2937, %v700
        %v2942 = vsub.f32 %v2926, %v2938
        %v2943 = vsub.f32 %v2927, %v2939
        %v2944 = vsub.f32 %v2928, %v2940
        %v2945 = vsub.f32 %v2929, %v2941
        %v2946 = vmul.f32 %v2942, %v2942
        %v2947 = vmul.f32 %v2943, %v2943
        %v2948 = vmul.f32 %v2944, %v2944
        %v2949 = vmul.f32 %v2945, %v2945
        %2950 = vadd.xlane.f32.xlu0 %v2946
        %v2951 = vpop.xlane.xlu0 %2950
        %2952 = vadd.xlane.f32.xlu0 %v2947
        %v2953 = vpop.xlane.xlu0 %2952
        %2954 = vadd.xlane.f32.xlu0 %v2948
        %v2955 = vpop.xlane.xlu0 %2954
        %2956 = vadd.xlane.f32.xlu0 %v2949
        %v2957 = vpop.xlane.xlu0 %2956
        %v2958 = vmul.f32 %v2951, %v700
        %v2959 = vmul.f32 %v2953, %v700
        %v2960 = vmul.f32 %v2955, %v700
        %v2961 = vmul.f32 %v2957, %v700
        %v2962 = vadd.f32 %v2958, 1e-05
        %v2963 = vadd.f32 %v2959, 1e-05
        %v2964 = vadd.f32 %v2960, 1e-05
        %v2965 = vadd.f32 %v2961, 1e-05
        %v2966 = vrsqrt.pop %v2962
        %v2967 = vrsqrt.pop %v2963
        %v2968 = vrsqrt.pop %v2964
        %v2969 = vrsqrt.pop %v2965
        %v2970 = vmul.f32 %v2942, %v2966
        %v2971 = vmul.f32 %v2943, %v2967
        %v2972 = vmul.f32 %v2944, %v2968
        %v2973 = vmul.f32 %v2945, %v2969
        %v2974 = vlaneseq
        %v2975 = vshrl.u32 %v2974, 7
        %v2976 = vsub.s32 2, %v2975
        %v2977 = vrot.slane %v2025, %v2976
        %v2978 = vmul.f32 %v2970, %v2977
        %v2979 = vmul.f32 %v2971, %v2977
        %v2980 = vmul.f32 %v2972, %v2977
        %v2981 = vmul.f32 %v2973, %v2977
        %v2982 = vlaneseq
        %v2983 = vshrl.u32 %v2982, 7
        %v2984 = vsub.s32 3, %v2983
        %v2985 = vrot.slane %v2025, %v2984
        %v2986 = vadd.f32 %v2978, %v2985
        %v2987 = vadd.f32 %v2979, %v2985
        %v2988 = vadd.f32 %v2980, %v2985
        %v2989 = vadd.f32 %v2981, %v2985
        %v2990 = vpack.c.bf16 %v2987, %v2986
        %v2991 = vpack.c.bf16 %v2989, %v2988
        %s2992 = scalar_lea.vmem [#allocation13], 128
        %v2993 = vld [vmem:[%s2992] sm:$0xff]
        %v2994 = vld [vmem:[%s2992 + $0x8] sm:$0xff]
        %v2995 = vld [vmem:[%s2992 + $0x10] sm:$0xff]
        %v2996 = vld [vmem:[%s2992 + $0x18] sm:$0xff]
        %v2997 = vld [vmem:[%s2992 + $0x20] sm:$0xff]
        %v2998 = vld [vmem:[%s2992 + $0x28] sm:$0xff]
        %v2999 = vld [vmem:[%s2992 + $0x30] sm:$0xff]
        %v3000 = vld [vmem:[%s2992 + $0x38] sm:$0xff]
        %v3001 = vld [vmem:[%s2992 + $0x40] sm:$0xff]
        %v3002 = vld [vmem:[%s2992 + $0x48] sm:$0xff]
        %v3003 = vld [vmem:[%s2992 + $0x50] sm:$0xff]
        %v3004 = vld [vmem:[%s2992 + $0x58] sm:$0xff]
        %v3005 = vld [vmem:[%s2992 + $0x60] sm:$0xff]
        %v3006 = vld [vmem:[%s2992 + $0x68] sm:$0xff]
        %v3007 = vld [vmem:[%s2992 + $0x70] sm:$0xff]
        %v3008 = vld [vmem:[%s2992 + $0x78] sm:$0xff]
        %s3009 = scalar_lea.vmem %s10, 2
        %v3010 = vld [vmem:[%s3009] sm:$0x3]
        %v3012 = vlaneseq
        %v3013 = vshrl.u32 %v3012, 7
        %v3014 = vsub.s32 0, %v3013
        %v3015 = vrot.slane %v3010, %v3014
        %v3016 = vlaneseq
        %v3017 = vshrl.u32 %v3016, 7
        %v3018 = vsub.s32 1, %v3017
        %v3019 = vrot.slane %v3010, %v3018
        %v3038 = vunpack.c.l.b16 %v2993
        %v3039 = vunpack.c.h.b16 %v2993
        %v3040 = vunpack.c.l.b16 %v2994
        %v3041 = vunpack.c.h.b16 %v2994
        %v3042 = vunpack.c.l.b16 %v2995
        %v3043 = vunpack.c.h.b16 %v2995
        %v3044 = vunpack.c.l.b16 %v2996
        %v3045 = vunpack.c.h.b16 %v2996
        %v3046 = vunpack.c.l.b16 %v2997
        %v3047 = vunpack.c.h.b16 %v2997
        %v3048 = vunpack.c.l.b16 %v2998
        %v3049 = vunpack.c.h.b16 %v2998
        %v3050 = vunpack.c.l.b16 %v2999
        %v3051 = vunpack.c.h.b16 %v2999
        %v3052 = vunpack.c.l.b16 %v3000
        %v3053 = vunpack.c.h.b16 %v3000
        %v3054 = vunpack.c.l.b16 %v3001
        %v3055 = vunpack.c.h.b16 %v3001
        %v3056 = vunpack.c.l.b16 %v3002
        %v3057 = vunpack.c.h.b16 %v3002
        %v3058 = vunpack.c.l.b16 %v3003
        %v3059 = vunpack.c.h.b16 %v3003
        %v3060 = vunpack.c.l.b16 %v3004
        %v3061 = vunpack.c.h.b16 %v3004
        %v3062 = vunpack.c.l.b16 %v3005
        %v3063 = vunpack.c.h.b16 %v3005
        %v3064 = vunpack.c.l.b16 %v3006
        %v3065 = vunpack.c.h.b16 %v3006
        %v3066 = vunpack.c.l.b16 %v3007
        %v3067 = vunpack.c.h.b16 %v3007
        %v3068 = vunpack.c.l.b16 %v3008
        %v3069 = vunpack.c.h.b16 %v3008
        %v3070 = vpack.c.b16 %v3040, %v3038
        %v3071 = vpack.c.b16 %v3041, %v3039
        %v3072 = vpack.c.b16 %v3044, %v3042
        %v3073 = vpack.c.b16 %v3045, %v3043
        %v3074 = vpack.c.b16 %v3048, %v3046
        %v3075 = vpack.c.b16 %v3049, %v3047
        %v3076 = vpack.c.b16 %v3052, %v3050
        %v3077 = vpack.c.b16 %v3053, %v3051
        %v3078 = vpack.c.b16 %v3056, %v3054
        %v3079 = vpack.c.b16 %v3057, %v3055
        %v3080 = vpack.c.b16 %v3060, %v3058
        %v3081 = vpack.c.b16 %v3061, %v3059
        %v3082 = vpack.c.b16 %v3064, %v3062
        %v3083 = vpack.c.b16 %v3065, %v3063
        %v3084 = vpack.c.b16 %v3068, %v3066
        %v3085 = vpack.c.b16 %v3069, %v3067
        %3102 = vmatprep.subr.bf16.mxu0 %v3071
        %3103 = vmatpush1.bf16.msra.mxu0 %v3070
        %3104 = vmatprep.subr.bf16.mxu0 %v3073
        %3105 = vmatpush1.bf16.msra.mxu0 %v3072
        %3106 = vmatprep.subr.bf16.mxu0 %v3075
        %3107 = vmatpush1.bf16.msra.mxu0 %v3074
        %3108 = vmatprep.subr.bf16.mxu0 %v3077
        %3109 = vmatpush1.bf16.msra.mxu0 %v3076
        %3110 = vmatprep.subr.bf16.mxu0 %v3079
        %3111 = vmatpush1.bf16.msra.mxu0 %v3078
        %3112 = vmatprep.subr.bf16.mxu0 %v3081
        %3113 = vmatpush1.bf16.msra.mxu0 %v3080
        %3114 = vmatprep.subr.bf16.mxu0 %v3083
        %3115 = vmatpush1.bf16.msra.mxu0 %v3082
        %3116 = vmatprep.subr.bf16.mxu0 %v3085
        %3117 = vmatpush1.bf16.msra.mxu0 %v3084
        %3118 = vmatprep.subr.bf16.mxu0 0
        %3119 = vmatpush1.bf16.msra.mxu0 0
        %3120 = vmatprep.subr.bf16.mxu0 0
        %3121 = vmatpush1.bf16.msra.mxu0 0
        %3122 = vmatprep.subr.bf16.mxu0 0
        %3123 = vmatpush1.bf16.msra.mxu0 0
        %3124 = vmatprep.subr.bf16.mxu0 0
        %3125 = vmatpush1.bf16.msra.mxu0 0
        %3126 = vmatprep.subr.bf16.mxu0 0
        %3127 = vmatpush1.bf16.msra.mxu0 0
        %3128 = vmatprep.subr.bf16.mxu0 0
        %3129 = vmatpush1.bf16.msra.mxu0 0
        %3130 = vmatprep.subr.bf16.mxu0 0
        %3131 = vmatpush1.bf16.msra.mxu0 0
        %3132 = vmatprep.subr.bf16.mxu0 0
        %3133 = vmatpush1.bf16.msra.mxu0 0
        %3134 = vmatprep.mubr.bf16.mxu0 0
        %3135 = vmatmul.mubr.bf16.gmra.mrb[0].mxu0 %v2990
        %v3136 = vpop.f32.mrb[0].mxu0
        %v3137 = vadd.f32 %v3015, %v3136
        %v3138 = vpop.f32.mrb[0].mxu0
        %v3139 = vadd.f32 %v3019, %v3138
        %v3140 = vpop.f32.mrb[0].mxu0
        %v3141 = vadd.f32 %v3015, %v3140
        %v3142 = vpop.f32.mrb[0].mxu0
        %v3143 = vadd.f32 %v3019, %v3142
        %3144 = vmatprep.mubr.bf16.mxu0 0
        %3145 = vmatmul.mubr.bf16.gmra.mrb[0].mxu0 %v2991
        %v3146 = vpop.f32.mrb[0].mxu0
        %v3147 = vadd.f32 %v3015, %v3146
        %v3148 = vpop.f32.mrb[0].mxu0
        %v3149 = vadd.f32 %v3019, %v3148
        %v3150 = vpop.f32.mrb[0].mxu0
        %v3151 = vadd.f32 %v3015, %v3150
        %v3152 = vpop.f32.mrb[0].mxu0
        %v3153 = vadd.f32 %v3019, %v3152
        %3154 = vdwg.mxu0
        %v3155 = vmax.f32 %v3137, 0.0
        %v3156 = vmax.f32 %v3139, 0.0
        %v3157 = vmax.f32 %v3141, 0.0
        %v3158 = vmax.f32 %v3143, 0.0
        %v3159 = vmax.f32 %v3147, 0.0
        %v3160 = vmax.f32 %v3149, 0.0
        %v3161 = vmax.f32 %v3151, 0.0
        %v3162 = vmax.f32 %v3153, 0.0
        %v3163 = vpack.c.bf16 %v3157, %v3155
        %v3164 = vpack.c.bf16 %v3158, %v3156
        %v3165 = vpack.c.bf16 %v3161, %v3159
        %v3166 = vpack.c.bf16 %v3162, %v3160
        %s3167 = scalar_lea.vmem [#allocation14], 128
        %v3168 = vld [vmem:[%s3167] sm:$0xf]
        %v3169 = vld [vmem:[%s3167 + $0x4] sm:$0xf]
        %v3170 = vld [vmem:[%s3167 + $0x8] sm:$0xf]
        %v3171 = vld [vmem:[%s3167 + $0xc] sm:$0xf]
        %v3172 = vld [vmem:[%s3167 + $0x10] sm:$0xf]
        %v3173 = vld [vmem:[%s3167 + $0x14] sm:$0xf]
        %v3174 = vld [vmem:[%s3167 + $0x18] sm:$0xf]
        %v3175 = vld [vmem:[%s3167 + $0x1c] sm:$0xf]
        %v3176 = vld [vmem:[%s3167 + $0x20] sm:$0xf]
        %v3177 = vld [vmem:[%s3167 + $0x24] sm:$0xf]
        %v3178 = vld [vmem:[%s3167 + $0x28] sm:$0xf]
        %v3179 = vld [vmem:[%s3167 + $0x2c] sm:$0xf]
        %v3180 = vld [vmem:[%s3167 + $0x30] sm:$0xf]
        %v3181 = vld [vmem:[%s3167 + $0x34] sm:$0xf]
        %v3182 = vld [vmem:[%s3167 + $0x38] sm:$0xf]
        %v3183 = vld [vmem:[%s3167 + $0x3c] sm:$0xf]
        %v3184 = vld [vmem:[%s3167 + $0x40] sm:$0xf]
        %v3185 = vld [vmem:[%s3167 + $0x44] sm:$0xf]
        %v3186 = vld [vmem:[%s3167 + $0x48] sm:$0xf]
        %v3187 = vld [vmem:[%s3167 + $0x4c] sm:$0xf]
        %v3188 = vld [vmem:[%s3167 + $0x50] sm:$0xf]
        %v3189 = vld [vmem:[%s3167 + $0x54] sm:$0xf]
        %v3190 = vld [vmem:[%s3167 + $0x58] sm:$0xf]
        %v3191 = vld [vmem:[%s3167 + $0x5c] sm:$0xf]
        %v3192 = vld [vmem:[%s3167 + $0x60] sm:$0xf]
        %v3193 = vld [vmem:[%s3167 + $0x64] sm:$0xf]
        %v3194 = vld [vmem:[%s3167 + $0x68] sm:$0xf]
        %v3195 = vld [vmem:[%s3167 + $0x6c] sm:$0xf]
        %v3196 = vld [vmem:[%s3167 + $0x70] sm:$0xf]
        %v3197 = vld [vmem:[%s3167 + $0x74] sm:$0xf]
        %v3198 = vld [vmem:[%s3167 + $0x78] sm:$0xf]
        %v3199 = vld [vmem:[%s3167 + $0x7c] sm:$0xf]
        %s3200 = scalar_lea.vmem %s12, 1
        %v3201 = vld [vmem:[%s3200] sm:$0x1]
        %v3203 = vlaneseq
        %v3204 = vshrl.u32 %v3203, 7
        %v3205 = vsub.s32 0, %v3204
        %v3206 = vrot.slane %v3201, %v3205
        %v3240 = vunpack.c.l.b16 %v3168
        %v3241 = vunpack.c.l.b16 %v3169
        %v3242 = vunpack.c.l.b16 %v3170
        %v3243 = vunpack.c.l.b16 %v3171
        %v3244 = vunpack.c.l.b16 %v3172
        %v3245 = vunpack.c.l.b16 %v3173
        %v3246 = vunpack.c.l.b16 %v3174
        %v3247 = vunpack.c.l.b16 %v3175
        %v3248 = vunpack.c.l.b16 %v3176
        %v3249 = vunpack.c.l.b16 %v3177
        %v3250 = vunpack.c.l.b16 %v3178
        %v3251 = vunpack.c.l.b16 %v3179
        %v3252 = vunpack.c.l.b16 %v3180
        %v3253 = vunpack.c.l.b16 %v3181
        %v3254 = vunpack.c.l.b16 %v3182
        %v3255 = vunpack.c.l.b16 %v3183
        %v3256 = vunpack.c.l.b16 %v3184
        %v3257 = vunpack.c.l.b16 %v3185
        %v3258 = vunpack.c.l.b16 %v3186
        %v3259 = vunpack.c.l.b16 %v3187
        %v3260 = vunpack.c.l.b16 %v3188
        %v3261 = vunpack.c.l.b16 %v3189
        %v3262 = vunpack.c.l.b16 %v3190
        %v3263 = vunpack.c.l.b16 %v3191
        %v3264 = vunpack.c.l.b16 %v3192
        %v3265 = vunpack.c.l.b16 %v3193
        %v3266 = vunpack.c.l.b16 %v3194
        %v3267 = vunpack.c.l.b16 %v3195
        %v3268 = vunpack.c.l.b16 %v3196
        %v3269 = vunpack.c.l.b16 %v3197
        %v3270 = vunpack.c.l.b16 %v3198
        %v3271 = vunpack.c.l.b16 %v3199
        %v3272 = vpack.c.b16 %v3241, %v3240
        %v3273 = vpack.c.b16 %v3243, %v3242
        %v3274 = vpack.c.b16 %v3245, %v3244
        %v3275 = vpack.c.b16 %v3247, %v3246
        %v3276 = vpack.c.b16 %v3249, %v3248
        %v3277 = vpack.c.b16 %v3251, %v3250
        %v3278 = vpack.c.b16 %v3253, %v3252
        %v3279 = vpack.c.b16 %v3255, %v3254
        %v3280 = vpack.c.b16 %v3257, %v3256
        %v3281 = vpack.c.b16 %v3259, %v3258
        %v3282 = vpack.c.b16 %v3261, %v3260
        %v3283 = vpack.c.b16 %v3263, %v3262
        %v3284 = vpack.c.b16 %v3265, %v3264
        %v3285 = vpack.c.b16 %v3267, %v3266
        %v3286 = vpack.c.b16 %v3269, %v3268
        %v3287 = vpack.c.b16 %v3271, %v3270
        %3304 = vmatprep.subr.bf16.mxu0 0
        %3305 = vmatpush1.bf16.msra.mxu0 %v3272
        %3306 = vmatprep.subr.bf16.mxu0 0
        %3307 = vmatpush1.bf16.msra.mxu0 %v3273
        %3308 = vmatprep.subr.bf16.mxu0 0
        %3309 = vmatpush1.bf16.msra.mxu0 %v3274
        %3310 = vmatprep.subr.bf16.mxu0 0
        %3311 = vmatpush1.bf16.msra.mxu0 %v3275
        %3312 = vmatprep.subr.bf16.mxu0 0
        %3313 = vmatpush1.bf16.msra.mxu0 %v3276
        %3314 = vmatprep.subr.bf16.mxu0 0
        %3315 = vmatpush1.bf16.msra.mxu0 %v3277
        %3316 = vmatprep.subr.bf16.mxu0 0
        %3317 = vmatpush1.bf16.msra.mxu0 %v3278
        %3318 = vmatprep.subr.bf16.mxu0 0
        %3319 = vmatpush1.bf16.msra.mxu0 %v3279
        %3320 = vmatprep.subr.bf16.mxu0 0
        %3321 = vmatpush1.bf16.msra.mxu0 %v3280
        %3322 = vmatprep.subr.bf16.mxu0 0
        %3323 = vmatpush1.bf16.msra.mxu0 %v3281
        %3324 = vmatprep.subr.bf16.mxu0 0
        %3325 = vmatpush1.bf16.msra.mxu0 %v3282
        %3326 = vmatprep.subr.bf16.mxu0 0
        %3327 = vmatpush1.bf16.msra.mxu0 %v3283
        %3328 = vmatprep.subr.bf16.mxu0 0
        %3329 = vmatpush1.bf16.msra.mxu0 %v3284
        %3330 = vmatprep.subr.bf16.mxu0 0
        %3331 = vmatpush1.bf16.msra.mxu0 %v3285
        %3332 = vmatprep.subr.bf16.mxu0 0
        %3333 = vmatpush1.bf16.msra.mxu0 %v3286
        %3334 = vmatprep.subr.bf16.mxu0 0
        %3335 = vmatpush1.bf16.msra.mxu0 %v3287
        %3336 = vmatprep.mubr.bf16.mxu0 %v3164
        %3337 = vmatmul.mubr.bf16.gmra.mrb[0].mxu0 %v3163
        %v3338 = vpop.f32.mrb[0].mxu0
        %v3339 = vadd.f32 %v3206, %v3338
        %v3340 = vpop.f32.mrb[0].mxu0
        %v3341 = vpop.f32.mrb[0].mxu0
        %v3342 = vadd.f32 %v3206, %v3341
        %v3343 = vpop.f32.mrb[0].mxu0
        %3344 = vmatprep.mubr.bf16.mxu0 %v3166
        %3345 = vmatmul.mubr.bf16.gmra.mrb[0].mxu0 %v3165
        %v3346 = vpop.f32.mrb[0].mxu0
        %v3347 = vadd.f32 %v3206, %v3346
        %v3348 = vpop.f32.mrb[0].mxu0
        %v3349 = vpop.f32.mrb[0].mxu0
        %v3350 = vadd.f32 %v3206, %v3349
        %v3351 = vpop.f32.mrb[0].mxu0
        %3352 = vdwg.mxu0
        %v3353 = vadd.f32 %v2926, %v3339
        %v3354 = vadd.f32 %v2927, %v3342
        %v3355 = vadd.f32 %v2928, %v3347
        %v3356 = vadd.f32 %v2929, %v3350
        %v3357 = vld [vmem:[%s13] sm:$0x1]
        %v3358 = vld [vmem:[%s13 + $0x1] sm:$0x1]
        %3359 = vadd.xlane.f32.xlu0 %v3353
        %v3360 = vpop.xlane.xlu0 %3359
        %3361 = vadd.xlane.f32.xlu0 %v3354
        %v3362 = vpop.xlane.xlu0 %3361
        %3363 = vadd.xlane.f32.xlu0 %v3355
        %v3364 = vpop.xlane.xlu0 %3363
        %3365 = vadd.xlane.f32.xlu0 %v3356
        %v3366 = vpop.xlane.xlu0 %3365
        %v3367 = vmul.f32 %v3360, %v700
        %v3368 = vmul.f32 %v3362, %v700
        %v3369 = vmul.f32 %v3364, %v700
        %v3370 = vmul.f32 %v3366, %v700
        %v3371 = vsub.f32 %v3353, %v3367
        %v3372 = vsub.f32 %v3354, %v3368
        %v3373 = vsub.f32 %v3355, %v3369
        %v3374 = vsub.f32 %v3356, %v3370
        %v3375 = vmul.f32 %v3371, %v3371
        %v3376 = vmul.f32 %v3372, %v3372
        %v3377 = vmul.f32 %v3373, %v3373
        %v3378 = vmul.f32 %v3374, %v3374
        %3379 = vadd.xlane.f32.xlu0 %v3375
        %v3380 = vpop.xlane.xlu0 %3379
        %3381 = vadd.xlane.f32.xlu0 %v3376
        %v3382 = vpop.xlane.xlu0 %3381
        %3383 = vadd.xlane.f32.xlu0 %v3377
        %v3384 = vpop.xlane.xlu0 %3383
        %3385 = vadd.xlane.f32.xlu0 %v3378
        %v3386 = vpop.xlane.xlu0 %3385
        %v3387 = vmul.f32 %v3380, %v700
        %v3388 = vmul.f32 %v3382, %v700
        %v3389 = vmul.f32 %v3384, %v700
        %v3390 = vmul.f32 %v3386, %v700
        %v3391 = vadd.f32 %v3387, 1e-05
        %v3392 = vadd.f32 %v3388, 1e-05
        %v3393 = vadd.f32 %v3389, 1e-05
        %v3394 = vadd.f32 %v3390, 1e-05
        %v3395 = vrsqrt.pop %v3391
        %v3396 = vrsqrt.pop %v3392
        %v3397 = vrsqrt.pop %v3393
        %v3398 = vrsqrt.pop %v3394
        %v3399 = vmul.f32 %v3371, %v3395
        %v3400 = vmul.f32 %v3372, %v3396
        %v3401 = vmul.f32 %v3373, %v3397
        %v3402 = vmul.f32 %v3374, %v3398
        %v3403 = vlaneseq
        %v3404 = vshrl.u32 %v3403, 7
        %v3405 = vsub.s32 0, %v3404
        %v3406 = vrot.slane %v3357, %v3405
        %v3407 = vmul.f32 %v3399, %v3406
        %v3408 = vmul.f32 %v3400, %v3406
        %v3409 = vmul.f32 %v3401, %v3406
        %v3410 = vmul.f32 %v3402, %v3406
        %v3411 = vlaneseq
        %v3412 = vshrl.u32 %v3411, 7
        %v3413 = vsub.s32 0, %v3412
        %v3414 = vrot.slane %v3358, %v3413
        %v3415 = vadd.f32 %v3407, %v3414
        %v3416 = vadd.f32 %v3408, %v3414
        %v3417 = vadd.f32 %v3409, %v3414
        %v3418 = vadd.f32 %v3410, %v3414
        %v3419 = vpack.c.bf16 %v3416, %v3415
        %v3420 = vpack.c.bf16 %v3418, %v3417
        %v3421 = vld [vmem:[#allocation16] sm:$0xf]
        %v3422 = vld [vmem:[#allocation16 + $0x4] sm:$0xf]
        %v3423 = vld [vmem:[#allocation16 + $0x8] sm:$0xf]
        %v3424 = vld [vmem:[#allocation16 + $0xc] sm:$0xf]
        %v3425 = vld [vmem:[#allocation16 + $0x10] sm:$0xf]
        %v3426 = vld [vmem:[#allocation16 + $0x14] sm:$0xf]
        %v3427 = vld [vmem:[#allocation16 + $0x18] sm:$0xf]
        %v3428 = vld [vmem:[#allocation16 + $0x1c] sm:$0xf]
        %v3429 = vld [vmem:[#allocation16 + $0x20] sm:$0xf]
        %v3430 = vld [vmem:[#allocation16 + $0x24] sm:$0xf]
        %v3431 = vld [vmem:[#allocation16 + $0x28] sm:$0xf]
        %v3432 = vld [vmem:[#allocation16 + $0x2c] sm:$0xf]
        %v3433 = vld [vmem:[#allocation16 + $0x30] sm:$0xf]
        %v3434 = vld [vmem:[#allocation16 + $0x34] sm:$0xf]
        %v3435 = vld [vmem:[#allocation16 + $0x38] sm:$0xf]
        %v3436 = vld [vmem:[#allocation16 + $0x3c] sm:$0xf]
        %v3453 = vunpack.c.l.b16 %v3421
        %v3454 = vunpack.c.l.b16 %v3422
        %v3455 = vunpack.c.l.b16 %v3423
        %v3456 = vunpack.c.l.b16 %v3424
        %v3457 = vunpack.c.l.b16 %v3425
        %v3458 = vunpack.c.l.b16 %v3426
        %v3459 = vunpack.c.l.b16 %v3427
        %v3460 = vunpack.c.l.b16 %v3428
        %v3461 = vunpack.c.l.b16 %v3429
        %v3462 = vunpack.c.l.b16 %v3430
        %v3463 = vunpack.c.l.b16 %v3431
        %v3464 = vunpack.c.l.b16 %v3432
        %v3465 = vunpack.c.l.b16 %v3433
        %v3466 = vunpack.c.l.b16 %v3434
        %v3467 = vunpack.c.l.b16 %v3435
        %v3468 = vunpack.c.l.b16 %v3436
        %v3469 = vpack.c.b16 %v3454, %v3453
        %v3470 = vpack.c.b16 %v3456, %v3455
        %v3471 = vpack.c.b16 %v3458, %v3457
        %v3472 = vpack.c.b16 %v3460, %v3459
        %v3473 = vpack.c.b16 %v3462, %v3461
        %v3474 = vpack.c.b16 %v3464, %v3463
        %v3475 = vpack.c.b16 %v3466, %v3465
        %v3476 = vpack.c.b16 %v3468, %v3467
        %3485 = vmatprep.subr.bf16.mxu0 0
        %3486 = vmatpush1.bf16.msra.mxu0 %v3469
        %3487 = vmatprep.subr.bf16.mxu0 0
        %3488 = vmatpush1.bf16.msra.mxu0 %v3470
        %3489 = vmatprep.subr.bf16.mxu0 0
        %3490 = vmatpush1.bf16.msra.mxu0 %v3471
        %3491 = vmatprep.subr.bf16.mxu0 0
        %3492 = vmatpush1.bf16.msra.mxu0 %v3472
        %3493 = vmatprep.subr.bf16.mxu0 0
        %3494 = vmatpush1.bf16.msra.mxu0 %v3473
        %3495 = vmatprep.subr.bf16.mxu0 0
        %3496 = vmatpush1.bf16.msra.mxu0 %v3474
        %3497 = vmatprep.subr.bf16.mxu0 0
        %3498 = vmatpush1.bf16.msra.mxu0 %v3475
        %3499 = vmatprep.subr.bf16.mxu0 0
        %3500 = vmatpush1.bf16.msra.mxu0 %v3476
        %3501 = vmatprep.subr.bf16.mxu0 0
        %3502 = vmatpush1.bf16.msra.mxu0 0
        %3503 = vmatprep.subr.bf16.mxu0 0
        %3504 = vmatpush1.bf16.msra.mxu0 0
        %3505 = vmatprep.subr.bf16.mxu0 0
        %3506 = vmatpush1.bf16.msra.mxu0 0
        %3507 = vmatprep.subr.bf16.mxu0 0
        %3508 = vmatpush1.bf16.msra.mxu0 0
        %3509 = vmatprep.subr.bf16.mxu0 0
        %3510 = vmatpush1.bf16.msra.mxu0 0
        %3511 = vmatprep.subr.bf16.mxu0 0
        %3512 = vmatpush1.bf16.msra.mxu0 0
        %3513 = vmatprep.subr.bf16.mxu0 0
        %3514 = vmatpush1.bf16.msra.mxu0 0
        %3515 = vmatprep.subr.bf16.mxu0 0
        %3516 = vmatpush1.bf16.msra.mxu0 0
        %3517 = vmatprep.mubr.bf16.mxu0 0
        %3518 = vmatmul.mubr.bf16.gmra.mrb[0].mxu0 %v3419
        %v3519 = vpop.f32.mrb[0].mxu0
        %v3520 = vadd.f32 0.0, %v3519
        %v3521 = vpop.f32.mrb[0].mxu0
        %v3522 = vpop.f32.mrb[0].mxu0
        %v3523 = vadd.f32 0.0, %v3522
        %v3524 = vpop.f32.mrb[0].mxu0
        %3525 = vmatprep.mubr.bf16.mxu0 0
        %3526 = vmatmul.mubr.bf16.gmra.mrb[0].mxu0 %v3420
        %v3527 = vpop.f32.mrb[0].mxu0
        %v3528 = vadd.f32 0.0, %v3527
        %v3529 = vpop.f32.mrb[0].mxu0
        %v3530 = vpop.f32.mrb[0].mxu0
        %v3531 = vadd.f32 0.0, %v3530
        %v3532 = vpop.f32.mrb[0].mxu0
        %3533 = vdwg.mxu0
        %vm3534 = vcmp.lt.s32.totalorder %v690, 25
        %v3535 = vsel %vm3534, %v3520, -1e+30
        %v3536 = vsel %vm3534, %v3523, -1e+30
        %v3537 = vsel %vm3534, %v3528, -1e+30
        %v3538 = vsel %vm3534, %v3531, -1e+30
        %3539 = vmax.xlane.f32.xlu0 %v3535
        %v3540 = vpop.xlane.xlu0 %3539
        %3541 = vmax.xlane.f32.xlu0 %v3536
        %v3542 = vpop.xlane.xlu0 %3541
        %3543 = vmax.xlane.f32.xlu0 %v3537
        %v3544 = vpop.xlane.xlu0 %3543
        %3545 = vmax.xlane.f32.xlu0 %v3538
        %v3546 = vpop.xlane.xlu0 %3545
        %v3547 = vsub.f32 %v3535, %v3540
        %v3548 = vsub.f32 %v3536, %v3542
        %v3549 = vsub.f32 %v3537, %v3544
        %v3550 = vsub.f32 %v3538, %v3546
        %v3551 = vmul.f32 %v3547, 1.442695
        %v3552 = vpow.pop %v3551
        %v3553 = vmul.f32 %v3548, 1.442695
        %v3554 = vpow.pop %v3553
        %v3555 = vmul.f32 %v3549, 1.442695
        %v3556 = vpow.pop %v3555
        %v3557 = vmul.f32 %v3550, 1.442695
        %v3558 = vpow.pop %v3557
        %3559 = vadd.xlane.f32.xlu0 %v3552
        %v3560 = vpop.xlane.xlu0 %3559
        %3561 = vadd.xlane.f32.xlu0 %v3554
        %v3562 = vpop.xlane.xlu0 %3561
        %3563 = vadd.xlane.f32.xlu0 %v3556
        %v3564 = vpop.xlane.xlu0 %3563
        %3565 = vadd.xlane.f32.xlu0 %v3558
        %v3566 = vpop.xlane.xlu0 %3565
        %v3567 = vlog2.pop %v3560
        %v3568 = vmul.f32 %v3567, 0.6931472
        %v3569 = vlog2.pop %v3562
        %v3570 = vmul.f32 %v3569, 0.6931472
        %v3571 = vlog2.pop %v3564
        %v3572 = vmul.f32 %v3571, 0.6931472
        %v3573 = vlog2.pop %v3566
        %v3574 = vmul.f32 %v3573, 0.6931472
        %v3575 = vadd.f32 %v3540, %v3568
        %v3576 = vadd.f32 %v3542, %v3570
        %v3577 = vadd.f32 %v3544, %v3572
        %v3578 = vadd.f32 %v3546, %v3574
        %v3579 = vld [vmem:[%s605] sm:$0x1]
        %v3580 = vlaneseq
        %v3581 = vshrl.u32 %v3580, 7
        %v3582 = vsub.s32 0, %v3581
        %v3583 = vrot.slane %v3579, %v3582
        %3585 = vbcast.lane.b32.xlu0 %v3583, 256
        %v3586 = vpop.permute.xlu0 %3585
        %s3588 = sor.u32 256, 8
        %3589 = vbcast.lane.b32.xlu0 %v3583, %s3588
        %v3590 = vpop.permute.xlu0 %3589
        %s3592 = sor.u32 256, 16
        %3593 = vbcast.lane.b32.xlu0 %v3583, %s3592
        %v3594 = vpop.permute.xlu0 %3593
        %s3596 = sor.u32 256, 24
        %3597 = vbcast.lane.b32.xlu0 %v3583, %s3596
        %v3598 = vpop.permute.xlu0 %3597
        %vm3599 = vcmp.eq.s32.totalorder %v690, %v3586
        %vm3600 = vcmp.eq.s32.totalorder %v690, %v3590
        %vm3601 = vcmp.eq.s32.totalorder %v690, %v3594
        %vm3602 = vcmp.eq.s32.totalorder %v690, %v3598
        %v3603 = vsel %vm3599, %v3535, 0.0
        %v3604 = vsel %vm3600, %v3536, 0.0
        %v3605 = vsel %vm3601, %v3537, 0.0
        %v3606 = vsel %vm3602, %v3538, 0.0
        %3607 = vadd.xlane.f32.xlu0 %v3603
        %v3608 = vpop.xlane.xlu0 %3607
        %3609 = vadd.xlane.f32.xlu0 %v3604
        %v3610 = vpop.xlane.xlu0 %3609
        %3611 = vadd.xlane.f32.xlu0 %v3605
        %v3612 = vpop.xlane.xlu0 %3611
        %3613 = vadd.xlane.f32.xlu0 %v3606
        %v3614 = vpop.xlane.xlu0 %3613
        %v3615 = vld [vmem:[%s597] sm:$0x1]
        %v3616 = vlaneseq
        %v3617 = vshrl.u32 %v3616, 7
        %v3618 = vsub.s32 0, %v3617
        %v3619 = vrot.slane %v3615, %v3618
        %3621 = vbcast.lane.b32.xlu0 %v3619, 256
        %v3622 = vpop.permute.xlu0 %3621
        %s3624 = sor.u32 256, 8
        %3625 = vbcast.lane.b32.xlu0 %v3619, %s3624
        %v3626 = vpop.permute.xlu0 %3625
        %s3628 = sor.u32 256, 16
        %3629 = vbcast.lane.b32.xlu0 %v3619, %s3628
        %v3630 = vpop.permute.xlu0 %3629
        %s3632 = sor.u32 256, 24
        %3633 = vbcast.lane.b32.xlu0 %v3619, %s3632
        %v3634 = vpop.permute.xlu0 %3633
        %v3635 = vsub.f32 %v3575, %v3608
        %v3636 = vsub.f32 %v3576, %v3610
        %v3637 = vsub.f32 %v3577, %v3612
        %v3638 = vsub.f32 %v3578, %v3614
        %v3639 = vmul.f32 %v3635, %v3622
        %v3640 = vmul.f32 %v3636, %v3626
        %v3641 = vmul.f32 %v3637, %v3630
        %v3642 = vmul.f32 %v3638, %v3634
        %vm3643 = vcmask 7168
        %v3644 = vsel %vm3643, %v3639, 0.0
        %v3645 = vsel %vm3643, %v3640, 0.0
        %v3646 = vadd.f32 %v3644, %v3645
        %v3647 = vsel %vm3643, %v3641, 0.0
        %v3648 = vadd.f32 %v3646, %v3647
        %v3649 = vsel %vm3643, %v3642, 0.0
        %v3650 = vadd.f32 %v3648, %v3649
        %3651 = vadd.xlane.f32.xlu0 %v3650
        %v3652 = vpop.xlane.xlu0 %3651
        %v3653 = vrot.slane %v3652, 4
        %v3654 = vadd.f32 %v3652, %v3653
        %v3655 = vrot.slane %v3654, 2
        %v3656 = vadd.f32 %v3654, %v3655
        %v3657 = vrot.slane %v3656, 1
        %v3658 = vadd.f32 %v3656, %v3657
        %s3659 = vtos %v3658
        %v3660 = vstv %s3659
        %3661 = vst [vmem:[%s682] sm:$0x1] %v3660
        %s3662 = sand.u32 %s383, 1
        %s3663 = scalar_lea.sflag [#allocation4], %s3662
        %s3664 = sand.u32 %s383, 1
        %s3665 = scalar_lea.vmem [#allocation17], %s3664
        // Predicated region
        $region117: #{tpu_custom_call.1} parent=79 // pred_check
          %p3666 = pneg %p393
        $region118: #{tpu_custom_call.1} parent=79 // pred_check_branch
          %3668 = sbr.rel (%p3666) target = $region120
        $region119: #{tpu_custom_call.1} parent=79 // pred_region
          %s3670 = ssub.s32 16, 16
          %3671 = vsyncadd %s3663, %s3670
          %s3672 = smul.addr %s40, 16
          %s3673 = scalar_lea.hbm %s15, %s3672
          %s3675 = sshll.u32 %s3665, 4
          %s3676 = int_to_ptr.vmem [resolvable:$true] %s3675
          %3678 = dma.vmem_to_hbm [thread:$0]  %s3676, 16, %s3673, %s3663
        $region120: #{tpu_custom_call.1} parent=79 // pred_fallthru
          _
      $region80: #{tpu_custom_call.1} parent=5 // pred_fallthru
        _
      %p3679 = scmp.le.s32.totalorder 2, %s35
      // Predicated region
      $region121: #{tpu_custom_call.1} parent=5 // pred_check
        %p3680 = pneg %p3679
      $region122: #{tpu_custom_call.1} parent=5 // pred_check_branch
        %3682 = sbr.rel (%p3680) target = $region124
      $region123: #{tpu_custom_call.1} parent=5 // pred_region
        %s3683 = ssub.s32 %s35, 2
        // Predicated region
        $region125: #{tpu_custom_call.1} parent=123 // pred_check
          %p3684 = pneg %p399
        $region126: #{tpu_custom_call.1} parent=123 // pred_check_branch
          %3686 = sbr.rel (%p3684) target = $region128
        $region127: #{tpu_custom_call.1} parent=123 // pred_region
          %s3687 = sand.u32 %s384, 1
          %s3688 = scalar_lea.sflag [#allocation4], %s3687
          %s3689 = sand.u32 %s384, 1
          %s3690 = scalar_lea.vmem [#allocation17], %s3689
          %3691 = dma.done %s3688, 16
        $region128: #{tpu_custom_call.1} parent=123 // pred_fallthru
          _
      $region124: #{tpu_custom_call.1} parent=5 // pred_fallthru
        _
    $region6: #{tpu_custom_call.1} parent=1 // loop_footer
      %s39 = sadd.s32 1, %s35
    $region7: #{tpu_custom_call.1} parent=1 // loop_footer_branch
      %34 = sbr.rel target = $region3
    $region8: #{tpu_custom_call.1} parent=1 // loop_exit
      _
    %3692 = vsyncpa [#allocation3], 1
    %s3693 = scalar_lea.sflag [#allocation3], 1
    %3694 = vsyncpa %s3693, 1
    %3695 = vsyncpa [#allocation6], 1
    %s3696 = scalar_lea.sflag [#allocation6], 1
    %3697 = vsyncpa %s3696, 1
    %3698 = vsyncpa [#allocation9], 1
    %s3699 = scalar_lea.sflag [#allocation9], 1
    %3700 = vsyncpa %s3699, 1
    %3701 = vsyncpa [#allocation12], 1
    %3702 = vsyncpa [#allocation15], 1
    %3703 = vsyncpa [#allocation4], 1
    %s3704 = scalar_lea.sflag [#allocation4], 1
    %3705 = vsyncpa %s3704, 1

</llo_original>
